<compile_context>
chip_gen: v5e
topology: v5e:2x2
jax: 0.10.0
libtpu: 0.0.40
codegen_flags: <defaults>
</compile_context>

<pallas_src>
import jax
import jax.numpy as jnp
from jax import lax
from jax.experimental import pallas as pl
from jax.experimental.pallas import tpu as pltpu

# Hyper-parameters mirroring BiGRUModel(vocab_size, embedding_dim=100, hidden_dim=20, num_layers=1)
VOCAB = 50
EMBED = 100
HIDDEN = 20
BATCH = 2 * HIDDEN      # forward() as written requires batch == hidden_dim * 2
SEQ = 8
LANES = 128             # TPU lane width
VOCAB_PAD = 128         # vocab padded to one lane tile for the one-hot matmul
GATES = 3 * LANES       # r|z|n, each gate in its own 128-lane tile
WHH_ROWS = 32           # W_hh contraction rows: H=20 padded to 32 (rows >= H are zero)
HEAD_ROWS = 32          # small-operand slab sublane extent


def bigru_kernel(ids_ref, gru_ref, head_ref, out_ref, gin_ref):
    """One-hot fused embedding+input projection -> scratch, unrolled GRU, MLP head."""
    H, B, T = HIDDEN, BATCH, SEQ

    # --- Hoisted input-side gate terms for ALL timesteps: one-hot selection of
    #     the precomputed (embedding @ W_ih^T + biases) table on the MXU.
    #     Result goes straight to VMEM scratch so it is never loop-live.
    ids = ids_ref[...]                                                     # (T*B, 1) int32
    onehot = (lax.broadcasted_iota(jnp.int32, (T * B, VOCAB_PAD), 1)
              == ids).astype(jnp.float32)                                  # (T*B, 128)
    gin_ref[...] = jnp.dot(onehot, gru_ref[0:VOCAB_PAD, :],
                           preferred_element_type=jnp.float32)             # (T*B, 384)

    whh = gru_ref[VOCAB_PAD:VOCAB_PAD + WHH_ROWS, :]                       # (32, 384), rows>=H zero
    bhn = head_ref[0:1, :]                                                 # (1, 128), lanes>=H zero

    # --- Forward-GRU recurrence, fully unrolled (T=8 static).  h is 128 lanes
    #     wide with lanes >= H pinned at exactly 0 (see padded-lane analysis in
    #     the header), so nothing leaks into the head.
    h = jnp.zeros((B, LANES), jnp.float32)
    for t in range(T):
        r0 = t * B                                                         # multiple of 8
        gh = jnp.dot(h[:, 0:WHH_ROWS], whh,
                     preferred_element_type=jnp.float32)                  # (B, 384)
        r = jax.nn.sigmoid(gin_ref[r0:r0 + B, 0:LANES] + gh[:, 0:LANES])
        z = jax.nn.sigmoid(gin_ref[r0:r0 + B, LANES:2 * LANES]
                           + gh[:, LANES:2 * LANES])
        n = jnp.tanh(gin_ref[r0:r0 + B, 2 * LANES:3 * LANES]
                     + r * (gh[:, 2 * LANES:3 * LANES] + bhn))
        h = n + z * (h - n)                                                # == (1-z)*n + z*h

    # --- Head, evaluated in transposed form (no in-kernel transpose):
    #     PyTorch: sigmoid(relu(h.T @ W1.T + b1) @ W2.T + b2).squeeze(1)
    w1 = head_ref[8:18, 0:B]                                               # (10, 40)
    b1 = head_ref[8:18, B:B + 1]                                           # (10, 1)
    w2 = head_ref[24:25, 0:H // 2]                                         # (1, 10)
    b2 = head_ref[24:25, H // 2:H // 2 + 1]                                # (1, 1)
    y = jnp.maximum(jnp.dot(w1, h, preferred_element_type=jnp.float32) + b1, 0.0)   # (10, 128)
    o = jax.nn.sigmoid(jnp.dot(w2, y, preferred_element_type=jnp.float32) + b2)     # (1, 128)

    # --- Lane-dense, tile-aligned store; wrapper reads [0, :H].
    out_ref[...] = jnp.broadcast_to(o, (8, LANES))


def pack_params(params):
    """Done ONCE at parameter-load time: fold embedding into the input
    projection and pack everything into two lane-dense, gate-aligned slabs."""
    H = HIDDEN
    f32 = jnp.float32
    emb = params['embedding'].astype(f32)                   # (V, E)
    w_ih = params['w_ih'].astype(f32)                        # (3H, E)  [r|z|n]
    w_hh = params['w_hh'].astype(f32)                        # (3H, H)
    b_ih = params['b_ih'].astype(f32)                        # (3H,)
    b_hh = params['b_hh'].astype(f32)                        # (3H,)

    # Table row v = embedding[v] @ W_ih^T + b_ih + [b_hr | b_hz | 0]
    # (b_hn must stay inside the r * (.) term, so it lives in the head slab).
    proj = emb @ w_ih.T + b_ih + jnp.concatenate([b_hh[:2 * H], jnp.zeros((H,), f32)])
    whhT = w_hh.T                                             # (H, 3H)

    gru = jnp.zeros((VOCAB_PAD + WHH_ROWS, GATES), f32)       # (160, 384) slab
    for gate in range(3):
        col = gate * LANES
        gru = gru.at[:VOCAB, col:col + H].set(proj[:, gate * H:(gate + 1) * H])
        gru = gru.at[VOCAB_PAD:VOCAB_PAD + H, col:col + H].set(whhT[:, gate * H:(gate + 1) * H])

    head = jnp.zeros((HEAD_ROWS, LANES), f32)                 # (32, 128) slab
    head = head.at[0, :H].set(b_hh[2 * H:])                   # b_hn
    head = head.at[8:18, :BATCH].set(params['w1'].astype(f32))          # W1 (10, 40)
    head = head.at[8:18, BATCH].set(params['b1'].astype(f32))           # b1 (10,)
    head = head.at[24, :H // 2].set(params['w2'][0].astype(f32))        # W2 (10,)
    head = head.at[24, H // 2].set(params['b2'][0].astype(f32))         # b2
    return {'gru': gru, 'head': head}


def bigru_forward(input_ids, packed):
    """input_ids: (B, T) int32.  Returns probs of shape (HIDDEN,) (see header)."""
    B, T = input_ids.shape
    # Time-major flattened ids (row t*B + b) — the only per-call host-side op.
    ids = input_ids.T.reshape(T * B, 1).astype(jnp.int32)

    out = pl.pallas_call(
        bigru_kernel,
        out_shape=jax.ShapeDtypeStruct((8, LANES), jnp.float32),
        in_specs=[pl.BlockSpec(memory_space=pltpu.MemorySpace.VMEM)] * 3,
        out_specs=pl.BlockSpec(memory_space=pltpu.MemorySpace.VMEM),
        scratch_shapes=[pltpu.VMEM((T * B, GATES), jnp.float32)],
    )(ids, packed['gru'], packed['head'])
    return out[0, :HIDDEN]                                                 # (H,)


def reference_forward(input_ids, params):
    """Pure-JAX replica of the PyTorch forward (correctness check)."""
    H = HIDDEN
    emb = jnp.take(params['embedding'], input_ids, axis=0).astype(jnp.float32)
    w_ih, w_hh, b_ih, b_hh = params['w_ih'], params['w_hh'], params['b_ih'], params['b_hh']

    def cell(h, x_t):
        gi = x_t @ w_ih.T + b_ih
        gh = h @ w_hh.T + b_hh
        r = jax.nn.sigmoid(gi[:, :H] + gh[:, :H])
        z = jax.nn.sigmoid(gi[:, H:2 * H] + gh[:, H:2 * H])
        n = jnp.tanh(gi[:, 2 * H:] + r * gh[:, 2 * H:])
        return (1 - z) * n + z * h, None

    h0 = jnp.zeros((input_ids.shape[0], H), jnp.float32)
    h, _ = lax.scan(cell, h0, jnp.transpose(emb, (1, 0, 2)))
    xh = h.T                                                               # (H, B)
    y = jnp.maximum(xh @ params['w1'].T + params['b1'], 0.0)
    p = jax.nn.sigmoid(y @ params['w2'].T + params['b2'])
    return p[:, 0]


def init_params(key):
    ks = jax.random.split(key, 9)
    kg = 1.0 / jnp.sqrt(jnp.float32(HIDDEN))
    k1 = 1.0 / jnp.sqrt(jnp.float32(2 * HIDDEN))
    k2 = 1.0 / jnp.sqrt(jnp.float32(HIDDEN // 2))
    return {
        'embedding': jax.random.normal(ks[0], (VOCAB, EMBED), jnp.float32),
        'w_ih': jax.random.uniform(ks[1], (3 * HIDDEN, EMBED), jnp.float32, -kg, kg),
        'w_hh': jax.random.uniform(ks[2], (3 * HIDDEN, HIDDEN), jnp.float32, -kg, kg),
        'b_ih': jax.random.uniform(ks[3], (3 * HIDDEN,), jnp.float32, -kg, kg),
        'b_hh': jax.random.uniform(ks[4], (3 * HIDDEN,), jnp.float32, -kg, kg),
        'w1': jax.random.uniform(ks[5], (HIDDEN // 2, 2 * HIDDEN), jnp.float32, -k1, k1),
        'b1': jax.random.uniform(ks[6], (HIDDEN // 2,), jnp.float32, -k1, k1),
        'w2': jax.random.uniform(ks[7], (1, HIDDEN // 2), jnp.float32, -k2, k2),
        'b2': jax.random.uniform(ks[8], (1,), jnp.float32, -k2, k2),
    }


if __name__ == "__main__":
    key = jax.random.PRNGKey(0)
    pkey, dkey = jax.random.split(key)
    params = init_params(pkey)
    packed = pack_params(params)            # once, at parameter-load time
    input_ids = jax.random.randint(dkey, (BATCH, SEQ), 0, VOCAB, dtype=jnp.int32)

    probs = bigru_forward(input_ids, packed)
    jax.block_until_ready(probs)

    ref = reference_forward(input_ids, params)
    assert probs.shape == (HIDDEN,), probs.shape
    err = float(jnp.max(jnp.abs(probs - ref)))
    assert err < 5e-3, f"kernel/ref mismatch, max abs err = {err}"
    print("KERNEL_OK")
</pallas_src>

<mosaic_0001>
module attributes {stable_mosaic.version = 11 : i64} {
  func.func @bigru_kernel(%arg0: memref<320x1xi32, #tpu.memory_space<vmem>>, %arg1: memref<160x384xf32, #tpu.memory_space<vmem>>, %arg2: memref<32x128xf32, #tpu.memory_space<vmem>>, %arg3: memref<8x128xf32, #tpu.memory_space<vmem>>, %arg4: memref<320x384xf32, #tpu.memory_space<vmem>>) attributes {dimension_semantics = [], scalar_prefetch = 0 : i64, scratch_operands = 1 : i64, tpu.core_type = #tpu.core_type<tc>} {
    %c0 = arith.constant 0 : index
    %c0_0 = arith.constant 0 : index
    %0 = vector.load %arg0[%c0, %c0_0] : memref<320x1xi32, #tpu.memory_space<vmem>>, vector<320x1xi32>
    %1 = tpu.iota {dimensions = array<i32: 1>} : vector<320x128xi32>
    %2 = vector.broadcast %0 : vector<320x1xi32> to vector<320x128xi32>
    %3 = arith.cmpi eq, %1, %2 : vector<320x128xi32>
    %4 = arith.extui %3 : vector<320x128xi1> to vector<320x128xi32>
    %5 = arith.sitofp %4 : vector<320x128xi32> to vector<320x128xf32>
    %c0_1 = arith.constant 0 : index
    %c0_2 = arith.constant 0 : index
    %6 = vector.load %arg1[%c0_1, %c0_2] : memref<160x384xf32, #tpu.memory_space<vmem>>, vector<128x384xf32>
    %cst = arith.constant dense<0.000000e+00> : vector<320x384xf32>
    %7 = tpu.matmul %5, %6, %cst {dimension_numbers = #tpu.dot_dimension_numbers<[1], [0], [0], [1], [0, 0, 1, 1], [], []>} : vector<320x128xf32>, vector<128x384xf32>, vector<320x384xf32> -> vector<320x384xf32>
    %c0_3 = arith.constant 0 : index
    %c0_4 = arith.constant 0 : index
    %8 = vector.load %arg4[%c0_3, %c0_4] : memref<320x384xf32, #tpu.memory_space<vmem>>, vector<320x384xf32>
    tpu.vector_store %arg4[%c0_3, %c0_4], %7 {strides = array<i32>} : memref<320x384xf32, #tpu.memory_space<vmem>>, vector<320x384xf32>,
    %c128 = arith.constant 128 : index
    %c0_5 = arith.constant 0 : index
    %9 = vector.load %arg1[%c128, %c0_5] : memref<160x384xf32, #tpu.memory_space<vmem>>, vector<32x384xf32>
    %c0_6 = arith.constant 0 : index
    %c0_7 = arith.constant 0 : index
    %10 = vector.load %arg2[%c0_6, %c0_7] : memref<32x128xf32, #tpu.memory_space<vmem>>, vector<1x128xf32>
    %cst_8 = arith.constant 0.000000e+00 : f32
    %11 = vector.broadcast %cst_8 : f32 to vector<40x128xf32>
    %12 = vector.extract_strided_slice %11 {offsets = [0, 0], sizes = [40, 32], strides = [1, 1]} : vector<40x128xf32> to vector<40x32xf32>
    %cst_9 = arith.constant dense<0.000000e+00> : vector<40x384xf32>
    %13 = tpu.matmul %12, %9, %cst_9 {dimension_numbers = #tpu.dot_dimension_numbers<[1], [0], [0], [1], [0, 0, 1, 1], [], []>} : vector<40x32xf32>, vector<32x384xf32>, vector<40x384xf32> -> vector<40x384xf32>
    %c0_10 = arith.constant 0 : index
    %c0_11 = arith.constant 0 : index
    %14 = vector.load %arg4[%c0_10, %c0_11] : memref<320x384xf32, #tpu.memory_space<vmem>>, vector<40x128xf32>
    %15 = vector.extract_strided_slice %13 {offsets = [0, 0], sizes = [40, 128], strides = [1, 1]} : vector<40x384xf32> to vector<40x128xf32>
    %16 = arith.addf %14, %15 : vector<40x128xf32>
    %17 = arith.negf %16 : vector<40x128xf32>
    %18 = math.exp %17 : vector<40x128xf32>
    %cst_12 = arith.constant 1.000000e+00 : f32
    %19 = vector.broadcast %cst_12 : f32 to vector<40x128xf32>
    %20 = arith.addf %19, %18 : vector<40x128xf32>
    %21 = arith.divf %19, %20 : vector<40x128xf32>
    %c0_13 = arith.constant 0 : index
    %c128_14 = arith.constant 128 : index
    %22 = vector.load %arg4[%c0_13, %c128_14] : memref<320x384xf32, #tpu.memory_space<vmem>>, vector<40x128xf32>
    %23 = vector.extract_strided_slice %13 {offsets = [0, 128], sizes = [40, 128], strides = [1, 1]} : vector<40x384xf32> to vector<40x128xf32>
    %24 = arith.addf %22, %23 : vector<40x128xf32>
    %25 = arith.negf %24 : vector<40x128xf32>
    %26 = math.exp %25 : vector<40x128xf32>
    %cst_15 = arith.constant 1.000000e+00 : f32
    %27 = vector.broadcast %cst_15 : f32 to vector<40x128xf32>
    %28 = arith.addf %27, %26 : vector<40x128xf32>
    %29 = arith.divf %27, %28 : vector<40x128xf32>
    %c0_16 = arith.constant 0 : index
    %c256 = arith.constant 256 : index
    %30 = vector.load %arg4[%c0_16, %c256] : memref<320x384xf32, #tpu.memory_space<vmem>>, vector<40x128xf32>
    %31 = vector.extract_strided_slice %13 {offsets = [0, 256], sizes = [40, 128], strides = [1, 1]} : vector<40x384xf32> to vector<40x128xf32>
    %32 = vector.broadcast %10 : vector<1x128xf32> to vector<40x128xf32>
    %33 = arith.addf %31, %32 : vector<40x128xf32>
    %34 = arith.mulf %21, %33 : vector<40x128xf32>
    %35 = arith.addf %30, %34 : vector<40x128xf32>
    %36 = math.tanh %35 : vector<40x128xf32>
    %37 = arith.subf %11, %36 : vector<40x128xf32>
    %38 = arith.mulf %29, %37 : vector<40x128xf32>
    %39 = arith.addf %36, %38 : vector<40x128xf32>
    %40 = vector.extract_strided_slice %39 {offsets = [0, 0], sizes = [40, 32], strides = [1, 1]} : vector<40x128xf32> to vector<40x32xf32>
    %cst_17 = arith.constant dense<0.000000e+00> : vector<40x384xf32>
    %41 = tpu.matmul %40, %9, %cst_17 {dimension_numbers = #tpu.dot_dimension_numbers<[1], [0], [0], [1], [0, 0, 1, 1], [], []>} : vector<40x32xf32>, vector<32x384xf32>, vector<40x384xf32> -> vector<40x384xf32>
    %c40 = arith.constant 40 : index
    %c0_18 = arith.constant 0 : index
    %42 = vector.load %arg4[%c40, %c0_18] : memref<320x384xf32, #tpu.memory_space<vmem>>, vector<40x128xf32>
    %43 = vector.extract_strided_slice %41 {offsets = [0, 0], sizes = [40, 128], strides = [1, 1]} : vector<40x384xf32> to vector<40x128xf32>
    %44 = arith.addf %42, %43 : vector<40x128xf32>
    %45 = arith.negf %44 : vector<40x128xf32>
    %46 = math.exp %45 : vector<40x128xf32>
    %cst_19 = arith.constant 1.000000e+00 : f32
    %47 = vector.broadcast %cst_19 : f32 to vector<40x128xf32>
    %48 = arith.addf %47, %46 : vector<40x128xf32>
    %49 = arith.divf %47, %48 : vector<40x128xf32>
    %c40_20 = arith.constant 40 : index
    %c128_21 = arith.constant 128 : index
    %50 = vector.load %arg4[%c40_20, %c128_21] : memref<320x384xf32, #tpu.memory_space<vmem>>, vector<40x128xf32>
    %51 = vector.extract_strided_slice %41 {offsets = [0, 128], sizes = [40, 128], strides = [1, 1]} : vector<40x384xf32> to vector<40x128xf32>
    %52 = arith.addf %50, %51 : vector<40x128xf32>
    %53 = arith.negf %52 : vector<40x128xf32>
    %54 = math.exp %53 : vector<40x128xf32>
    %cst_22 = arith.constant 1.000000e+00 : f32
    %55 = vector.broadcast %cst_22 : f32 to vector<40x128xf32>
    %56 = arith.addf %55, %54 : vector<40x128xf32>
    %57 = arith.divf %55, %56 : vector<40x128xf32>
    %c40_23 = arith.constant 40 : index
    %c256_24 = arith.constant 256 : index
    %58 = vector.load %arg4[%c40_23, %c256_24] : memref<320x384xf32, #tpu.memory_space<vmem>>, vector<40x128xf32>
    %59 = vector.extract_strided_slice %41 {offsets = [0, 256], sizes = [40, 128], strides = [1, 1]} : vector<40x384xf32> to vector<40x128xf32>
    %60 = vector.broadcast %10 : vector<1x128xf32> to vector<40x128xf32>
    %61 = arith.addf %59, %60 : vector<40x128xf32>
    %62 = arith.mulf %49, %61 : vector<40x128xf32>
    %63 = arith.addf %58, %62 : vector<40x128xf32>
    %64 = math.tanh %63 : vector<40x128xf32>
    %65 = arith.subf %39, %64 : vector<40x128xf32>
    %66 = arith.mulf %57, %65 : vector<40x128xf32>
    %67 = arith.addf %64, %66 : vector<40x128xf32>
    %68 = vector.extract_strided_slice %67 {offsets = [0, 0], sizes = [40, 32], strides = [1, 1]} : vector<40x128xf32> to vector<40x32xf32>
    %cst_25 = arith.constant dense<0.000000e+00> : vector<40x384xf32>
    %69 = tpu.matmul %68, %9, %cst_25 {dimension_numbers = #tpu.dot_dimension_numbers<[1], [0], [0], [1], [0, 0, 1, 1], [], []>} : vector<40x32xf32>, vector<32x384xf32>, vector<40x384xf32> -> vector<40x384xf32>
    %c80 = arith.constant 80 : index
    %c0_26 = arith.constant 0 : index
    %70 = vector.load %arg4[%c80, %c0_26] : memref<320x384xf32, #tpu.memory_space<vmem>>, vector<40x128xf32>
    %71 = vector.extract_strided_slice %69 {offsets = [0, 0], sizes = [40, 128], strides = [1, 1]} : vector<40x384xf32> to vector<40x128xf32>
    %72 = arith.addf %70, %71 : vector<40x128xf32>
    %73 = arith.negf %72 : vector<40x128xf32>
    %74 = math.exp %73 : vector<40x128xf32>
    %cst_27 = arith.constant 1.000000e+00 : f32
    %75 = vector.broadcast %cst_27 : f32 to vector<40x128xf32>
    %76 = arith.addf %75, %74 : vector<40x128xf32>
    %77 = arith.divf %75, %76 : vector<40x128xf32>
    %c80_28 = arith.constant 80 : index
    %c128_29 = arith.constant 128 : index
    %78 = vector.load %arg4[%c80_28, %c128_29] : memref<320x384xf32, #tpu.memory_space<vmem>>, vector<40x128xf32>
    %79 = vector.extract_strided_slice %69 {offsets = [0, 128], sizes = [40, 128], strides = [1, 1]} : vector<40x384xf32> to vector<40x128xf32>
    %80 = arith.addf %78, %79 : vector<40x128xf32>
    %81 = arith.negf %80 : vector<40x128xf32>
    %82 = math.exp %81 : vector<40x128xf32>
    %cst_30 = arith.constant 1.000000e+00 : f32
    %83 = vector.broadcast %cst_30 : f32 to vector<40x128xf32>
    %84 = arith.addf %83, %82 : vector<40x128xf32>
    %85 = arith.divf %83, %84 : vector<40x128xf32>
    %c80_31 = arith.constant 80 : index
    %c256_32 = arith.constant 256 : index
    %86 = vector.load %arg4[%c80_31, %c256_32] : memref<320x384xf32, #tpu.memory_space<vmem>>, vector<40x128xf32>
    %87 = vector.extract_strided_slice %69 {offsets = [0, 256], sizes = [40, 128], strides = [1, 1]} : vector<40x384xf32> to vector<40x128xf32>
    %88 = vector.broadcast %10 : vector<1x128xf32> to vector<40x128xf32>
    %89 = arith.addf %87, %88 : vector<40x128xf32>
    %90 = arith.mulf %77, %89 : vector<40x128xf32>
    %91 = arith.addf %86, %90 : vector<40x128xf32>
    %92 = math.tanh %91 : vector<40x128xf32>
    %93 = arith.subf %67, %92 : vector<40x128xf32>
    %94 = arith.mulf %85, %93 : vector<40x128xf32>
    %95 = arith.addf %92, %94 : vector<40x128xf32>
    %96 = vector.extract_strided_slice %95 {offsets = [0, 0], sizes = [40, 32], strides = [1, 1]} : vector<40x128xf32> to vector<40x32xf32>
    %cst_33 = arith.constant dense<0.000000e+00> : vector<40x384xf32>
    %97 = tpu.matmul %96, %9, %cst_33 {dimension_numbers = #tpu.dot_dimension_numbers<[1], [0], [0], [1], [0, 0, 1, 1], [], []>} : vector<40x32xf32>, vector<32x384xf32>, vector<40x384xf32> -> vector<40x384xf32>
    %c120 = arith.constant 120 : index
    %c0_34 = arith.constant 0 : index
    %98 = vector.load %arg4[%c120, %c0_34] : memref<320x384xf32, #tpu.memory_space<vmem>>, vector<40x128xf32>
    %99 = vector.extract_strided_slice %97 {offsets = [0, 0], sizes = [40, 128], strides = [1, 1]} : vector<40x384xf32> to vector<40x128xf32>
    %100 = arith.addf %98, %99 : vector<40x128xf32>
    %101 = arith.negf %100 : vector<40x128xf32>
    %102 = math.exp %101 : vector<40x128xf32>
    %cst_35 = arith.constant 1.000000e+00 : f32
    %103 = vector.broadcast %cst_35 : f32 to vector<40x128xf32>
    %104 = arith.addf %103, %102 : vector<40x128xf32>
    %105 = arith.divf %103, %104 : vector<40x128xf32>
    %c120_36 = arith.constant 120 : index
    %c128_37 = arith.constant 128 : index
    %106 = vector.load %arg4[%c120_36, %c128_37] : memref<320x384xf32, #tpu.memory_space<vmem>>, vector<40x128xf32>
    %107 = vector.extract_strided_slice %97 {offsets = [0, 128], sizes = [40, 128], strides = [1, 1]} : vector<40x384xf32> to vector<40x128xf32>
    %108 = arith.addf %106, %107 : vector<40x128xf32>
    %109 = arith.negf %108 : vector<40x128xf32>
    %110 = math.exp %109 : vector<40x128xf32>
    %cst_38 = arith.constant 1.000000e+00 : f32
    %111 = vector.broadcast %cst_38 : f32 to vector<40x128xf32>
    %112 = arith.addf %111, %110 : vector<40x128xf32>
    %113 = arith.divf %111, %112 : vector<40x128xf32>
    %c120_39 = arith.constant 120 : index
    %c256_40 = arith.constant 256 : index
    %114 = vector.load %arg4[%c120_39, %c256_40] : memref<320x384xf32, #tpu.memory_space<vmem>>, vector<40x128xf32>
    %115 = vector.extract_strided_slice %97 {offsets = [0, 256], sizes = [40, 128], strides = [1, 1]} : vector<40x384xf32> to vector<40x128xf32>
    %116 = vector.broadcast %10 : vector<1x128xf32> to vector<40x128xf32>
    %117 = arith.addf %115, %116 : vector<40x128xf32>
    %118 = arith.mulf %105, %117 : vector<40x128xf32>
    %119 = arith.addf %114, %118 : vector<40x128xf32>
    %120 = math.tanh %119 : vector<40x128xf32>
    %121 = arith.subf %95, %120 : vector<40x128xf32>
    %122 = arith.mulf %113, %121 : vector<40x128xf32>
    %123 = arith.addf %120, %122 : vector<40x128xf32>
    %124 = vector.extract_strided_slice %123 {offsets = [0, 0], sizes = [40, 32], strides = [1, 1]} : vector<40x128xf32> to vector<40x32xf32>
    %cst_41 = arith.constant dense<0.000000e+00> : vector<40x384xf32>
    %125 = tpu.matmul %124, %9, %cst_41 {dimension_numbers = #tpu.dot_dimension_numbers<[1], [0], [0], [1], [0, 0, 1, 1], [], []>} : vector<40x32xf32>, vector<32x384xf32>, vector<40x384xf32> -> vector<40x384xf32>
    %c160 = arith.constant 160 : index
    %c0_42 = arith.constant 0 : index
    %126 = vector.load %arg4[%c160, %c0_42] : memref<320x384xf32, #tpu.memory_space<vmem>>, vector<40x128xf32>
    %127 = vector.extract_strided_slice %125 {offsets = [0, 0], sizes = [40, 128], strides = [1, 1]} : vector<40x384xf32> to vector<40x128xf32>
    %128 = arith.addf %126, %127 : vector<40x128xf32>
    %129 = arith.negf %128 : vector<40x128xf32>
    %130 = math.exp %129 : vector<40x128xf32>
    %cst_43 = arith.constant 1.000000e+00 : f32
    %131 = vector.broadcast %cst_43 : f32 to vector<40x128xf32>
    %132 = arith.addf %131, %130 : vector<40x128xf32>
    %133 = arith.divf %131, %132 : vector<40x128xf32>
    %c160_44 = arith.constant 160 : index
    %c128_45 = arith.constant 128 : index
    %134 = vector.load %arg4[%c160_44, %c128_45] : memref<320x384xf32, #tpu.memory_space<vmem>>, vector<40x128xf32>
    %135 = vector.extract_strided_slice %125 {offsets = [0, 128], sizes = [40, 128], strides = [1, 1]} : vector<40x384xf32> to vector<40x128xf32>
    %136 = arith.addf %134, %135 : vector<40x128xf32>
    %137 = arith.negf %136 : vector<40x128xf32>
    %138 = math.exp %137 : vector<40x128xf32>
    %cst_46 = arith.constant 1.000000e+00 : f32
    %139 = vector.broadcast %cst_46 : f32 to vector<40x128xf32>
    %140 = arith.addf %139, %138 : vector<40x128xf32>
    %141 = arith.divf %139, %140 : vector<40x128xf32>
    %c160_47 = arith.constant 160 : index
    %c256_48 = arith.constant 256 : index
    %142 = vector.load %arg4[%c160_47, %c256_48] : memref<320x384xf32, #tpu.memory_space<vmem>>, vector<40x128xf32>
    %143 = vector.extract_strided_slice %125 {offsets = [0, 256], sizes = [40, 128], strides = [1, 1]} : vector<40x384xf32> to vector<40x128xf32>
    %144 = vector.broadcast %10 : vector<1x128xf32> to vector<40x128xf32>
    %145 = arith.addf %143, %144 : vector<40x128xf32>
    %146 = arith.mulf %133, %145 : vector<40x128xf32>
    %147 = arith.addf %142, %146 : vector<40x128xf32>
    %148 = math.tanh %147 : vector<40x128xf32>
    %149 = arith.subf %123, %148 : vector<40x128xf32>
    %150 = arith.mulf %141, %149 : vector<40x128xf32>
    %151 = arith.addf %148, %150 : vector<40x128xf32>
    %152 = vector.extract_strided_slice %151 {offsets = [0, 0], sizes = [40, 32], strides = [1, 1]} : vector<40x128xf32> to vector<40x32xf32>
    %cst_49 = arith.constant dense<0.000000e+00> : vector<40x384xf32>
    %153 = tpu.matmul %152, %9, %cst_49 {dimension_numbers = #tpu.dot_dimension_numbers<[1], [0], [0], [1], [0, 0, 1, 1], [], []>} : vector<40x32xf32>, vector<32x384xf32>, vector<40x384xf32> -> vector<40x384xf32>
    %c200 = arith.constant 200 : index
    %c0_50 = arith.constant 0 : index
    %154 = vector.load %arg4[%c200, %c0_50] : memref<320x384xf32, #tpu.memory_space<vmem>>, vector<40x128xf32>
    %155 = vector.extract_strided_slice %153 {offsets = [0, 0], sizes = [40, 128], strides = [1, 1]} : vector<40x384xf32> to vector<40x128xf32>
    %156 = arith.addf %154, %155 : vector<40x128xf32>
    %157 = arith.negf %156 : vector<40x128xf32>
    %158 = math.exp %157 : vector<40x128xf32>
    %cst_51 = arith.constant 1.000000e+00 : f32
    %159 = vector.broadcast %cst_51 : f32 to vector<40x128xf32>
    %160 = arith.addf %159, %158 : vector<40x128xf32>
    %161 = arith.divf %159, %160 : vector<40x128xf32>
    %c200_52 = arith.constant 200 : index
    %c128_53 = arith.constant 128 : index
    %162 = vector.load %arg4[%c200_52, %c128_53] : memref<320x384xf32, #tpu.memory_space<vmem>>, vector<40x128xf32>
    %163 = vector.extract_strided_slice %153 {offsets = [0, 128], sizes = [40, 128], strides = [1, 1]} : vector<40x384xf32> to vector<40x128xf32>
    %164 = arith.addf %162, %163 : vector<40x128xf32>
    %165 = arith.negf %164 : vector<40x128xf32>
    %166 = math.exp %165 : vector<40x128xf32>
    %cst_54 = arith.constant 1.000000e+00 : f32
    %167 = vector.broadcast %cst_54 : f32 to vector<40x128xf32>
    %168 = arith.addf %167, %166 : vector<40x128xf32>
    %169 = arith.divf %167, %168 : vector<40x128xf32>
    %c200_55 = arith.constant 200 : index
    %c256_56 = arith.constant 256 : index
    %170 = vector.load %arg4[%c200_55, %c256_56] : memref<320x384xf32, #tpu.memory_space<vmem>>, vector<40x128xf32>
    %171 = vector.extract_strided_slice %153 {offsets = [0, 256], sizes = [40, 128], strides = [1, 1]} : vector<40x384xf32> to vector<40x128xf32>
    %172 = vector.broadcast %10 : vector<1x128xf32> to vector<40x128xf32>
    %173 = arith.addf %171, %172 : vector<40x128xf32>
    %174 = arith.mulf %161, %173 : vector<40x128xf32>
    %175 = arith.addf %170, %174 : vector<40x128xf32>
    %176 = math.tanh %175 : vector<40x128xf32>
    %177 = arith.subf %151, %176 : vector<40x128xf32>
    %178 = arith.mulf %169, %177 : vector<40x128xf32>
    %179 = arith.addf %176, %178 : vector<40x128xf32>
    %180 = vector.extract_strided_slice %179 {offsets = [0, 0], sizes = [40, 32], strides = [1, 1]} : vector<40x128xf32> to vector<40x32xf32>
    %cst_57 = arith.constant dense<0.000000e+00> : vector<40x384xf32>
    %181 = tpu.matmul %180, %9, %cst_57 {dimension_numbers = #tpu.dot_dimension_numbers<[1], [0], [0], [1], [0, 0, 1, 1], [], []>} : vector<40x32xf32>, vector<32x384xf32>, vector<40x384xf32> -> vector<40x384xf32>
    %c240 = arith.constant 240 : index
    %c0_58 = arith.constant 0 : index
    %182 = vector.load %arg4[%c240, %c0_58] : memref<320x384xf32, #tpu.memory_space<vmem>>, vector<40x128xf32>
    %183 = vector.extract_strided_slice %181 {offsets = [0, 0], sizes = [40, 128], strides = [1, 1]} : vector<40x384xf32> to vector<40x128xf32>
    %184 = arith.addf %182, %183 : vector<40x128xf32>
    %185 = arith.negf %184 : vector<40x128xf32>
    %186 = math.exp %185 : vector<40x128xf32>
    %cst_59 = arith.constant 1.000000e+00 : f32
    %187 = vector.broadcast %cst_59 : f32 to vector<40x128xf32>
    %188 = arith.addf %187, %186 : vector<40x128xf32>
    %189 = arith.divf %187, %188 : vector<40x128xf32>
    %c240_60 = arith.constant 240 : index
    %c128_61 = arith.constant 128 : index
    %190 = vector.load %arg4[%c240_60, %c128_61] : memref<320x384xf32, #tpu.memory_space<vmem>>, vector<40x128xf32>
    %191 = vector.extract_strided_slice %181 {offsets = [0, 128], sizes = [40, 128], strides = [1, 1]} : vector<40x384xf32> to vector<40x128xf32>
    %192 = arith.addf %190, %191 : vector<40x128xf32>
    %193 = arith.negf %192 : vector<40x128xf32>
    %194 = math.exp %193 : vector<40x128xf32>
    %cst_62 = arith.constant 1.000000e+00 : f32
    %195 = vector.broadcast %cst_62 : f32 to vector<40x128xf32>
    %196 = arith.addf %195, %194 : vector<40x128xf32>
    %197 = arith.divf %195, %196 : vector<40x128xf32>
    %c240_63 = arith.constant 240 : index
    %c256_64 = arith.constant 256 : index
    %198 = vector.load %arg4[%c240_63, %c256_64] : memref<320x384xf32, #tpu.memory_space<vmem>>, vector<40x128xf32>
    %199 = vector.extract_strided_slice %181 {offsets = [0, 256], sizes = [40, 128], strides = [1, 1]} : vector<40x384xf32> to vector<40x128xf32>
    %200 = vector.broadcast %10 : vector<1x128xf32> to vector<40x128xf32>
    %201 = arith.addf %199, %200 : vector<40x128xf32>
    %202 = arith.mulf %189, %201 : vector<40x128xf32>
    %203 = arith.addf %198, %202 : vector<40x128xf32>
    %204 = math.tanh %203 : vector<40x128xf32>
    %205 = arith.subf %179, %204 : vector<40x128xf32>
    %206 = arith.mulf %197, %205 : vector<40x128xf32>
    %207 = arith.addf %204, %206 : vector<40x128xf32>
    %208 = vector.extract_strided_slice %207 {offsets = [0, 0], sizes = [40, 32], strides = [1, 1]} : vector<40x128xf32> to vector<40x32xf32>
    %cst_65 = arith.constant dense<0.000000e+00> : vector<40x384xf32>
    %209 = tpu.matmul %208, %9, %cst_65 {dimension_numbers = #tpu.dot_dimension_numbers<[1], [0], [0], [1], [0, 0, 1, 1], [], []>} : vector<40x32xf32>, vector<32x384xf32>, vector<40x384xf32> -> vector<40x384xf32>
    %c280 = arith.constant 280 : index
    %c0_66 = arith.constant 0 : index
    %210 = vector.load %arg4[%c280, %c0_66] : memref<320x384xf32, #tpu.memory_space<vmem>>, vector<40x128xf32>
    %211 = vector.extract_strided_slice %209 {offsets = [0, 0], sizes = [40, 128], strides = [1, 1]} : vector<40x384xf32> to vector<40x128xf32>
    %212 = arith.addf %210, %211 : vector<40x128xf32>
    %213 = arith.negf %212 : vector<40x128xf32>
    %214 = math.exp %213 : vector<40x128xf32>
    %cst_67 = arith.constant 1.000000e+00 : f32
    %215 = vector.broadcast %cst_67 : f32 to vector<40x128xf32>
    %216 = arith.addf %215, %214 : vector<40x128xf32>
    %217 = arith.divf %215, %216 : vector<40x128xf32>
    %c280_68 = arith.constant 280 : index
    %c128_69 = arith.constant 128 : index
    %218 = vector.load %arg4[%c280_68, %c128_69] : memref<320x384xf32, #tpu.memory_space<vmem>>, vector<40x128xf32>
    %219 = vector.extract_strided_slice %209 {offsets = [0, 128], sizes = [40, 128], strides = [1, 1]} : vector<40x384xf32> to vector<40x128xf32>
    %220 = arith.addf %218, %219 : vector<40x128xf32>
    %221 = arith.negf %220 : vector<40x128xf32>
    %222 = math.exp %221 : vector<40x128xf32>
    %cst_70 = arith.constant 1.000000e+00 : f32
    %223 = vector.broadcast %cst_70 : f32 to vector<40x128xf32>
    %224 = arith.addf %223, %222 : vector<40x128xf32>
    %225 = arith.divf %223, %224 : vector<40x128xf32>
    %c280_71 = arith.constant 280 : index
    %c256_72 = arith.constant 256 : index
    %226 = vector.load %arg4[%c280_71, %c256_72] : memref<320x384xf32, #tpu.memory_space<vmem>>, vector<40x128xf32>
    %227 = vector.extract_strided_slice %209 {offsets = [0, 256], sizes = [40, 128], strides = [1, 1]} : vector<40x384xf32> to vector<40x128xf32>
    %228 = vector.broadcast %10 : vector<1x128xf32> to vector<40x128xf32>
    %229 = arith.addf %227, %228 : vector<40x128xf32>
    %230 = arith.mulf %217, %229 : vector<40x128xf32>
    %231 = arith.addf %226, %230 : vector<40x128xf32>
    %232 = math.tanh %231 : vector<40x128xf32>
    %233 = arith.subf %207, %232 : vector<40x128xf32>
    %234 = arith.mulf %225, %233 : vector<40x128xf32>
    %235 = arith.addf %232, %234 : vector<40x128xf32>
    %c8 = arith.constant 8 : index
    %c0_73 = arith.constant 0 : index
    %236 = vector.load %arg2[%c8, %c0_73] : memref<32x128xf32, #tpu.memory_space<vmem>>, vector<10x40xf32>
    %c8_74 = arith.constant 8 : index
    %c40_75 = arith.constant 40 : index
    %237 = vector.load %arg2[%c8_74, %c40_75] : memref<32x128xf32, #tpu.memory_space<vmem>>, vector<10x1xf32>
    %c24 = arith.constant 24 : index
    %c0_76 = arith.constant 0 : index
    %238 = vector.load %arg2[%c24, %c0_76] : memref<32x128xf32, #tpu.memory_space<vmem>>, vector<1x10xf32>
    %c24_77 = arith.constant 24 : index
    %c10 = arith.constant 10 : index
    %239 = vector.load %arg2[%c24_77, %c10] : memref<32x128xf32, #tpu.memory_space<vmem>>, vector<1x1xf32>
    %cst_78 = arith.constant dense<0.000000e+00> : vector<10x128xf32>
    %240 = tpu.matmul %236, %235, %cst_78 {dimension_numbers = #tpu.dot_dimension_numbers<[1], [0], [0], [1], [0, 0, 1, 1], [], []>} : vector<10x40xf32>, vector<40x128xf32>, vector<10x128xf32> -> vector<10x128xf32>
    %241 = vector.broadcast %237 : vector<10x1xf32> to vector<10x128xf32>
    %242 = arith.addf %240, %241 : vector<10x128xf32>
    %cst_79 = arith.constant 0.000000e+00 : f32
    %243 = vector.broadcast %cst_79 : f32 to vector<10x128xf32>
    %244 = arith.maximumf %242, %243 : vector<10x128xf32>
    %cst_80 = arith.constant dense<0.000000e+00> : vector<1x128xf32>
    %245 = tpu.matmul %238, %244, %cst_80 {dimension_numbers = #tpu.dot_dimension_numbers<[1], [0], [0], [1], [0, 0, 1, 1], [], []>} : vector<1x10xf32>, vector<10x128xf32>, vector<1x128xf32> -> vector<1x128xf32>
    %246 = vector.broadcast %239 : vector<1x1xf32> to vector<1x128xf32>
    %247 = arith.addf %245, %246 : vector<1x128xf32>
    %248 = arith.negf %247 : vector<1x128xf32>
    %249 = math.exp %248 : vector<1x128xf32>
    %cst_81 = arith.constant 1.000000e+00 : f32
    %250 = vector.broadcast %cst_81 : f32 to vector<1x128xf32>
    %251 = arith.addf %250, %249 : vector<1x128xf32>
    %252 = arith.divf %250, %251 : vector<1x128xf32>
    %253 = vector.shape_cast %252 : vector<1x128xf32> to vector<1x128xf32>
    %254 = vector.broadcast %253 : vector<1x128xf32> to vector<8x128xf32>
    %c0_82 = arith.constant 0 : index
    %c0_83 = arith.constant 0 : index
    %255 = vector.load %arg3[%c0_82, %c0_83] : memref<8x128xf32, #tpu.memory_space<vmem>>, vector<8x128xf32>
    tpu.vector_store %arg3[%c0_82, %c0_83], %254 {strides = array<i32>} : memref<8x128xf32, #tpu.memory_space<vmem>>, vector<8x128xf32>,
    return
  }
}

</mosaic_0001>

<llo_original>
// kernel: tpu_custom_call.1
$region0: #{tpu_custom_call.1}
  #allocation0 [shape = 'u32[]', space=smem, size = 0x4, offset = 0x4, fixed_abs, tag = 'smem constant byte address 0x4 - core index']
  #allocation1 [shape = 'u32[72,128]{1,0:T(1,128)}', space=vmem, size = 0x9000, scoped, tag = 'internal scratch']
  #allocation2 [shape = 'f32[320,384]{1,0:T(8,128)}', space=vmem, size = 0x78000, scoped, tag = 'scratch operand']
  %s0 = inlined_call_operand.vmem [shape: s32[320,1], index: 0, kind: input, shape index: {}]
  %s1 = inlined_call_operand.hbm [shape: f32[160,384], index: 1, kind: input, shape index: {}]
  %s2 = inlined_call_operand.vmem [shape: f32[32,128], index: 2, kind: input, shape index: {}]
  %s3 = inlined_call_operand.hbm [shape: f32[8,128], index: 3, kind: output, shape index: {}]
  %s4 = sld [smem:[#allocation0]]
  $region26: #{tpu_custom_call.1} parent=0
    _
  %s6 = ssub.s32 1, %s4
  %s7 = scalar_select 0, %s6, %s4
  $region1: #{tpu_custom_call.1} parent=0
    #allocation3 [shape = 'u8[245760]{0}', space=vmem, size = 0x3c000, scoped, tag = 'input window, operand 1, single buffered']
    #allocation4 [shape = 's32[1]{0}', space=sflag, size = 0x4, scoped, tag = 'scoped memory for tpu_custom_call.1']
    #allocation5 [shape = 's32[1]{0}', space=sflag, size = 0x4, scoped, tag = 'scoped memory for tpu_custom_call.1']
    #allocation6 [shape = 'u8[4096]{0}', space=vmem, size = 0x1000, scoped, tag = 'output window, operand 0, single buffered']
    %8 = vsyncpa [#allocation4], 0
    %9 = vsyncpa [#allocation5], 0
    // Predicated region
    $region2: #{tpu_custom_call.1} parent=1 // pred_check
      _
    $region3: #{tpu_custom_call.1} parent=1 // pred_check_branch
      %11 = sbr.rel (0) target = $region5
    $region4: #{tpu_custom_call.1} parent=1 // pred_region
      _
    $region5: #{tpu_custom_call.1} parent=1 // pred_fallthru
      _
    // Predicated region
    $region6: #{tpu_custom_call.1} parent=1 // pred_check
      _
    $region7: #{tpu_custom_call.1} parent=1 // pred_check_branch
      %13 = sbr.rel (0) target = $region9
    $region8: #{tpu_custom_call.1} parent=1 // pred_region
      %15 = vsyncadd [#allocation4], 0
      %s16 = sshll.u32 %s1, 4
      %s17 = int_to_ptr.hbm [resolvable:$true] %s16
      %s18 = sshll.u32 [#allocation3], 4
      %s19 = int_to_ptr.vmem [resolvable:$true] %s18
      %24 = dma.hbm_to_vmem [thread:$0]  %s17, 7680, %s19, [#allocation4], 384, 384, 24
    $region9: #{tpu_custom_call.1} parent=1 // pred_fallthru
      _
    // Predicated region
    $region10: #{tpu_custom_call.1} parent=1 // pred_check
      _
    $region11: #{tpu_custom_call.1} parent=1 // pred_check_branch
      %26 = sbr.rel (0) target = $region13
    $region12: #{tpu_custom_call.1} parent=1 // pred_region
      _
    $region13: #{tpu_custom_call.1} parent=1 // pred_fallthru
      _
    // Predicated region
    $region14: #{tpu_custom_call.1} parent=1 // pred_check
      _
    $region15: #{tpu_custom_call.1} parent=1 // pred_check_branch
      %28 = sbr.rel (0) target = $region17
    $region16: #{tpu_custom_call.1} parent=1 // pred_region
      %30 = dma.done [#allocation4], 7680
    $region17: #{tpu_custom_call.1} parent=1 // pred_fallthru
      _
    %v31 = vld [vmem:[%s0] sm:$0xff]
    %v32 = vld [vmem:[%s0 + $0x8] sm:$0xff]
    %v33 = vld [vmem:[%s0 + $0x10] sm:$0xff]
    %v34 = vld [vmem:[%s0 + $0x18] sm:$0xff]
    %v35 = vld [vmem:[%s0 + $0x20] sm:$0xff]
    %v36 = vld [vmem:[%s0 + $0x28] sm:$0xff]
    %v37 = vld [vmem:[%s0 + $0x30] sm:$0xff]
    %v38 = vld [vmem:[%s0 + $0x38] sm:$0xff]
    %v39 = vld [vmem:[%s0 + $0x40] sm:$0xff]
    %v40 = vld [vmem:[%s0 + $0x48] sm:$0xff]
    %v41 = vld [vmem:[%s0 + $0x50] sm:$0xff]
    %v42 = vld [vmem:[%s0 + $0x58] sm:$0xff]
    %v43 = vld [vmem:[%s0 + $0x60] sm:$0xff]
    %v44 = vld [vmem:[%s0 + $0x68] sm:$0xff]
    %v45 = vld [vmem:[%s0 + $0x70] sm:$0xff]
    %v46 = vld [vmem:[%s0 + $0x78] sm:$0xff]
    %v47 = vld [vmem:[%s0 + $0x80] sm:$0xff]
    %v48 = vld [vmem:[%s0 + $0x88] sm:$0xff]
    %v49 = vld [vmem:[%s0 + $0x90] sm:$0xff]
    %v50 = vld [vmem:[%s0 + $0x98] sm:$0xff]
    %v51 = vld [vmem:[%s0 + $0xa0] sm:$0xff]
    %v52 = vld [vmem:[%s0 + $0xa8] sm:$0xff]
    %v53 = vld [vmem:[%s0 + $0xb0] sm:$0xff]
    %v54 = vld [vmem:[%s0 + $0xb8] sm:$0xff]
    %v55 = vld [vmem:[%s0 + $0xc0] sm:$0xff]
    %v56 = vld [vmem:[%s0 + $0xc8] sm:$0xff]
    %v57 = vld [vmem:[%s0 + $0xd0] sm:$0xff]
    %v58 = vld [vmem:[%s0 + $0xd8] sm:$0xff]
    %v59 = vld [vmem:[%s0 + $0xe0] sm:$0xff]
    %v60 = vld [vmem:[%s0 + $0xe8] sm:$0xff]
    %v61 = vld [vmem:[%s0 + $0xf0] sm:$0xff]
    %v62 = vld [vmem:[%s0 + $0xf8] sm:$0xff]
    %v63 = vld [vmem:[%s0 + $0x100] sm:$0xff]
    %v64 = vld [vmem:[%s0 + $0x108] sm:$0xff]
    %v65 = vld [vmem:[%s0 + $0x110] sm:$0xff]
    %v66 = vld [vmem:[%s0 + $0x118] sm:$0xff]
    %v67 = vld [vmem:[%s0 + $0x120] sm:$0xff]
    %v68 = vld [vmem:[%s0 + $0x128] sm:$0xff]
    %v69 = vld [vmem:[%s0 + $0x130] sm:$0xff]
    %v70 = vld [vmem:[%s0 + $0x138] sm:$0xff]
    %v71 = vlaneseq
    %v72 = vand.u32 %v71, 127
    %73 = vset.pattern.permute.xlu0 0
    %74 = vperm.xlu0 %73, %v31
    %v75 = vpop.permute.xlu0 %74
    %76 = vset.pattern.permute.xlu0 0
    %77 = vperm.xlu0 %76, %v32
    %v78 = vpop.permute.xlu0 %77
    %79 = vset.pattern.permute.xlu0 0
    %80 = vperm.xlu0 %79, %v33
    %v81 = vpop.permute.xlu0 %80
    %82 = vset.pattern.permute.xlu0 0
    %83 = vperm.xlu0 %82, %v34
    %v84 = vpop.permute.xlu0 %83
    %85 = vset.pattern.permute.xlu0 0
    %86 = vperm.xlu0 %85, %v35
    %v87 = vpop.permute.xlu0 %86
    %88 = vset.pattern.permute.xlu0 0
    %89 = vperm.xlu0 %88, %v36
    %v90 = vpop.permute.xlu0 %89
    %91 = vset.pattern.permute.xlu0 0
    %92 = vperm.xlu0 %91, %v37
    %v93 = vpop.permute.xlu0 %92
    %94 = vset.pattern.permute.xlu0 0
    %95 = vperm.xlu0 %94, %v38
    %v96 = vpop.permute.xlu0 %95
    %97 = vset.pattern.permute.xlu0 0
    %98 = vperm.xlu0 %97, %v39
    %v99 = vpop.permute.xlu0 %98
    %100 = vset.pattern.permute.xlu0 0
    %101 = vperm.xlu0 %100, %v40
    %v102 = vpop.permute.xlu0 %101
    %103 = vset.pattern.permute.xlu0 0
    %104 = vperm.xlu0 %103, %v41
    %v105 = vpop.permute.xlu0 %104
    %106 = vset.pattern.permute.xlu0 0
    %107 = vperm.xlu0 %106, %v42
    %v108 = vpop.permute.xlu0 %107
    %109 = vset.pattern.permute.xlu0 0
    %110 = vperm.xlu0 %109, %v43
    %v111 = vpop.permute.xlu0 %110
    %112 = vset.pattern.permute.xlu0 0
    %113 = vperm.xlu0 %112, %v44
    %v114 = vpop.permute.xlu0 %113
    %115 = vset.pattern.permute.xlu0 0
    %116 = vperm.xlu0 %115, %v45
    %v117 = vpop.permute.xlu0 %116
    %118 = vset.pattern.permute.xlu0 0
    %119 = vperm.xlu0 %118, %v46
    %v120 = vpop.permute.xlu0 %119
    %121 = vset.pattern.permute.xlu0 0
    %122 = vperm.xlu0 %121, %v47
    %v123 = vpop.permute.xlu0 %122
    %124 = vset.pattern.permute.xlu0 0
    %125 = vperm.xlu0 %124, %v48
    %v126 = vpop.permute.xlu0 %125
    %127 = vset.pattern.permute.xlu0 0
    %128 = vperm.xlu0 %127, %v49
    %v129 = vpop.permute.xlu0 %128
    %130 = vset.pattern.permute.xlu0 0
    %131 = vperm.xlu0 %130, %v50
    %v132 = vpop.permute.xlu0 %131
    %133 = vset.pattern.permute.xlu0 0
    %134 = vperm.xlu0 %133, %v51
    %v135 = vpop.permute.xlu0 %134
    %136 = vset.pattern.permute.xlu0 0
    %137 = vperm.xlu0 %136, %v52
    %v138 = vpop.permute.xlu0 %137
    %139 = vset.pattern.permute.xlu0 0
    %140 = vperm.xlu0 %139, %v53
    %v141 = vpop.permute.xlu0 %140
    %142 = vset.pattern.permute.xlu0 0
    %143 = vperm.xlu0 %142, %v54
    %v144 = vpop.permute.xlu0 %143
    %145 = vset.pattern.permute.xlu0 0
    %146 = vperm.xlu0 %145, %v55
    %v147 = vpop.permute.xlu0 %146
    %148 = vset.pattern.permute.xlu0 0
    %149 = vperm.xlu0 %148, %v56
    %v150 = vpop.permute.xlu0 %149
    %151 = vset.pattern.permute.xlu0 0
    %152 = vperm.xlu0 %151, %v57
    %v153 = vpop.permute.xlu0 %152
    %154 = vset.pattern.permute.xlu0 0
    %155 = vperm.xlu0 %154, %v58
    %v156 = vpop.permute.xlu0 %155
    %157 = vset.pattern.permute.xlu0 0
    %158 = vperm.xlu0 %157, %v59
    %v159 = vpop.permute.xlu0 %158
    %160 = vset.pattern.permute.xlu0 0
    %161 = vperm.xlu0 %160, %v60
    %v162 = vpop.permute.xlu0 %161
    %163 = vset.pattern.permute.xlu0 0
    %164 = vperm.xlu0 %163, %v61
    %v165 = vpop.permute.xlu0 %164
    %166 = vset.pattern.permute.xlu0 0
    %167 = vperm.xlu0 %166, %v62
    %v168 = vpop.permute.xlu0 %167
    %169 = vset.pattern.permute.xlu0 0
    %170 = vperm.xlu0 %169, %v63
    %v171 = vpop.permute.xlu0 %170
    %172 = vset.pattern.permute.xlu0 0
    %173 = vperm.xlu0 %172, %v64
    %v174 = vpop.permute.xlu0 %173
    %175 = vset.pattern.permute.xlu0 0
    %176 = vperm.xlu0 %175, %v65
    %v177 = vpop.permute.xlu0 %176
    %178 = vset.pattern.permute.xlu0 0
    %179 = vperm.xlu0 %178, %v66
    %v180 = vpop.permute.xlu0 %179
    %181 = vset.pattern.permute.xlu0 0
    %182 = vperm.xlu0 %181, %v67
    %v183 = vpop.permute.xlu0 %182
    %184 = vset.pattern.permute.xlu0 0
    %185 = vperm.xlu0 %184, %v68
    %v186 = vpop.permute.xlu0 %185
    %187 = vset.pattern.permute.xlu0 0
    %188 = vperm.xlu0 %187, %v69
    %v189 = vpop.permute.xlu0 %188
    %190 = vset.pattern.permute.xlu0 0
    %191 = vperm.xlu0 %190, %v70
    %v192 = vpop.permute.xlu0 %191
    %vm193 = vcmp.eq.s32.totalorder %v72, %v75
    %vm194 = vcmp.eq.s32.totalorder %v72, %v78
    %vm195 = vcmp.eq.s32.totalorder %v72, %v81
    %vm196 = vcmp.eq.s32.totalorder %v72, %v84
    %vm197 = vcmp.eq.s32.totalorder %v72, %v87
    %vm198 = vcmp.eq.s32.totalorder %v72, %v90
    %vm199 = vcmp.eq.s32.totalorder %v72, %v93
    %vm200 = vcmp.eq.s32.totalorder %v72, %v96
    %vm201 = vcmp.eq.s32.totalorder %v72, %v99
    %vm202 = vcmp.eq.s32.totalorder %v72, %v102
    %vm203 = vcmp.eq.s32.totalorder %v72, %v105
    %vm204 = vcmp.eq.s32.totalorder %v72, %v108
    %vm205 = vcmp.eq.s32.totalorder %v72, %v111
    %vm206 = vcmp.eq.s32.totalorder %v72, %v114
    %vm207 = vcmp.eq.s32.totalorder %v72, %v117
    %vm208 = vcmp.eq.s32.totalorder %v72, %v120
    %vm209 = vcmp.eq.s32.totalorder %v72, %v123
    %vm210 = vcmp.eq.s32.totalorder %v72, %v126
    %vm211 = vcmp.eq.s32.totalorder %v72, %v129
    %vm212 = vcmp.eq.s32.totalorder %v72, %v132
    %vm213 = vcmp.eq.s32.totalorder %v72, %v135
    %vm214 = vcmp.eq.s32.totalorder %v72, %v138
    %vm215 = vcmp.eq.s32.totalorder %v72, %v141
    %vm216 = vcmp.eq.s32.totalorder %v72, %v144
    %vm217 = vcmp.eq.s32.totalorder %v72, %v147
    %vm218 = vcmp.eq.s32.totalorder %v72, %v150
    %vm219 = vcmp.eq.s32.totalorder %v72, %v153
    %vm220 = vcmp.eq.s32.totalorder %v72, %v156
    %vm221 = vcmp.eq.s32.totalorder %v72, %v159
    %vm222 = vcmp.eq.s32.totalorder %v72, %v162
    %vm223 = vcmp.eq.s32.totalorder %v72, %v165
    %vm224 = vcmp.eq.s32.totalorder %v72, %v168
    %vm225 = vcmp.eq.s32.totalorder %v72, %v171
    %vm226 = vcmp.eq.s32.totalorder %v72, %v174
    %vm227 = vcmp.eq.s32.totalorder %v72, %v177
    %vm228 = vcmp.eq.s32.totalorder %v72, %v180
    %vm229 = vcmp.eq.s32.totalorder %v72, %v183
    %vm230 = vcmp.eq.s32.totalorder %v72, %v186
    %vm231 = vcmp.eq.s32.totalorder %v72, %v189
    %vm232 = vcmp.eq.s32.totalorder %v72, %v192
    %v233 = vsel %vm193, 1, 0
    %v234 = vsel %vm194, 1, 0
    %v235 = vsel %vm195, 1, 0
    %v236 = vsel %vm196, 1, 0
    %v237 = vsel %vm197, 1, 0
    %v238 = vsel %vm198, 1, 0
    %v239 = vsel %vm199, 1, 0
    %v240 = vsel %vm200, 1, 0
    %v241 = vsel %vm201, 1, 0
    %v242 = vsel %vm202, 1, 0
    %v243 = vsel %vm203, 1, 0
    %v244 = vsel %vm204, 1, 0
    %v245 = vsel %vm205, 1, 0
    %v246 = vsel %vm206, 1, 0
    %v247 = vsel %vm207, 1, 0
    %v248 = vsel %vm208, 1, 0
    %v249 = vsel %vm209, 1, 0
    %v250 = vsel %vm210, 1, 0
    %v251 = vsel %vm211, 1, 0
    %v252 = vsel %vm212, 1, 0
    %v253 = vsel %vm213, 1, 0
    %v254 = vsel %vm214, 1, 0
    %v255 = vsel %vm215, 1, 0
    %v256 = vsel %vm216, 1, 0
    %v257 = vsel %vm217, 1, 0
    %v258 = vsel %vm218, 1, 0
    %v259 = vsel %vm219, 1, 0
    %v260 = vsel %vm220, 1, 0
    %v261 = vsel %vm221, 1, 0
    %v262 = vsel %vm222, 1, 0
    %v263 = vsel %vm223, 1, 0
    %v264 = vsel %vm224, 1, 0
    %v265 = vsel %vm225, 1, 0
    %v266 = vsel %vm226, 1, 0
    %v267 = vsel %vm227, 1, 0
    %v268 = vsel %vm228, 1, 0
    %v269 = vsel %vm229, 1, 0
    %v270 = vsel %vm230, 1, 0
    %v271 = vsel %vm231, 1, 0
    %v272 = vsel %vm232, 1, 0
    %v273 = vcvt.s32.f32 %v233
    %v274 = vcvt.s32.f32 %v234
    %v275 = vcvt.s32.f32 %v235
    %v276 = vcvt.s32.f32 %v236
    %v277 = vcvt.s32.f32 %v237
    %v278 = vcvt.s32.f32 %v238
    %v279 = vcvt.s32.f32 %v239
    %v280 = vcvt.s32.f32 %v240
    %v281 = vcvt.s32.f32 %v241
    %v282 = vcvt.s32.f32 %v242
    %v283 = vcvt.s32.f32 %v243
    %v284 = vcvt.s32.f32 %v244
    %v285 = vcvt.s32.f32 %v245
    %v286 = vcvt.s32.f32 %v246
    %v287 = vcvt.s32.f32 %v247
    %v288 = vcvt.s32.f32 %v248
    %v289 = vcvt.s32.f32 %v249
    %v290 = vcvt.s32.f32 %v250
    %v291 = vcvt.s32.f32 %v251
    %v292 = vcvt.s32.f32 %v252
    %v293 = vcvt.s32.f32 %v253
    %v294 = vcvt.s32.f32 %v254
    %v295 = vcvt.s32.f32 %v255
    %v296 = vcvt.s32.f32 %v256
    %v297 = vcvt.s32.f32 %v257
    %v298 = vcvt.s32.f32 %v258
    %v299 = vcvt.s32.f32 %v259
    %v300 = vcvt.s32.f32 %v260
    %v301 = vcvt.s32.f32 %v261
    %v302 = vcvt.s32.f32 %v262
    %v303 = vcvt.s32.f32 %v263
    %v304 = vcvt.s32.f32 %v264
    %v305 = vcvt.s32.f32 %v265
    %v306 = vcvt.s32.f32 %v266
    %v307 = vcvt.s32.f32 %v267
    %v308 = vcvt.s32.f32 %v268
    %v309 = vcvt.s32.f32 %v269
    %v310 = vcvt.s32.f32 %v270
    %v311 = vcvt.s32.f32 %v271
    %v312 = vcvt.s32.f32 %v272
    %v313 = vld [vmem:[#allocation3] sm:$0xff]
    %v314 = vld [vmem:[#allocation3 + $0x8] sm:$0xff]
    %v315 = vld [vmem:[#allocation3 + $0x10] sm:$0xff]
    %v316 = vld [vmem:[#allocation3 + $0x18] sm:$0xff]
    %v317 = vld [vmem:[#allocation3 + $0x20] sm:$0xff]
    %v318 = vld [vmem:[#allocation3 + $0x28] sm:$0xff]
    %v319 = vld [vmem:[#allocation3 + $0x30] sm:$0xff]
    %v320 = vld [vmem:[#allocation3 + $0x38] sm:$0xff]
    %v321 = vld [vmem:[#allocation3 + $0x40] sm:$0xff]
    %v322 = vld [vmem:[#allocation3 + $0x48] sm:$0xff]
    %v323 = vld [vmem:[#allocation3 + $0x50] sm:$0xff]
    %v324 = vld [vmem:[#allocation3 + $0x58] sm:$0xff]
    %v325 = vld [vmem:[#allocation3 + $0x60] sm:$0xff]
    %v326 = vld [vmem:[#allocation3 + $0x68] sm:$0xff]
    %v327 = vld [vmem:[#allocation3 + $0x70] sm:$0xff]
    %v328 = vld [vmem:[#allocation3 + $0x78] sm:$0xff]
    %v329 = vld [vmem:[#allocation3 + $0x80] sm:$0xff]
    %v330 = vld [vmem:[#allocation3 + $0x88] sm:$0xff]
    %v331 = vld [vmem:[#allocation3 + $0x90] sm:$0xff]
    %v332 = vld [vmem:[#allocation3 + $0x98] sm:$0xff]
    %v333 = vld [vmem:[#allocation3 + $0xa0] sm:$0xff]
    %v334 = vld [vmem:[#allocation3 + $0xa8] sm:$0xff]
    %v335 = vld [vmem:[#allocation3 + $0xb0] sm:$0xff]
    %v336 = vld [vmem:[#allocation3 + $0xb8] sm:$0xff]
    %v337 = vld [vmem:[#allocation3 + $0xc0] sm:$0xff]
    %v338 = vld [vmem:[#allocation3 + $0xc8] sm:$0xff]
    %v339 = vld [vmem:[#allocation3 + $0xd0] sm:$0xff]
    %v340 = vld [vmem:[#allocation3 + $0xd8] sm:$0xff]
    %v341 = vld [vmem:[#allocation3 + $0xe0] sm:$0xff]
    %v342 = vld [vmem:[#allocation3 + $0xe8] sm:$0xff]
    %v343 = vld [vmem:[#allocation3 + $0xf0] sm:$0xff]
    %v344 = vld [vmem:[#allocation3 + $0xf8] sm:$0xff]
    %v345 = vld [vmem:[#allocation3 + $0x100] sm:$0xff]
    %v346 = vld [vmem:[#allocation3 + $0x108] sm:$0xff]
    %v347 = vld [vmem:[#allocation3 + $0x110] sm:$0xff]
    %v348 = vld [vmem:[#allocation3 + $0x118] sm:$0xff]
    %v349 = vld [vmem:[#allocation3 + $0x120] sm:$0xff]
    %v350 = vld [vmem:[#allocation3 + $0x128] sm:$0xff]
    %v351 = vld [vmem:[#allocation3 + $0x130] sm:$0xff]
    %v352 = vld [vmem:[#allocation3 + $0x138] sm:$0xff]
    %v353 = vld [vmem:[#allocation3 + $0x140] sm:$0xff]
    %v354 = vld [vmem:[#allocation3 + $0x148] sm:$0xff]
    %v355 = vld [vmem:[#allocation3 + $0x150] sm:$0xff]
    %v356 = vld [vmem:[#allocation3 + $0x158] sm:$0xff]
    %v357 = vld [vmem:[#allocation3 + $0x160] sm:$0xff]
    %v358 = vld [vmem:[#allocation3 + $0x168] sm:$0xff]
    %v359 = vld [vmem:[#allocation3 + $0x170] sm:$0xff]
    %v360 = vld [vmem:[#allocation3 + $0x178] sm:$0xff]
    %361 = vmatpush.msra.mxu0 %v358
    %362 = vmatpush.msra.mxu0 %v355
    %363 = vmatpush.msra.mxu0 %v352
    %364 = vmatpush.msra.mxu0 %v349
    %365 = vmatpush.msra.mxu0 %v346
    %366 = vmatpush.msra.mxu0 %v343
    %367 = vmatpush.msra.mxu0 %v340
    %368 = vmatpush.msra.mxu0 %v337
    %369 = vmatpush.msra.mxu0 %v334
    %370 = vmatpush.msra.mxu0 %v331
    %371 = vmatpush.msra.mxu0 %v328
    %372 = vmatpush.msra.mxu0 %v325
    %373 = vmatpush.msra.mxu0 %v322
    %374 = vmatpush.msra.mxu0 %v319
    %375 = vmatpush.msra.mxu0 %v316
    %376 = vmatpush.msra.mxu0 %v313
    %377 = vmatmul.f32.gmra.mxu0 %v273
    %v378 = vpop.f32.mrf.mxu0
    %v379 = vadd.f32 0.0, %v378
    %380 = vmatmul.f32.gmra.mxu0 %v274
    %v381 = vpop.f32.mrf.mxu0
    %v382 = vadd.f32 0.0, %v381
    %383 = vmatmul.f32.gmra.mxu0 %v275
    %v384 = vpop.f32.mrf.mxu0
    %v385 = vadd.f32 0.0, %v384
    %386 = vmatmul.f32.gmra.mxu0 %v276
    %v387 = vpop.f32.mrf.mxu0
    %v388 = vadd.f32 0.0, %v387
    %389 = vmatmul.f32.gmra.mxu0 %v277
    %v390 = vpop.f32.mrf.mxu0
    %v391 = vadd.f32 0.0, %v390
    %392 = vmatmul.f32.gmra.mxu0 %v278
    %v393 = vpop.f32.mrf.mxu0
    %v394 = vadd.f32 0.0, %v393
    %395 = vmatmul.f32.gmra.mxu0 %v279
    %v396 = vpop.f32.mrf.mxu0
    %v397 = vadd.f32 0.0, %v396
    %398 = vmatmul.f32.gmra.mxu0 %v280
    %v399 = vpop.f32.mrf.mxu0
    %v400 = vadd.f32 0.0, %v399
    %401 = vmatmul.f32.gmra.mxu0 %v281
    %v402 = vpop.f32.mrf.mxu0
    %v403 = vadd.f32 0.0, %v402
    %404 = vmatmul.f32.gmra.mxu0 %v282
    %v405 = vpop.f32.mrf.mxu0
    %v406 = vadd.f32 0.0, %v405
    %407 = vmatmul.f32.gmra.mxu0 %v283
    %v408 = vpop.f32.mrf.mxu0
    %v409 = vadd.f32 0.0, %v408
    %410 = vmatmul.f32.gmra.mxu0 %v284
    %v411 = vpop.f32.mrf.mxu0
    %v412 = vadd.f32 0.0, %v411
    %413 = vmatmul.f32.gmra.mxu0 %v285
    %v414 = vpop.f32.mrf.mxu0
    %v415 = vadd.f32 0.0, %v414
    %416 = vmatmul.f32.gmra.mxu0 %v286
    %v417 = vpop.f32.mrf.mxu0
    %v418 = vadd.f32 0.0, %v417
    %419 = vmatmul.f32.gmra.mxu0 %v287
    %v420 = vpop.f32.mrf.mxu0
    %v421 = vadd.f32 0.0, %v420
    %422 = vmatmul.f32.gmra.mxu0 %v288
    %v423 = vpop.f32.mrf.mxu0
    %v424 = vadd.f32 0.0, %v423
    %425 = vmatmul.f32.gmra.mxu0 %v289
    %v426 = vpop.f32.mrf.mxu0
    %v427 = vadd.f32 0.0, %v426
    %428 = vmatmul.f32.gmra.mxu0 %v290
    %v429 = vpop.f32.mrf.mxu0
    %v430 = vadd.f32 0.0, %v429
    %431 = vmatmul.f32.gmra.mxu0 %v291
    %v432 = vpop.f32.mrf.mxu0
    %v433 = vadd.f32 0.0, %v432
    %434 = vmatmul.f32.gmra.mxu0 %v292
    %v435 = vpop.f32.mrf.mxu0
    %v436 = vadd.f32 0.0, %v435
    %437 = vmatmul.f32.gmra.mxu0 %v293
    %v438 = vpop.f32.mrf.mxu0
    %v439 = vadd.f32 0.0, %v438
    %440 = vmatmul.f32.gmra.mxu0 %v294
    %v441 = vpop.f32.mrf.mxu0
    %v442 = vadd.f32 0.0, %v441
    %443 = vmatmul.f32.gmra.mxu0 %v295
    %v444 = vpop.f32.mrf.mxu0
    %v445 = vadd.f32 0.0, %v444
    %446 = vmatmul.f32.gmra.mxu0 %v296
    %v447 = vpop.f32.mrf.mxu0
    %v448 = vadd.f32 0.0, %v447
    %449 = vmatmul.f32.gmra.mxu0 %v297
    %v450 = vpop.f32.mrf.mxu0
    %v451 = vadd.f32 0.0, %v450
    %452 = vmatmul.f32.gmra.mxu0 %v298
    %v453 = vpop.f32.mrf.mxu0
    %v454 = vadd.f32 0.0, %v453
    %455 = vmatmul.f32.gmra.mxu0 %v299
    %v456 = vpop.f32.mrf.mxu0
    %v457 = vadd.f32 0.0, %v456
    %458 = vmatmul.f32.gmra.mxu0 %v300
    %v459 = vpop.f32.mrf.mxu0
    %v460 = vadd.f32 0.0, %v459
    %461 = vmatmul.f32.gmra.mxu0 %v301
    %v462 = vpop.f32.mrf.mxu0
    %v463 = vadd.f32 0.0, %v462
    %464 = vmatmul.f32.gmra.mxu0 %v302
    %v465 = vpop.f32.mrf.mxu0
    %v466 = vadd.f32 0.0, %v465
    %467 = vmatmul.f32.gmra.mxu0 %v303
    %v468 = vpop.f32.mrf.mxu0
    %v469 = vadd.f32 0.0, %v468
    %470 = vmatmul.f32.gmra.mxu0 %v304
    %v471 = vpop.f32.mrf.mxu0
    %v472 = vadd.f32 0.0, %v471
    %473 = vmatmul.f32.gmra.mxu0 %v305
    %v474 = vpop.f32.mrf.mxu0
    %v475 = vadd.f32 0.0, %v474
    %476 = vmatmul.f32.gmra.mxu0 %v306
    %v477 = vpop.f32.mrf.mxu0
    %v478 = vadd.f32 0.0, %v477
    %479 = vmatmul.f32.gmra.mxu0 %v307
    %v480 = vpop.f32.mrf.mxu0
    %v481 = vadd.f32 0.0, %v480
    %482 = vmatmul.f32.gmra.mxu0 %v308
    %v483 = vpop.f32.mrf.mxu0
    %v484 = vadd.f32 0.0, %v483
    %485 = vmatmul.f32.gmra.mxu0 %v309
    %v486 = vpop.f32.mrf.mxu0
    %v487 = vadd.f32 0.0, %v486
    %488 = vmatmul.f32.gmra.mxu0 %v310
    %v489 = vpop.f32.mrf.mxu0
    %v490 = vadd.f32 0.0, %v489
    %491 = vmatmul.f32.gmra.mxu0 %v311
    %v492 = vpop.f32.mrf.mxu0
    %v493 = vadd.f32 0.0, %v492
    %494 = vmatmul.f32.gmra.mxu0 %v312
    %v495 = vpop.f32.mrf.mxu0
    %v496 = vadd.f32 0.0, %v495
    %497 = vdwg.mxu0
    %498 = vmatpush.msra.mxu0 %v359
    %499 = vmatpush.msra.mxu0 %v356
    %500 = vmatpush.msra.mxu0 %v353
    %501 = vmatpush.msra.mxu0 %v350
    %502 = vmatpush.msra.mxu0 %v347
    %503 = vmatpush.msra.mxu0 %v344
    %504 = vmatpush.msra.mxu0 %v341
    %505 = vmatpush.msra.mxu0 %v338
    %506 = vmatpush.msra.mxu0 %v335
    %507 = vmatpush.msra.mxu0 %v332
    %508 = vmatpush.msra.mxu0 %v329
    %509 = vmatpush.msra.mxu0 %v326
    %510 = vmatpush.msra.mxu0 %v323
    %511 = vmatpush.msra.mxu0 %v320
    %512 = vmatpush.msra.mxu0 %v317
    %513 = vmatpush.msra.mxu0 %v314
    %514 = vmatmul.f32.gmra.mxu0 %v273
    %v515 = vpop.f32.mrf.mxu0
    %v516 = vadd.f32 0.0, %v515
    %517 = vmatmul.f32.gmra.mxu0 %v274
    %v518 = vpop.f32.mrf.mxu0
    %v519 = vadd.f32 0.0, %v518
    %520 = vmatmul.f32.gmra.mxu0 %v275
    %v521 = vpop.f32.mrf.mxu0
    %v522 = vadd.f32 0.0, %v521
    %523 = vmatmul.f32.gmra.mxu0 %v276
    %v524 = vpop.f32.mrf.mxu0
    %v525 = vadd.f32 0.0, %v524
    %526 = vmatmul.f32.gmra.mxu0 %v277
    %v527 = vpop.f32.mrf.mxu0
    %v528 = vadd.f32 0.0, %v527
    %529 = vmatmul.f32.gmra.mxu0 %v278
    %v530 = vpop.f32.mrf.mxu0
    %v531 = vadd.f32 0.0, %v530
    %532 = vmatmul.f32.gmra.mxu0 %v279
    %v533 = vpop.f32.mrf.mxu0
    %v534 = vadd.f32 0.0, %v533
    %535 = vmatmul.f32.gmra.mxu0 %v280
    %v536 = vpop.f32.mrf.mxu0
    %v537 = vadd.f32 0.0, %v536
    %538 = vmatmul.f32.gmra.mxu0 %v281
    %v539 = vpop.f32.mrf.mxu0
    %v540 = vadd.f32 0.0, %v539
    %541 = vmatmul.f32.gmra.mxu0 %v282
    %v542 = vpop.f32.mrf.mxu0
    %v543 = vadd.f32 0.0, %v542
    %544 = vmatmul.f32.gmra.mxu0 %v283
    %v545 = vpop.f32.mrf.mxu0
    %v546 = vadd.f32 0.0, %v545
    %547 = vmatmul.f32.gmra.mxu0 %v284
    %v548 = vpop.f32.mrf.mxu0
    %v549 = vadd.f32 0.0, %v548
    %550 = vmatmul.f32.gmra.mxu0 %v285
    %v551 = vpop.f32.mrf.mxu0
    %v552 = vadd.f32 0.0, %v551
    %553 = vmatmul.f32.gmra.mxu0 %v286
    %v554 = vpop.f32.mrf.mxu0
    %v555 = vadd.f32 0.0, %v554
    %556 = vmatmul.f32.gmra.mxu0 %v287
    %v557 = vpop.f32.mrf.mxu0
    %v558 = vadd.f32 0.0, %v557
    %559 = vmatmul.f32.gmra.mxu0 %v288
    %v560 = vpop.f32.mrf.mxu0
    %v561 = vadd.f32 0.0, %v560
    %562 = vmatmul.f32.gmra.mxu0 %v289
    %v563 = vpop.f32.mrf.mxu0
    %v564 = vadd.f32 0.0, %v563
    %565 = vmatmul.f32.gmra.mxu0 %v290
    %v566 = vpop.f32.mrf.mxu0
    %v567 = vadd.f32 0.0, %v566
    %568 = vmatmul.f32.gmra.mxu0 %v291
    %v569 = vpop.f32.mrf.mxu0
    %v570 = vadd.f32 0.0, %v569
    %571 = vmatmul.f32.gmra.mxu0 %v292
    %v572 = vpop.f32.mrf.mxu0
    %v573 = vadd.f32 0.0, %v572
    %574 = vmatmul.f32.gmra.mxu0 %v293
    %v575 = vpop.f32.mrf.mxu0
    %v576 = vadd.f32 0.0, %v575
    %577 = vmatmul.f32.gmra.mxu0 %v294
    %v578 = vpop.f32.mrf.mxu0
    %v579 = vadd.f32 0.0, %v578
    %580 = vmatmul.f32.gmra.mxu0 %v295
    %v581 = vpop.f32.mrf.mxu0
    %v582 = vadd.f32 0.0, %v581
    %583 = vmatmul.f32.gmra.mxu0 %v296
    %v584 = vpop.f32.mrf.mxu0
    %v585 = vadd.f32 0.0, %v584
    %586 = vmatmul.f32.gmra.mxu0 %v297
    %v587 = vpop.f32.mrf.mxu0
    %v588 = vadd.f32 0.0, %v587
    %589 = vmatmul.f32.gmra.mxu0 %v298
    %v590 = vpop.f32.mrf.mxu0
    %v591 = vadd.f32 0.0, %v590
    %592 = vmatmul.f32.gmra.mxu0 %v299
    %v593 = vpop.f32.mrf.mxu0
    %v594 = vadd.f32 0.0, %v593
    %595 = vmatmul.f32.gmra.mxu0 %v300
    %v596 = vpop.f32.mrf.mxu0
    %v597 = vadd.f32 0.0, %v596
    %598 = vmatmul.f32.gmra.mxu0 %v301
    %v599 = vpop.f32.mrf.mxu0
    %v600 = vadd.f32 0.0, %v599
    %601 = vmatmul.f32.gmra.mxu0 %v302
    %v602 = vpop.f32.mrf.mxu0
    %v603 = vadd.f32 0.0, %v602
    %604 = vmatmul.f32.gmra.mxu0 %v303
    %v605 = vpop.f32.mrf.mxu0
    %v606 = vadd.f32 0.0, %v605
    %607 = vmatmul.f32.gmra.mxu0 %v304
    %v608 = vpop.f32.mrf.mxu0
    %v609 = vadd.f32 0.0, %v608
    %610 = vmatmul.f32.gmra.mxu0 %v305
    %v611 = vpop.f32.mrf.mxu0
    %v612 = vadd.f32 0.0, %v611
    %613 = vmatmul.f32.gmra.mxu0 %v306
    %v614 = vpop.f32.mrf.mxu0
    %v615 = vadd.f32 0.0, %v614
    %616 = vmatmul.f32.gmra.mxu0 %v307
    %v617 = vpop.f32.mrf.mxu0
    %v618 = vadd.f32 0.0, %v617
    %619 = vmatmul.f32.gmra.mxu0 %v308
    %v620 = vpop.f32.mrf.mxu0
    %v621 = vadd.f32 0.0, %v620
    %622 = vmatmul.f32.gmra.mxu0 %v309
    %v623 = vpop.f32.mrf.mxu0
    %v624 = vadd.f32 0.0, %v623
    %625 = vmatmul.f32.gmra.mxu0 %v310
    %v626 = vpop.f32.mrf.mxu0
    %v627 = vadd.f32 0.0, %v626
    %628 = vmatmul.f32.gmra.mxu0 %v311
    %v629 = vpop.f32.mrf.mxu0
    %v630 = vadd.f32 0.0, %v629
    %631 = vmatmul.f32.gmra.mxu0 %v312
    %v632 = vpop.f32.mrf.mxu0
    %v633 = vadd.f32 0.0, %v632
    %634 = vdwg.mxu0
    %635 = vmatpush.msra.mxu0 %v360
    %636 = vmatpush.msra.mxu0 %v357
    %637 = vmatpush.msra.mxu0 %v354
    %638 = vmatpush.msra.mxu0 %v351
    %639 = vmatpush.msra.mxu0 %v348
    %640 = vmatpush.msra.mxu0 %v345
    %641 = vmatpush.msra.mxu0 %v342
    %642 = vmatpush.msra.mxu0 %v339
    %643 = vmatpush.msra.mxu0 %v336
    %644 = vmatpush.msra.mxu0 %v333
    %645 = vmatpush.msra.mxu0 %v330
    %646 = vmatpush.msra.mxu0 %v327
    %647 = vmatpush.msra.mxu0 %v324
    %648 = vmatpush.msra.mxu0 %v321
    %649 = vmatpush.msra.mxu0 %v318
    %650 = vmatpush.msra.mxu0 %v315
    %651 = vmatmul.f32.gmra.mxu0 %v273
    %v652 = vpop.f32.mrf.mxu0
    %v653 = vadd.f32 0.0, %v652
    %654 = vmatmul.f32.gmra.mxu0 %v274
    %v655 = vpop.f32.mrf.mxu0
    %v656 = vadd.f32 0.0, %v655
    %657 = vmatmul.f32.gmra.mxu0 %v275
    %v658 = vpop.f32.mrf.mxu0
    %v659 = vadd.f32 0.0, %v658
    %660 = vmatmul.f32.gmra.mxu0 %v276
    %v661 = vpop.f32.mrf.mxu0
    %v662 = vadd.f32 0.0, %v661
    %663 = vmatmul.f32.gmra.mxu0 %v277
    %v664 = vpop.f32.mrf.mxu0
    %v665 = vadd.f32 0.0, %v664
    %666 = vmatmul.f32.gmra.mxu0 %v278
    %v667 = vpop.f32.mrf.mxu0
    %v668 = vadd.f32 0.0, %v667
    %669 = vmatmul.f32.gmra.mxu0 %v279
    %v670 = vpop.f32.mrf.mxu0
    %v671 = vadd.f32 0.0, %v670
    %672 = vmatmul.f32.gmra.mxu0 %v280
    %v673 = vpop.f32.mrf.mxu0
    %v674 = vadd.f32 0.0, %v673
    %675 = vmatmul.f32.gmra.mxu0 %v281
    %v676 = vpop.f32.mrf.mxu0
    %v677 = vadd.f32 0.0, %v676
    %678 = vmatmul.f32.gmra.mxu0 %v282
    %v679 = vpop.f32.mrf.mxu0
    %v680 = vadd.f32 0.0, %v679
    %681 = vmatmul.f32.gmra.mxu0 %v283
    %v682 = vpop.f32.mrf.mxu0
    %v683 = vadd.f32 0.0, %v682
    %684 = vmatmul.f32.gmra.mxu0 %v284
    %v685 = vpop.f32.mrf.mxu0
    %v686 = vadd.f32 0.0, %v685
    %687 = vmatmul.f32.gmra.mxu0 %v285
    %v688 = vpop.f32.mrf.mxu0
    %v689 = vadd.f32 0.0, %v688
    %690 = vmatmul.f32.gmra.mxu0 %v286
    %v691 = vpop.f32.mrf.mxu0
    %v692 = vadd.f32 0.0, %v691
    %693 = vmatmul.f32.gmra.mxu0 %v287
    %v694 = vpop.f32.mrf.mxu0
    %v695 = vadd.f32 0.0, %v694
    %696 = vmatmul.f32.gmra.mxu0 %v288
    %v697 = vpop.f32.mrf.mxu0
    %v698 = vadd.f32 0.0, %v697
    %699 = vmatmul.f32.gmra.mxu0 %v289
    %v700 = vpop.f32.mrf.mxu0
    %v701 = vadd.f32 0.0, %v700
    %702 = vmatmul.f32.gmra.mxu0 %v290
    %v703 = vpop.f32.mrf.mxu0
    %v704 = vadd.f32 0.0, %v703
    %705 = vmatmul.f32.gmra.mxu0 %v291
    %v706 = vpop.f32.mrf.mxu0
    %v707 = vadd.f32 0.0, %v706
    %708 = vmatmul.f32.gmra.mxu0 %v292
    %v709 = vpop.f32.mrf.mxu0
    %v710 = vadd.f32 0.0, %v709
    %711 = vmatmul.f32.gmra.mxu0 %v293
    %v712 = vpop.f32.mrf.mxu0
    %v713 = vadd.f32 0.0, %v712
    %714 = vmatmul.f32.gmra.mxu0 %v294
    %v715 = vpop.f32.mrf.mxu0
    %v716 = vadd.f32 0.0, %v715
    %717 = vmatmul.f32.gmra.mxu0 %v295
    %v718 = vpop.f32.mrf.mxu0
    %v719 = vadd.f32 0.0, %v718
    %720 = vmatmul.f32.gmra.mxu0 %v296
    %v721 = vpop.f32.mrf.mxu0
    %v722 = vadd.f32 0.0, %v721
    %723 = vmatmul.f32.gmra.mxu0 %v297
    %v724 = vpop.f32.mrf.mxu0
    %v725 = vadd.f32 0.0, %v724
    %726 = vmatmul.f32.gmra.mxu0 %v298
    %v727 = vpop.f32.mrf.mxu0
    %v728 = vadd.f32 0.0, %v727
    %729 = vmatmul.f32.gmra.mxu0 %v299
    %v730 = vpop.f32.mrf.mxu0
    %v731 = vadd.f32 0.0, %v730
    %732 = vmatmul.f32.gmra.mxu0 %v300
    %v733 = vpop.f32.mrf.mxu0
    %v734 = vadd.f32 0.0, %v733
    %735 = vmatmul.f32.gmra.mxu0 %v301
    %v736 = vpop.f32.mrf.mxu0
    %v737 = vadd.f32 0.0, %v736
    %738 = vmatmul.f32.gmra.mxu0 %v302
    %v739 = vpop.f32.mrf.mxu0
    %v740 = vadd.f32 0.0, %v739
    %741 = vmatmul.f32.gmra.mxu0 %v303
    %v742 = vpop.f32.mrf.mxu0
    %v743 = vadd.f32 0.0, %v742
    %744 = vmatmul.f32.gmra.mxu0 %v304
    %v745 = vpop.f32.mrf.mxu0
    %v746 = vadd.f32 0.0, %v745
    %747 = vmatmul.f32.gmra.mxu0 %v305
    %v748 = vpop.f32.mrf.mxu0
    %v749 = vadd.f32 0.0, %v748
    %750 = vmatmul.f32.gmra.mxu0 %v306
    %v751 = vpop.f32.mrf.mxu0
    %v752 = vadd.f32 0.0, %v751
    %753 = vmatmul.f32.gmra.mxu0 %v307
    %v754 = vpop.f32.mrf.mxu0
    %v755 = vadd.f32 0.0, %v754
    %756 = vmatmul.f32.gmra.mxu0 %v308
    %v757 = vpop.f32.mrf.mxu0
    %v758 = vadd.f32 0.0, %v757
    %759 = vmatmul.f32.gmra.mxu0 %v309
    %v760 = vpop.f32.mrf.mxu0
    %v761 = vadd.f32 0.0, %v760
    %762 = vmatmul.f32.gmra.mxu0 %v310
    %v763 = vpop.f32.mrf.mxu0
    %v764 = vadd.f32 0.0, %v763
    %765 = vmatmul.f32.gmra.mxu0 %v311
    %v766 = vpop.f32.mrf.mxu0
    %v767 = vadd.f32 0.0, %v766
    %768 = vmatmul.f32.gmra.mxu0 %v312
    %v769 = vpop.f32.mrf.mxu0
    %v770 = vadd.f32 0.0, %v769
    %771 = vdwg.mxu0
    %772 = vst [vmem:[#allocation2] sm:$0xff] %v379
    %773 = vst [vmem:[#allocation2 + $0x8] sm:$0xff] %v516
    %774 = vst [vmem:[#allocation2 + $0x10] sm:$0xff] %v653
    %775 = vst [vmem:[#allocation2 + $0x18] sm:$0xff] %v382
    %776 = vst [vmem:[#allocation2 + $0x20] sm:$0xff] %v519
    %777 = vst [vmem:[#allocation2 + $0x28] sm:$0xff] %v656
    %778 = vst [vmem:[#allocation2 + $0x30] sm:$0xff] %v385
    %779 = vst [vmem:[#allocation2 + $0x38] sm:$0xff] %v522
    %780 = vst [vmem:[#allocation2 + $0x40] sm:$0xff] %v659
    %781 = vst [vmem:[#allocation2 + $0x48] sm:$0xff] %v388
    %782 = vst [vmem:[#allocation2 + $0x50] sm:$0xff] %v525
    %783 = vst [vmem:[#allocation2 + $0x58] sm:$0xff] %v662
    %784 = vst [vmem:[#allocation2 + $0x60] sm:$0xff] %v391
    %785 = vst [vmem:[#allocation2 + $0x68] sm:$0xff] %v528
    %786 = vst [vmem:[#allocation2 + $0x70] sm:$0xff] %v665
    %787 = vst [vmem:[#allocation2 + $0x78] sm:$0xff] %v394
    %788 = vst [vmem:[#allocation2 + $0x80] sm:$0xff] %v531
    %789 = vst [vmem:[#allocation2 + $0x88] sm:$0xff] %v668
    %790 = vst [vmem:[#allocation2 + $0x90] sm:$0xff] %v397
    %791 = vst [vmem:[#allocation2 + $0x98] sm:$0xff] %v534
    %792 = vst [vmem:[#allocation2 + $0xa0] sm:$0xff] %v671
    %793 = vst [vmem:[#allocation2 + $0xa8] sm:$0xff] %v400
    %794 = vst [vmem:[#allocation2 + $0xb0] sm:$0xff] %v537
    %795 = vst [vmem:[#allocation2 + $0xb8] sm:$0xff] %v674
    %796 = vst [vmem:[#allocation2 + $0xc0] sm:$0xff] %v403
    %797 = vst [vmem:[#allocation2 + $0xc8] sm:$0xff] %v540
    %798 = vst [vmem:[#allocation2 + $0xd0] sm:$0xff] %v677
    %799 = vst [vmem:[#allocation2 + $0xd8] sm:$0xff] %v406
    %800 = vst [vmem:[#allocation2 + $0xe0] sm:$0xff] %v543
    %801 = vst [vmem:[#allocation2 + $0xe8] sm:$0xff] %v680
    %802 = vst [vmem:[#allocation2 + $0xf0] sm:$0xff] %v409
    %803 = vst [vmem:[#allocation2 + $0xf8] sm:$0xff] %v546
    %804 = vst [vmem:[#allocation2 + $0x100] sm:$0xff] %v683
    %805 = vst [vmem:[#allocation2 + $0x108] sm:$0xff] %v412
    %806 = vst [vmem:[#allocation2 + $0x110] sm:$0xff] %v549
    %807 = vst [vmem:[#allocation2 + $0x118] sm:$0xff] %v686
    %808 = vst [vmem:[#allocation2 + $0x120] sm:$0xff] %v415
    %809 = vst [vmem:[#allocation2 + $0x128] sm:$0xff] %v552
    %810 = vst [vmem:[#allocation2 + $0x130] sm:$0xff] %v689
    %811 = vst [vmem:[#allocation2 + $0x138] sm:$0xff] %v418
    %812 = vst [vmem:[#allocation2 + $0x140] sm:$0xff] %v555
    %813 = vst [vmem:[#allocation2 + $0x148] sm:$0xff] %v692
    %814 = vst [vmem:[#allocation2 + $0x150] sm:$0xff] %v421
    %815 = vst [vmem:[#allocation2 + $0x158] sm:$0xff] %v558
    %816 = vst [vmem:[#allocation2 + $0x160] sm:$0xff] %v695
    %817 = vst [vmem:[#allocation2 + $0x168] sm:$0xff] %v424
    %818 = vst [vmem:[#allocation2 + $0x170] sm:$0xff] %v561
    %819 = vst [vmem:[#allocation2 + $0x178] sm:$0xff] %v698
    %820 = vst [vmem:[#allocation2 + $0x180] sm:$0xff] %v427
    %821 = vst [vmem:[#allocation2 + $0x188] sm:$0xff] %v564
    %822 = vst [vmem:[#allocation2 + $0x190] sm:$0xff] %v701
    %823 = vst [vmem:[#allocation2 + $0x198] sm:$0xff] %v430
    %824 = vst [vmem:[#allocation2 + $0x1a0] sm:$0xff] %v567
    %825 = vst [vmem:[#allocation2 + $0x1a8] sm:$0xff] %v704
    %826 = vst [vmem:[#allocation2 + $0x1b0] sm:$0xff] %v433
    %827 = vst [vmem:[#allocation2 + $0x1b8] sm:$0xff] %v570
    %828 = vst [vmem:[#allocation2 + $0x1c0] sm:$0xff] %v707
    %829 = vst [vmem:[#allocation2 + $0x1c8] sm:$0xff] %v436
    %830 = vst [vmem:[#allocation2 + $0x1d0] sm:$0xff] %v573
    %831 = vst [vmem:[#allocation2 + $0x1d8] sm:$0xff] %v710
    %832 = vst [vmem:[#allocation2 + $0x1e0] sm:$0xff] %v439
    %833 = vst [vmem:[#allocation2 + $0x1e8] sm:$0xff] %v576
    %834 = vst [vmem:[#allocation2 + $0x1f0] sm:$0xff] %v713
    %835 = vst [vmem:[#allocation2 + $0x1f8] sm:$0xff] %v442
    %836 = vst [vmem:[#allocation2 + $0x200] sm:$0xff] %v579
    %837 = vst [vmem:[#allocation2 + $0x208] sm:$0xff] %v716
    %838 = vst [vmem:[#allocation2 + $0x210] sm:$0xff] %v445
    %839 = vst [vmem:[#allocation2 + $0x218] sm:$0xff] %v582
    %840 = vst [vmem:[#allocation2 + $0x220] sm:$0xff] %v719
    %841 = vst [vmem:[#allocation2 + $0x228] sm:$0xff] %v448
    %842 = vst [vmem:[#allocation2 + $0x230] sm:$0xff] %v585
    %843 = vst [vmem:[#allocation2 + $0x238] sm:$0xff] %v722
    %844 = vst [vmem:[#allocation2 + $0x240] sm:$0xff] %v451
    %845 = vst [vmem:[#allocation2 + $0x248] sm:$0xff] %v588
    %846 = vst [vmem:[#allocation2 + $0x250] sm:$0xff] %v725
    %847 = vst [vmem:[#allocation2 + $0x258] sm:$0xff] %v454
    %848 = vst [vmem:[#allocation2 + $0x260] sm:$0xff] %v591
    %849 = vst [vmem:[#allocation2 + $0x268] sm:$0xff] %v728
    %850 = vst [vmem:[#allocation2 + $0x270] sm:$0xff] %v457
    %851 = vst [vmem:[#allocation2 + $0x278] sm:$0xff] %v594
    %852 = vst [vmem:[#allocation2 + $0x280] sm:$0xff] %v731
    %853 = vst [vmem:[#allocation2 + $0x288] sm:$0xff] %v460
    %854 = vst [vmem:[#allocation2 + $0x290] sm:$0xff] %v597
    %855 = vst [vmem:[#allocation2 + $0x298] sm:$0xff] %v734
    %856 = vst [vmem:[#allocation2 + $0x2a0] sm:$0xff] %v463
    %857 = vst [vmem:[#allocation2 + $0x2a8] sm:$0xff] %v600
    %858 = vst [vmem:[#allocation2 + $0x2b0] sm:$0xff] %v737
    %859 = vst [vmem:[#allocation2 + $0x2b8] sm:$0xff] %v466
    %860 = vst [vmem:[#allocation2 + $0x2c0] sm:$0xff] %v603
    %861 = vst [vmem:[#allocation2 + $0x2c8] sm:$0xff] %v740
    %862 = vst [vmem:[#allocation2 + $0x2d0] sm:$0xff] %v469
    %863 = vst [vmem:[#allocation2 + $0x2d8] sm:$0xff] %v606
    %864 = vst [vmem:[#allocation2 + $0x2e0] sm:$0xff] %v743
    %865 = vst [vmem:[#allocation2 + $0x2e8] sm:$0xff] %v472
    %866 = vst [vmem:[#allocation2 + $0x2f0] sm:$0xff] %v609
    %867 = vst [vmem:[#allocation2 + $0x2f8] sm:$0xff] %v746
    %868 = vst [vmem:[#allocation2 + $0x300] sm:$0xff] %v475
    %869 = vst [vmem:[#allocation2 + $0x308] sm:$0xff] %v612
    %870 = vst [vmem:[#allocation2 + $0x310] sm:$0xff] %v749
    %871 = vst [vmem:[#allocation2 + $0x318] sm:$0xff] %v478
    %872 = vst [vmem:[#allocation2 + $0x320] sm:$0xff] %v615
    %873 = vst [vmem:[#allocation2 + $0x328] sm:$0xff] %v752
    %874 = vst [vmem:[#allocation2 + $0x330] sm:$0xff] %v481
    %875 = vst [vmem:[#allocation2 + $0x338] sm:$0xff] %v618
    %876 = vst [vmem:[#allocation2 + $0x340] sm:$0xff] %v755
    %877 = vst [vmem:[#allocation2 + $0x348] sm:$0xff] %v484
    %878 = vst [vmem:[#allocation2 + $0x350] sm:$0xff] %v621
    %879 = vst [vmem:[#allocation2 + $0x358] sm:$0xff] %v758
    %880 = vst [vmem:[#allocation2 + $0x360] sm:$0xff] %v487
    %881 = vst [vmem:[#allocation2 + $0x368] sm:$0xff] %v624
    %882 = vst [vmem:[#allocation2 + $0x370] sm:$0xff] %v761
    %883 = vst [vmem:[#allocation2 + $0x378] sm:$0xff] %v490
    %884 = vst [vmem:[#allocation2 + $0x380] sm:$0xff] %v627
    %885 = vst [vmem:[#allocation2 + $0x388] sm:$0xff] %v764
    %886 = vst [vmem:[#allocation2 + $0x390] sm:$0xff] %v493
    %887 = vst [vmem:[#allocation2 + $0x398] sm:$0xff] %v630
    %888 = vst [vmem:[#allocation2 + $0x3a0] sm:$0xff] %v767
    %889 = vst [vmem:[#allocation2 + $0x3a8] sm:$0xff] %v496
    %890 = vst [vmem:[#allocation2 + $0x3b0] sm:$0xff] %v633
    %891 = vst [vmem:[#allocation2 + $0x3b8] sm:$0xff] %v770
    %v892 = vld [vmem:[#allocation3 + $0x180] sm:$0xff]
    %v893 = vld [vmem:[#allocation3 + $0x188] sm:$0xff]
    %v894 = vld [vmem:[#allocation3 + $0x190] sm:$0xff]
    %v895 = vld [vmem:[#allocation3 + $0x198] sm:$0xff]
    %v896 = vld [vmem:[#allocation3 + $0x1a0] sm:$0xff]
    %v897 = vld [vmem:[#allocation3 + $0x1a8] sm:$0xff]
    %v898 = vld [vmem:[#allocation3 + $0x1b0] sm:$0xff]
    %v899 = vld [vmem:[#allocation3 + $0x1b8] sm:$0xff]
    %v900 = vld [vmem:[#allocation3 + $0x1c0] sm:$0xff]
    %v901 = vld [vmem:[#allocation3 + $0x1c8] sm:$0xff]
    %v902 = vld [vmem:[#allocation3 + $0x1d0] sm:$0xff]
    %v903 = vld [vmem:[#allocation3 + $0x1d8] sm:$0xff]
    %v904 = vld [vmem:[%s2] sm:$0x1]
    %vm905 = vcmask 261120
    %v907 = vsel %vm905, 0.0, 0
    %909 = vmatpush.msra.mxu0 0.0
    %910 = vmatpush.msra.mxu0 0.0
    %911 = vmatpush.msra.mxu0 0.0
    %912 = vmatpush.msra.mxu0 0.0
    %913 = vmatpush.msra.mxu0 0.0
    %914 = vmatpush.msra.mxu0 0.0
    %915 = vmatpush.msra.mxu0 0.0
    %916 = vmatpush.msra.mxu0 0.0
    %917 = vmatpush.msra.mxu0 0.0
    %918 = vmatpush.msra.mxu0 0.0
    %919 = vmatpush.msra.mxu0 0.0
    %920 = vmatpush.msra.mxu0 0.0
    %921 = vmatpush.msra.mxu0 %v901
    %922 = vmatpush.msra.mxu0 %v898
    %923 = vmatpush.msra.mxu0 %v895
    %924 = vmatpush.msra.mxu0 %v892
    %925 = vmatmul.f32.gmra.mxu0 %v907
    %v926 = vpop.f32.mrf.mxu0
    %v927 = vadd.f32 0.0, %v926
    %928 = vmatmul.f32.gmra.mxu0 %v907
    %v929 = vpop.f32.mrf.mxu0
    %v930 = vadd.f32 0.0, %v929
    %931 = vmatmul.f32.gmra.mxu0 %v907
    %v932 = vpop.f32.mrf.mxu0
    %v933 = vadd.f32 0.0, %v932
    %934 = vmatmul.f32.gmra.mxu0 %v907
    %v935 = vpop.f32.mrf.mxu0
    %v936 = vadd.f32 0.0, %v935
    %937 = vmatmul.f32.gmra.mxu0 %v907
    %v938 = vpop.f32.mrf.mxu0
    %v939 = vadd.f32 0.0, %v938
    %940 = vdwg.mxu0
    %941 = vmatpush.msra.mxu0 0.0
    %942 = vmatpush.msra.mxu0 0.0
    %943 = vmatpush.msra.mxu0 0.0
    %944 = vmatpush.msra.mxu0 0.0
    %945 = vmatpush.msra.mxu0 0.0
    %946 = vmatpush.msra.mxu0 0.0
    %947 = vmatpush.msra.mxu0 0.0
    %948 = vmatpush.msra.mxu0 0.0
    %949 = vmatpush.msra.mxu0 0.0
    %950 = vmatpush.msra.mxu0 0.0
    %951 = vmatpush.msra.mxu0 0.0
    %952 = vmatpush.msra.mxu0 0.0
    %953 = vmatpush.msra.mxu0 %v902
    %954 = vmatpush.msra.mxu0 %v899
    %955 = vmatpush.msra.mxu0 %v896
    %956 = vmatpush.msra.mxu0 %v893
    %957 = vmatmul.f32.gmra.mxu0 %v907
    %v958 = vpop.f32.mrf.mxu0
    %v959 = vadd.f32 0.0, %v958
    %960 = vmatmul.f32.gmra.mxu0 %v907
    %v961 = vpop.f32.mrf.mxu0
    %v962 = vadd.f32 0.0, %v961
    %963 = vmatmul.f32.gmra.mxu0 %v907
    %v964 = vpop.f32.mrf.mxu0
    %v965 = vadd.f32 0.0, %v964
    %966 = vmatmul.f32.gmra.mxu0 %v907
    %v967 = vpop.f32.mrf.mxu0
    %v968 = vadd.f32 0.0, %v967
    %969 = vmatmul.f32.gmra.mxu0 %v907
    %v970 = vpop.f32.mrf.mxu0
    %v971 = vadd.f32 0.0, %v970
    %972 = vdwg.mxu0
    %973 = vmatpush.msra.mxu0 0.0
    %974 = vmatpush.msra.mxu0 0.0
    %975 = vmatpush.msra.mxu0 0.0
    %976 = vmatpush.msra.mxu0 0.0
    %977 = vmatpush.msra.mxu0 0.0
    %978 = vmatpush.msra.mxu0 0.0
    %979 = vmatpush.msra.mxu0 0.0
    %980 = vmatpush.msra.mxu0 0.0
    %981 = vmatpush.msra.mxu0 0.0
    %982 = vmatpush.msra.mxu0 0.0
    %983 = vmatpush.msra.mxu0 0.0
    %984 = vmatpush.msra.mxu0 0.0
    %985 = vmatpush.msra.mxu0 %v903
    %986 = vmatpush.msra.mxu0 %v900
    %987 = vmatpush.msra.mxu0 %v897
    %988 = vmatpush.msra.mxu0 %v894
    %989 = vmatmul.f32.gmra.mxu0 %v907
    %v990 = vpop.f32.mrf.mxu0
    %v991 = vadd.f32 0.0, %v990
    %992 = vmatmul.f32.gmra.mxu0 %v907
    %v993 = vpop.f32.mrf.mxu0
    %v994 = vadd.f32 0.0, %v993
    %995 = vmatmul.f32.gmra.mxu0 %v907
    %v996 = vpop.f32.mrf.mxu0
    %v997 = vadd.f32 0.0, %v996
    %998 = vmatmul.f32.gmra.mxu0 %v907
    %v999 = vpop.f32.mrf.mxu0
    %v1000 = vadd.f32 0.0, %v999
    %1001 = vmatmul.f32.gmra.mxu0 %v907
    %v1002 = vpop.f32.mrf.mxu0
    %v1003 = vadd.f32 0.0, %v1002
    %1004 = vdwg.mxu0
    %v1005 = vld [vmem:[#allocation2] sm:$0xff]
    %v1006 = vld [vmem:[#allocation2 + $0x18] sm:$0xff]
    %v1007 = vld [vmem:[#allocation2 + $0x30] sm:$0xff]
    %v1008 = vld [vmem:[#allocation2 + $0x48] sm:$0xff]
    %v1009 = vld [vmem:[#allocation2 + $0x60] sm:$0xff]
    %v1010 = vadd.f32 %v1005, %v927
    %v1011 = vadd.f32 %v1006, %v930
    %v1012 = vadd.f32 %v1007, %v933
    %v1013 = vadd.f32 %v1008, %v936
    %v1014 = vadd.f32 %v1009, %v939
    %v1015 = vxor.u32 %v1010, 2147483648
    %v1016 = vxor.u32 %v1011, 2147483648
    %v1017 = vxor.u32 %v1012, 2147483648
    %v1018 = vxor.u32 %v1013, 2147483648
    %v1019 = vxor.u32 %v1014, 2147483648
    %v1020 = vmul.f32 %v1015, 1.442695
    %v1021 = vpow.pop %v1020
    %v1022 = vmul.f32 %v1016, 1.442695
    %v1023 = vpow.pop %v1022
    %v1024 = vmul.f32 %v1017, 1.442695
    %v1025 = vpow.pop %v1024
    %v1026 = vmul.f32 %v1018, 1.442695
    %v1027 = vpow.pop %v1026
    %v1028 = vmul.f32 %v1019, 1.442695
    %v1029 = vpow.pop %v1028
    %v1030 = vadd.f32 %v1021, 1.0
    %v1031 = vadd.f32 %v1023, 1.0
    %v1032 = vadd.f32 %v1025, 1.0
    %v1033 = vadd.f32 %v1027, 1.0
    %v1034 = vadd.f32 %v1029, 1.0
    %v1035 = vrcp.pop %v1030
    %v1036 = vmul.f32 %v1030, %v1035
    %v1037 = vsub.f32 1.0, %v1036
    %v1038 = vmul.f32 %v1035, %v1037
    %v1039 = vadd.f32 %v1035, %v1038
    %vm1040 = vweird.f32 %v1030
    %vm1041 = vweird.f32 %v1035
    %vm1042 = vmor %vm1040, %vm1041
    %v1043 = vsel %vm1042, %v1035, %v1039
    %v1044 = vand.u32 2147483647, %v1030
    %vm1045 = vcmp.eq.f32.partialorder %v1044, 8.507059e+37
    %v1046 = vand.u32 %v1030, 2147483648
    %v1047 = vor.u32 1.1754944e-38, %v1046
    %v1048 = vsel %vm1045, %v1047, %v1043
    %v1049 = vmul.f32 1.0, %v1048
    %v1050 = vrcp.pop %v1031
    %v1051 = vmul.f32 %v1031, %v1050
    %v1052 = vsub.f32 1.0, %v1051
    %v1053 = vmul.f32 %v1050, %v1052
    %v1054 = vadd.f32 %v1050, %v1053
    %vm1055 = vweird.f32 %v1031
    %vm1056 = vweird.f32 %v1050
    %vm1057 = vmor %vm1055, %vm1056
    %v1058 = vsel %vm1057, %v1050, %v1054
    %v1059 = vand.u32 2147483647, %v1031
    %vm1060 = vcmp.eq.f32.partialorder %v1059, 8.507059e+37
    %v1061 = vand.u32 %v1031, 2147483648
    %v1062 = vor.u32 1.1754944e-38, %v1061
    %v1063 = vsel %vm1060, %v1062, %v1058
    %v1064 = vmul.f32 1.0, %v1063
    %v1065 = vrcp.pop %v1032
    %v1066 = vmul.f32 %v1032, %v1065
    %v1067 = vsub.f32 1.0, %v1066
    %v1068 = vmul.f32 %v1065, %v1067
    %v1069 = vadd.f32 %v1065, %v1068
    %vm1070 = vweird.f32 %v1032
    %vm1071 = vweird.f32 %v1065
    %vm1072 = vmor %vm1070, %vm1071
    %v1073 = vsel %vm1072, %v1065, %v1069
    %v1074 = vand.u32 2147483647, %v1032
    %vm1075 = vcmp.eq.f32.partialorder %v1074, 8.507059e+37
    %v1076 = vand.u32 %v1032, 2147483648
    %v1077 = vor.u32 1.1754944e-38, %v1076
    %v1078 = vsel %vm1075, %v1077, %v1073
    %v1079 = vmul.f32 1.0, %v1078
    %v1080 = vrcp.pop %v1033
    %v1081 = vmul.f32 %v1033, %v1080
    %v1082 = vsub.f32 1.0, %v1081
    %v1083 = vmul.f32 %v1080, %v1082
    %v1084 = vadd.f32 %v1080, %v1083
    %vm1085 = vweird.f32 %v1033
    %vm1086 = vweird.f32 %v1080
    %vm1087 = vmor %vm1085, %vm1086
    %v1088 = vsel %vm1087, %v1080, %v1084
    %v1089 = vand.u32 2147483647, %v1033
    %vm1090 = vcmp.eq.f32.partialorder %v1089, 8.507059e+37
    %v1091 = vand.u32 %v1033, 2147483648
    %v1092 = vor.u32 1.1754944e-38, %v1091
    %v1093 = vsel %vm1090, %v1092, %v1088
    %v1094 = vmul.f32 1.0, %v1093
    %v1095 = vrcp.pop %v1034
    %v1096 = vmul.f32 %v1034, %v1095
    %v1097 = vsub.f32 1.0, %v1096
    %v1098 = vmul.f32 %v1095, %v1097
    %v1099 = vadd.f32 %v1095, %v1098
    %vm1100 = vweird.f32 %v1034
    %vm1101 = vweird.f32 %v1095
    %vm1102 = vmor %vm1100, %vm1101
    %v1103 = vsel %vm1102, %v1095, %v1099
    %v1104 = vand.u32 2147483647, %v1034
    %vm1105 = vcmp.eq.f32.partialorder %v1104, 8.507059e+37
    %v1106 = vand.u32 %v1034, 2147483648
    %v1107 = vor.u32 1.1754944e-38, %v1106
    %v1108 = vsel %vm1105, %v1107, %v1103
    %v1109 = vmul.f32 1.0, %v1108
    %v1110 = vld [vmem:[#allocation2 + $0x8] sm:$0xff]
    %v1111 = vld [vmem:[#allocation2 + $0x20] sm:$0xff]
    %v1112 = vld [vmem:[#allocation2 + $0x38] sm:$0xff]
    %v1113 = vld [vmem:[#allocation2 + $0x50] sm:$0xff]
    %v1114 = vld [vmem:[#allocation2 + $0x68] sm:$0xff]
    %v1115 = vadd.f32 %v1110, %v959
    %v1116 = vadd.f32 %v1111, %v962
    %v1117 = vadd.f32 %v1112, %v965
    %v1118 = vadd.f32 %v1113, %v968
    %v1119 = vadd.f32 %v1114, %v971
    %v1120 = vxor.u32 %v1115, 2147483648
    %v1121 = vxor.u32 %v1116, 2147483648
    %v1122 = vxor.u32 %v1117, 2147483648
    %v1123 = vxor.u32 %v1118, 2147483648
    %v1124 = vxor.u32 %v1119, 2147483648
    %v1125 = vmul.f32 %v1120, 1.442695
    %v1126 = vpow.pop %v1125
    %v1127 = vmul.f32 %v1121, 1.442695
    %v1128 = vpow.pop %v1127
    %v1129 = vmul.f32 %v1122, 1.442695
    %v1130 = vpow.pop %v1129
    %v1131 = vmul.f32 %v1123, 1.442695
    %v1132 = vpow.pop %v1131
    %v1133 = vmul.f32 %v1124, 1.442695
    %v1134 = vpow.pop %v1133
    %v1135 = vadd.f32 %v1126, 1.0
    %v1136 = vadd.f32 %v1128, 1.0
    %v1137 = vadd.f32 %v1130, 1.0
    %v1138 = vadd.f32 %v1132, 1.0
    %v1139 = vadd.f32 %v1134, 1.0
    %v1140 = vrcp.pop %v1135
    %v1141 = vmul.f32 %v1135, %v1140
    %v1142 = vsub.f32 1.0, %v1141
    %v1143 = vmul.f32 %v1140, %v1142
    %v1144 = vadd.f32 %v1140, %v1143
    %vm1145 = vweird.f32 %v1135
    %vm1146 = vweird.f32 %v1140
    %vm1147 = vmor %vm1145, %vm1146
    %v1148 = vsel %vm1147, %v1140, %v1144
    %v1149 = vand.u32 2147483647, %v1135
    %vm1150 = vcmp.eq.f32.partialorder %v1149, 8.507059e+37
    %v1151 = vand.u32 %v1135, 2147483648
    %v1152 = vor.u32 1.1754944e-38, %v1151
    %v1153 = vsel %vm1150, %v1152, %v1148
    %v1154 = vmul.f32 1.0, %v1153
    %v1155 = vrcp.pop %v1136
    %v1156 = vmul.f32 %v1136, %v1155
    %v1157 = vsub.f32 1.0, %v1156
    %v1158 = vmul.f32 %v1155, %v1157
    %v1159 = vadd.f32 %v1155, %v1158
    %vm1160 = vweird.f32 %v1136
    %vm1161 = vweird.f32 %v1155
    %vm1162 = vmor %vm1160, %vm1161
    %v1163 = vsel %vm1162, %v1155, %v1159
    %v1164 = vand.u32 2147483647, %v1136
    %vm1165 = vcmp.eq.f32.partialorder %v1164, 8.507059e+37
    %v1166 = vand.u32 %v1136, 2147483648
    %v1167 = vor.u32 1.1754944e-38, %v1166
    %v1168 = vsel %vm1165, %v1167, %v1163
    %v1169 = vmul.f32 1.0, %v1168
    %v1170 = vrcp.pop %v1137
    %v1171 = vmul.f32 %v1137, %v1170
    %v1172 = vsub.f32 1.0, %v1171
    %v1173 = vmul.f32 %v1170, %v1172
    %v1174 = vadd.f32 %v1170, %v1173
    %vm1175 = vweird.f32 %v1137
    %vm1176 = vweird.f32 %v1170
    %vm1177 = vmor %vm1175, %vm1176
    %v1178 = vsel %vm1177, %v1170, %v1174
    %v1179 = vand.u32 2147483647, %v1137
    %vm1180 = vcmp.eq.f32.partialorder %v1179, 8.507059e+37
    %v1181 = vand.u32 %v1137, 2147483648
    %v1182 = vor.u32 1.1754944e-38, %v1181
    %v1183 = vsel %vm1180, %v1182, %v1178
    %v1184 = vmul.f32 1.0, %v1183
    %v1185 = vrcp.pop %v1138
    %v1186 = vmul.f32 %v1138, %v1185
    %v1187 = vsub.f32 1.0, %v1186
    %v1188 = vmul.f32 %v1185, %v1187
    %v1189 = vadd.f32 %v1185, %v1188
    %vm1190 = vweird.f32 %v1138
    %vm1191 = vweird.f32 %v1185
    %vm1192 = vmor %vm1190, %vm1191
    %v1193 = vsel %vm1192, %v1185, %v1189
    %v1194 = vand.u32 2147483647, %v1138
    %vm1195 = vcmp.eq.f32.partialorder %v1194, 8.507059e+37
    %v1196 = vand.u32 %v1138, 2147483648
    %v1197 = vor.u32 1.1754944e-38, %v1196
    %v1198 = vsel %vm1195, %v1197, %v1193
    %v1199 = vmul.f32 1.0, %v1198
    %v1200 = vrcp.pop %v1139
    %v1201 = vmul.f32 %v1139, %v1200
    %v1202 = vsub.f32 1.0, %v1201
    %v1203 = vmul.f32 %v1200, %v1202
    %v1204 = vadd.f32 %v1200, %v1203
    %vm1205 = vweird.f32 %v1139
    %vm1206 = vweird.f32 %v1200
    %vm1207 = vmor %vm1205, %vm1206
    %v1208 = vsel %vm1207, %v1200, %v1204
    %v1209 = vand.u32 2147483647, %v1139
    %vm1210 = vcmp.eq.f32.partialorder %v1209, 8.507059e+37
    %v1211 = vand.u32 %v1139, 2147483648
    %v1212 = vor.u32 1.1754944e-38, %v1211
    %v1213 = vsel %vm1210, %v1212, %v1208
    %v1214 = vmul.f32 1.0, %v1213
    %v1215 = vld [vmem:[#allocation2 + $0x10] sm:$0xff]
    %v1216 = vld [vmem:[#allocation2 + $0x28] sm:$0xff]
    %v1217 = vld [vmem:[#allocation2 + $0x40] sm:$0xff]
    %v1218 = vld [vmem:[#allocation2 + $0x58] sm:$0xff]
    %v1219 = vld [vmem:[#allocation2 + $0x70] sm:$0xff]
    %v1220 = vperm.slane %v904, 0
    %v1221 = vadd.f32 %v991, %v1220
    %v1222 = vadd.f32 %v994, %v1220
    %v1223 = vadd.f32 %v997, %v1220
    %v1224 = vadd.f32 %v1000, %v1220
    %v1225 = vadd.f32 %v1003, %v1220
    %v1226 = vmul.f32 %v1049, %v1221
    %v1227 = vmul.f32 %v1064, %v1222
    %v1228 = vmul.f32 %v1079, %v1223
    %v1229 = vmul.f32 %v1094, %v1224
    %v1230 = vmul.f32 %v1109, %v1225
    %v1231 = vadd.f32 %v1215, %v1226
    %v1232 = vadd.f32 %v1216, %v1227
    %v1233 = vadd.f32 %v1217, %v1228
    %v1234 = vadd.f32 %v1218, %v1229
    %v1235 = vadd.f32 %v1219, %v1230
    %v1236 = vtanh.pop %v1231
    %v1237 = vtanh.pop %v1232
    %v1238 = vtanh.pop %v1233
    %v1239 = vtanh.pop %v1234
    %v1240 = vtanh.pop %v1235
    %v1241 = vsub.f32 0.0, %v1236
    %v1242 = vsub.f32 0.0, %v1237
    %v1243 = vsub.f32 0.0, %v1238
    %v1244 = vsub.f32 0.0, %v1239
    %v1245 = vsub.f32 0.0, %v1240
    %v1246 = vmul.f32 %v1154, %v1241
    %v1247 = vmul.f32 %v1169, %v1242
    %v1248 = vmul.f32 %v1184, %v1243
    %v1249 = vmul.f32 %v1199, %v1244
    %v1250 = vmul.f32 %v1214, %v1245
    %v1251 = vadd.f32 %v1236, %v1246
    %v1252 = vadd.f32 %v1237, %v1247
    %v1253 = vadd.f32 %v1238, %v1248
    %v1254 = vadd.f32 %v1239, %v1249
    %v1255 = vadd.f32 %v1240, %v1250
    %v1257 = vsel %vm905, %v1251, 0
    %v1260 = vsel %vm905, %v1252, 0
    %v1263 = vsel %vm905, %v1253, 0
    %v1266 = vsel %vm905, %v1254, 0
    %v1269 = vsel %vm905, %v1255, 0
    %1271 = vmatpush.msra.mxu0 0.0
    %1272 = vmatpush.msra.mxu0 0.0
    %1273 = vmatpush.msra.mxu0 0.0
    %1274 = vmatpush.msra.mxu0 0.0
    %1275 = vmatpush.msra.mxu0 0.0
    %1276 = vmatpush.msra.mxu0 0.0
    %1277 = vmatpush.msra.mxu0 0.0
    %1278 = vmatpush.msra.mxu0 0.0
    %1279 = vmatpush.msra.mxu0 0.0
    %1280 = vmatpush.msra.mxu0 0.0
    %1281 = vmatpush.msra.mxu0 0.0
    %1282 = vmatpush.msra.mxu0 0.0
    %1283 = vmatpush.msra.mxu0 %v901
    %1284 = vmatpush.msra.mxu0 %v898
    %1285 = vmatpush.msra.mxu0 %v895
    %1286 = vmatpush.msra.mxu0 %v892
    %1287 = vmatmul.f32.gmra.mxu0 %v1257
    %v1288 = vpop.f32.mrf.mxu0
    %v1289 = vadd.f32 0.0, %v1288
    %1290 = vmatmul.f32.gmra.mxu0 %v1260
    %v1291 = vpop.f32.mrf.mxu0
    %v1292 = vadd.f32 0.0, %v1291
    %1293 = vmatmul.f32.gmra.mxu0 %v1263
    %v1294 = vpop.f32.mrf.mxu0
    %v1295 = vadd.f32 0.0, %v1294
    %1296 = vmatmul.f32.gmra.mxu0 %v1266
    %v1297 = vpop.f32.mrf.mxu0
    %v1298 = vadd.f32 0.0, %v1297
    %1299 = vmatmul.f32.gmra.mxu0 %v1269
    %v1300 = vpop.f32.mrf.mxu0
    %v1301 = vadd.f32 0.0, %v1300
    %1302 = vdwg.mxu0
    %1303 = vmatpush.msra.mxu0 0.0
    %1304 = vmatpush.msra.mxu0 0.0
    %1305 = vmatpush.msra.mxu0 0.0
    %1306 = vmatpush.msra.mxu0 0.0
    %1307 = vmatpush.msra.mxu0 0.0
    %1308 = vmatpush.msra.mxu0 0.0
    %1309 = vmatpush.msra.mxu0 0.0
    %1310 = vmatpush.msra.mxu0 0.0
    %1311 = vmatpush.msra.mxu0 0.0
    %1312 = vmatpush.msra.mxu0 0.0
    %1313 = vmatpush.msra.mxu0 0.0
    %1314 = vmatpush.msra.mxu0 0.0
    %1315 = vmatpush.msra.mxu0 %v902
    %1316 = vmatpush.msra.mxu0 %v899
    %1317 = vmatpush.msra.mxu0 %v896
    %1318 = vmatpush.msra.mxu0 %v893
    %1319 = vmatmul.f32.gmra.mxu0 %v1257
    %v1320 = vpop.f32.mrf.mxu0
    %v1321 = vadd.f32 0.0, %v1320
    %1322 = vmatmul.f32.gmra.mxu0 %v1260
    %v1323 = vpop.f32.mrf.mxu0
    %v1324 = vadd.f32 0.0, %v1323
    %1325 = vmatmul.f32.gmra.mxu0 %v1263
    %v1326 = vpop.f32.mrf.mxu0
    %v1327 = vadd.f32 0.0, %v1326
    %1328 = vmatmul.f32.gmra.mxu0 %v1266
    %v1329 = vpop.f32.mrf.mxu0
    %v1330 = vadd.f32 0.0, %v1329
    %1331 = vmatmul.f32.gmra.mxu0 %v1269
    %v1332 = vpop.f32.mrf.mxu0
    %v1333 = vadd.f32 0.0, %v1332
    %1334 = vdwg.mxu0
    %1335 = vmatpush.msra.mxu0 0.0
    %1336 = vmatpush.msra.mxu0 0.0
    %1337 = vmatpush.msra.mxu0 0.0
    %1338 = vmatpush.msra.mxu0 0.0
    %1339 = vmatpush.msra.mxu0 0.0
    %1340 = vmatpush.msra.mxu0 0.0
    %1341 = vmatpush.msra.mxu0 0.0
    %1342 = vmatpush.msra.mxu0 0.0
    %1343 = vmatpush.msra.mxu0 0.0
    %1344 = vmatpush.msra.mxu0 0.0
    %1345 = vmatpush.msra.mxu0 0.0
    %1346 = vmatpush.msra.mxu0 0.0
    %1347 = vmatpush.msra.mxu0 %v903
    %1348 = vmatpush.msra.mxu0 %v900
    %1349 = vmatpush.msra.mxu0 %v897
    %1350 = vmatpush.msra.mxu0 %v894
    %1351 = vmatmul.f32.gmra.mxu0 %v1257
    %v1352 = vpop.f32.mrf.mxu0
    %v1353 = vadd.f32 0.0, %v1352
    %1354 = vmatmul.f32.gmra.mxu0 %v1260
    %v1355 = vpop.f32.mrf.mxu0
    %v1356 = vadd.f32 0.0, %v1355
    %1357 = vmatmul.f32.gmra.mxu0 %v1263
    %v1358 = vpop.f32.mrf.mxu0
    %v1359 = vadd.f32 0.0, %v1358
    %1360 = vmatmul.f32.gmra.mxu0 %v1266
    %v1361 = vpop.f32.mrf.mxu0
    %v1362 = vadd.f32 0.0, %v1361
    %1363 = vmatmul.f32.gmra.mxu0 %v1269
    %v1364 = vpop.f32.mrf.mxu0
    %v1365 = vadd.f32 0.0, %v1364
    %1366 = vdwg.mxu0
    %v1367 = vld [vmem:[#allocation2 + $0x78] sm:$0xff]
    %v1368 = vld [vmem:[#allocation2 + $0x90] sm:$0xff]
    %v1369 = vld [vmem:[#allocation2 + $0xa8] sm:$0xff]
    %v1370 = vld [vmem:[#allocation2 + $0xc0] sm:$0xff]
    %v1371 = vld [vmem:[#allocation2 + $0xd8] sm:$0xff]
    %v1372 = vadd.f32 %v1367, %v1289
    %v1373 = vadd.f32 %v1368, %v1292
    %v1374 = vadd.f32 %v1369, %v1295
    %v1375 = vadd.f32 %v1370, %v1298
    %v1376 = vadd.f32 %v1371, %v1301
    %v1377 = vxor.u32 %v1372, 2147483648
    %v1378 = vxor.u32 %v1373, 2147483648
    %v1379 = vxor.u32 %v1374, 2147483648
    %v1380 = vxor.u32 %v1375, 2147483648
    %v1381 = vxor.u32 %v1376, 2147483648
    %v1382 = vmul.f32 %v1377, 1.442695
    %v1383 = vpow.pop %v1382
    %v1384 = vmul.f32 %v1378, 1.442695
    %v1385 = vpow.pop %v1384
    %v1386 = vmul.f32 %v1379, 1.442695
    %v1387 = vpow.pop %v1386
    %v1388 = vmul.f32 %v1380, 1.442695
    %v1389 = vpow.pop %v1388
    %v1390 = vmul.f32 %v1381, 1.442695
    %v1391 = vpow.pop %v1390
    %v1392 = vadd.f32 %v1383, 1.0
    %v1393 = vadd.f32 %v1385, 1.0
    %v1394 = vadd.f32 %v1387, 1.0
    %v1395 = vadd.f32 %v1389, 1.0
    %v1396 = vadd.f32 %v1391, 1.0
    %v1397 = vrcp.pop %v1392
    %v1398 = vmul.f32 %v1392, %v1397
    %v1399 = vsub.f32 1.0, %v1398
    %v1400 = vmul.f32 %v1397, %v1399
    %v1401 = vadd.f32 %v1397, %v1400
    %vm1402 = vweird.f32 %v1392
    %vm1403 = vweird.f32 %v1397
    %vm1404 = vmor %vm1402, %vm1403
    %v1405 = vsel %vm1404, %v1397, %v1401
    %v1406 = vand.u32 2147483647, %v1392
    %vm1407 = vcmp.eq.f32.partialorder %v1406, 8.507059e+37
    %v1408 = vand.u32 %v1392, 2147483648
    %v1409 = vor.u32 1.1754944e-38, %v1408
    %v1410 = vsel %vm1407, %v1409, %v1405
    %v1411 = vmul.f32 1.0, %v1410
    %v1412 = vrcp.pop %v1393
    %v1413 = vmul.f32 %v1393, %v1412
    %v1414 = vsub.f32 1.0, %v1413
    %v1415 = vmul.f32 %v1412, %v1414
    %v1416 = vadd.f32 %v1412, %v1415
    %vm1417 = vweird.f32 %v1393
    %vm1418 = vweird.f32 %v1412
    %vm1419 = vmor %vm1417, %vm1418
    %v1420 = vsel %vm1419, %v1412, %v1416
    %v1421 = vand.u32 2147483647, %v1393
    %vm1422 = vcmp.eq.f32.partialorder %v1421, 8.507059e+37
    %v1423 = vand.u32 %v1393, 2147483648
    %v1424 = vor.u32 1.1754944e-38, %v1423
    %v1425 = vsel %vm1422, %v1424, %v1420
    %v1426 = vmul.f32 1.0, %v1425
    %v1427 = vrcp.pop %v1394
    %v1428 = vmul.f32 %v1394, %v1427
    %v1429 = vsub.f32 1.0, %v1428
    %v1430 = vmul.f32 %v1427, %v1429
    %v1431 = vadd.f32 %v1427, %v1430
    %vm1432 = vweird.f32 %v1394
    %vm1433 = vweird.f32 %v1427
    %vm1434 = vmor %vm1432, %vm1433
    %v1435 = vsel %vm1434, %v1427, %v1431
    %v1436 = vand.u32 2147483647, %v1394
    %vm1437 = vcmp.eq.f32.partialorder %v1436, 8.507059e+37
    %v1438 = vand.u32 %v1394, 2147483648
    %v1439 = vor.u32 1.1754944e-38, %v1438
    %v1440 = vsel %vm1437, %v1439, %v1435
    %v1441 = vmul.f32 1.0, %v1440
    %v1442 = vrcp.pop %v1395
    %v1443 = vmul.f32 %v1395, %v1442
    %v1444 = vsub.f32 1.0, %v1443
    %v1445 = vmul.f32 %v1442, %v1444
    %v1446 = vadd.f32 %v1442, %v1445
    %vm1447 = vweird.f32 %v1395
    %vm1448 = vweird.f32 %v1442
    %vm1449 = vmor %vm1447, %vm1448
    %v1450 = vsel %vm1449, %v1442, %v1446
    %v1451 = vand.u32 2147483647, %v1395
    %vm1452 = vcmp.eq.f32.partialorder %v1451, 8.507059e+37
    %v1453 = vand.u32 %v1395, 2147483648
    %v1454 = vor.u32 1.1754944e-38, %v1453
    %v1455 = vsel %vm1452, %v1454, %v1450
    %v1456 = vmul.f32 1.0, %v1455
    %v1457 = vrcp.pop %v1396
    %v1458 = vmul.f32 %v1396, %v1457
    %v1459 = vsub.f32 1.0, %v1458
    %v1460 = vmul.f32 %v1457, %v1459
    %v1461 = vadd.f32 %v1457, %v1460
    %vm1462 = vweird.f32 %v1396
    %vm1463 = vweird.f32 %v1457
    %vm1464 = vmor %vm1462, %vm1463
    %v1465 = vsel %vm1464, %v1457, %v1461
    %v1466 = vand.u32 2147483647, %v1396
    %vm1467 = vcmp.eq.f32.partialorder %v1466, 8.507059e+37
    %v1468 = vand.u32 %v1396, 2147483648
    %v1469 = vor.u32 1.1754944e-38, %v1468
    %v1470 = vsel %vm1467, %v1469, %v1465
    %v1471 = vmul.f32 1.0, %v1470
    %v1472 = vld [vmem:[#allocation2 + $0x80] sm:$0xff]
    %v1473 = vld [vmem:[#allocation2 + $0x98] sm:$0xff]
    %v1474 = vld [vmem:[#allocation2 + $0xb0] sm:$0xff]
    %v1475 = vld [vmem:[#allocation2 + $0xc8] sm:$0xff]
    %v1476 = vld [vmem:[#allocation2 + $0xe0] sm:$0xff]
    %v1477 = vadd.f32 %v1472, %v1321
    %v1478 = vadd.f32 %v1473, %v1324
    %v1479 = vadd.f32 %v1474, %v1327
    %v1480 = vadd.f32 %v1475, %v1330
    %v1481 = vadd.f32 %v1476, %v1333
    %v1482 = vxor.u32 %v1477, 2147483648
    %v1483 = vxor.u32 %v1478, 2147483648
    %v1484 = vxor.u32 %v1479, 2147483648
    %v1485 = vxor.u32 %v1480, 2147483648
    %v1486 = vxor.u32 %v1481, 2147483648
    %v1487 = vmul.f32 %v1482, 1.442695
    %v1488 = vpow.pop %v1487
    %v1489 = vmul.f32 %v1483, 1.442695
    %v1490 = vpow.pop %v1489
    %v1491 = vmul.f32 %v1484, 1.442695
    %v1492 = vpow.pop %v1491
    %v1493 = vmul.f32 %v1485, 1.442695
    %v1494 = vpow.pop %v1493
    %v1495 = vmul.f32 %v1486, 1.442695
    %v1496 = vpow.pop %v1495
    %v1497 = vadd.f32 %v1488, 1.0
    %v1498 = vadd.f32 %v1490, 1.0
    %v1499 = vadd.f32 %v1492, 1.0
    %v1500 = vadd.f32 %v1494, 1.0
    %v1501 = vadd.f32 %v1496, 1.0
    %v1502 = vrcp.pop %v1497
    %v1503 = vmul.f32 %v1497, %v1502
    %v1504 = vsub.f32 1.0, %v1503
    %v1505 = vmul.f32 %v1502, %v1504
    %v1506 = vadd.f32 %v1502, %v1505
    %vm1507 = vweird.f32 %v1497
    %vm1508 = vweird.f32 %v1502
    %vm1509 = vmor %vm1507, %vm1508
    %v1510 = vsel %vm1509, %v1502, %v1506
    %v1511 = vand.u32 2147483647, %v1497
    %vm1512 = vcmp.eq.f32.partialorder %v1511, 8.507059e+37
    %v1513 = vand.u32 %v1497, 2147483648
    %v1514 = vor.u32 1.1754944e-38, %v1513
    %v1515 = vsel %vm1512, %v1514, %v1510
    %v1516 = vmul.f32 1.0, %v1515
    %v1517 = vrcp.pop %v1498
    %v1518 = vmul.f32 %v1498, %v1517
    %v1519 = vsub.f32 1.0, %v1518
    %v1520 = vmul.f32 %v1517, %v1519
    %v1521 = vadd.f32 %v1517, %v1520
    %vm1522 = vweird.f32 %v1498
    %vm1523 = vweird.f32 %v1517
    %vm1524 = vmor %vm1522, %vm1523
    %v1525 = vsel %vm1524, %v1517, %v1521
    %v1526 = vand.u32 2147483647, %v1498
    %vm1527 = vcmp.eq.f32.partialorder %v1526, 8.507059e+37
    %v1528 = vand.u32 %v1498, 2147483648
    %v1529 = vor.u32 1.1754944e-38, %v1528
    %v1530 = vsel %vm1527, %v1529, %v1525
    %v1531 = vmul.f32 1.0, %v1530
    %v1532 = vrcp.pop %v1499
    %v1533 = vmul.f32 %v1499, %v1532
    %v1534 = vsub.f32 1.0, %v1533
    %v1535 = vmul.f32 %v1532, %v1534
    %v1536 = vadd.f32 %v1532, %v1535
    %vm1537 = vweird.f32 %v1499
    %vm1538 = vweird.f32 %v1532
    %vm1539 = vmor %vm1537, %vm1538
    %v1540 = vsel %vm1539, %v1532, %v1536
    %v1541 = vand.u32 2147483647, %v1499
    %vm1542 = vcmp.eq.f32.partialorder %v1541, 8.507059e+37
    %v1543 = vand.u32 %v1499, 2147483648
    %v1544 = vor.u32 1.1754944e-38, %v1543
    %v1545 = vsel %vm1542, %v1544, %v1540
    %v1546 = vmul.f32 1.0, %v1545
    %v1547 = vrcp.pop %v1500
    %v1548 = vmul.f32 %v1500, %v1547
    %v1549 = vsub.f32 1.0, %v1548
    %v1550 = vmul.f32 %v1547, %v1549
    %v1551 = vadd.f32 %v1547, %v1550
    %vm1552 = vweird.f32 %v1500
    %vm1553 = vweird.f32 %v1547
    %vm1554 = vmor %vm1552, %vm1553
    %v1555 = vsel %vm1554, %v1547, %v1551
    %v1556 = vand.u32 2147483647, %v1500
    %vm1557 = vcmp.eq.f32.partialorder %v1556, 8.507059e+37
    %v1558 = vand.u32 %v1500, 2147483648
    %v1559 = vor.u32 1.1754944e-38, %v1558
    %v1560 = vsel %vm1557, %v1559, %v1555
    %v1561 = vmul.f32 1.0, %v1560
    %v1562 = vrcp.pop %v1501
    %v1563 = vmul.f32 %v1501, %v1562
    %v1564 = vsub.f32 1.0, %v1563
    %v1565 = vmul.f32 %v1562, %v1564
    %v1566 = vadd.f32 %v1562, %v1565
    %vm1567 = vweird.f32 %v1501
    %vm1568 = vweird.f32 %v1562
    %vm1569 = vmor %vm1567, %vm1568
    %v1570 = vsel %vm1569, %v1562, %v1566
    %v1571 = vand.u32 2147483647, %v1501
    %vm1572 = vcmp.eq.f32.partialorder %v1571, 8.507059e+37
    %v1573 = vand.u32 %v1501, 2147483648
    %v1574 = vor.u32 1.1754944e-38, %v1573
    %v1575 = vsel %vm1572, %v1574, %v1570
    %v1576 = vmul.f32 1.0, %v1575
    %v1577 = vld [vmem:[#allocation2 + $0x88] sm:$0xff]
    %v1578 = vld [vmem:[#allocation2 + $0xa0] sm:$0xff]
    %v1579 = vld [vmem:[#allocation2 + $0xb8] sm:$0xff]
    %v1580 = vld [vmem:[#allocation2 + $0xd0] sm:$0xff]
    %v1581 = vld [vmem:[#allocation2 + $0xe8] sm:$0xff]
    %v1582 = vadd.f32 %v1353, %v1220
    %v1583 = vadd.f32 %v1356, %v1220
    %v1584 = vadd.f32 %v1359, %v1220
    %v1585 = vadd.f32 %v1362, %v1220
    %v1586 = vadd.f32 %v1365, %v1220
    %v1587 = vmul.f32 %v1411, %v1582
    %v1588 = vmul.f32 %v1426, %v1583
    %v1589 = vmul.f32 %v1441, %v1584
    %v1590 = vmul.f32 %v1456, %v1585
    %v1591 = vmul.f32 %v1471, %v1586
    %v1592 = vadd.f32 %v1577, %v1587
    %v1593 = vadd.f32 %v1578, %v1588
    %v1594 = vadd.f32 %v1579, %v1589
    %v1595 = vadd.f32 %v1580, %v1590
    %v1596 = vadd.f32 %v1581, %v1591
    %v1597 = vtanh.pop %v1592
    %v1598 = vtanh.pop %v1593
    %v1599 = vtanh.pop %v1594
    %v1600 = vtanh.pop %v1595
    %v1601 = vtanh.pop %v1596
    %v1602 = vsub.f32 %v1251, %v1597
    %v1603 = vsub.f32 %v1252, %v1598
    %v1604 = vsub.f32 %v1253, %v1599
    %v1605 = vsub.f32 %v1254, %v1600
    %v1606 = vsub.f32 %v1255, %v1601
    %v1607 = vmul.f32 %v1516, %v1602
    %v1608 = vmul.f32 %v1531, %v1603
    %v1609 = vmul.f32 %v1546, %v1604
    %v1610 = vmul.f32 %v1561, %v1605
    %v1611 = vmul.f32 %v1576, %v1606
    %v1612 = vadd.f32 %v1597, %v1607
    %v1613 = vadd.f32 %v1598, %v1608
    %v1614 = vadd.f32 %v1599, %v1609
    %v1615 = vadd.f32 %v1600, %v1610
    %v1616 = vadd.f32 %v1601, %v1611
    %v1618 = vsel %vm905, %v1612, 0
    %v1621 = vsel %vm905, %v1613, 0
    %v1624 = vsel %vm905, %v1614, 0
    %v1627 = vsel %vm905, %v1615, 0
    %v1630 = vsel %vm905, %v1616, 0
    %1632 = vmatpush.msra.mxu0 0.0
    %1633 = vmatpush.msra.mxu0 0.0
    %1634 = vmatpush.msra.mxu0 0.0
    %1635 = vmatpush.msra.mxu0 0.0
    %1636 = vmatpush.msra.mxu0 0.0
    %1637 = vmatpush.msra.mxu0 0.0
    %1638 = vmatpush.msra.mxu0 0.0
    %1639 = vmatpush.msra.mxu0 0.0
    %1640 = vmatpush.msra.mxu0 0.0
    %1641 = vmatpush.msra.mxu0 0.0
    %1642 = vmatpush.msra.mxu0 0.0
    %1643 = vmatpush.msra.mxu0 0.0
    %1644 = vmatpush.msra.mxu0 %v901
    %1645 = vmatpush.msra.mxu0 %v898
    %1646 = vmatpush.msra.mxu0 %v895
    %1647 = vmatpush.msra.mxu0 %v892
    %1648 = vmatmul.f32.gmra.mxu0 %v1618
    %v1649 = vpop.f32.mrf.mxu0
    %v1650 = vadd.f32 0.0, %v1649
    %1651 = vmatmul.f32.gmra.mxu0 %v1621
    %v1652 = vpop.f32.mrf.mxu0
    %v1653 = vadd.f32 0.0, %v1652
    %1654 = vmatmul.f32.gmra.mxu0 %v1624
    %v1655 = vpop.f32.mrf.mxu0
    %v1656 = vadd.f32 0.0, %v1655
    %1657 = vmatmul.f32.gmra.mxu0 %v1627
    %v1658 = vpop.f32.mrf.mxu0
    %v1659 = vadd.f32 0.0, %v1658
    %1660 = vmatmul.f32.gmra.mxu0 %v1630
    %v1661 = vpop.f32.mrf.mxu0
    %v1662 = vadd.f32 0.0, %v1661
    %1663 = vdwg.mxu0
    %1664 = vmatpush.msra.mxu0 0.0
    %1665 = vmatpush.msra.mxu0 0.0
    %1666 = vmatpush.msra.mxu0 0.0
    %1667 = vmatpush.msra.mxu0 0.0
    %1668 = vmatpush.msra.mxu0 0.0
    %1669 = vmatpush.msra.mxu0 0.0
    %1670 = vmatpush.msra.mxu0 0.0
    %1671 = vmatpush.msra.mxu0 0.0
    %1672 = vmatpush.msra.mxu0 0.0
    %1673 = vmatpush.msra.mxu0 0.0
    %1674 = vmatpush.msra.mxu0 0.0
    %1675 = vmatpush.msra.mxu0 0.0
    %1676 = vmatpush.msra.mxu0 %v902
    %1677 = vmatpush.msra.mxu0 %v899
    %1678 = vmatpush.msra.mxu0 %v896
    %1679 = vmatpush.msra.mxu0 %v893
    %1680 = vmatmul.f32.gmra.mxu0 %v1618
    %v1681 = vpop.f32.mrf.mxu0
    %v1682 = vadd.f32 0.0, %v1681
    %1683 = vmatmul.f32.gmra.mxu0 %v1621
    %v1684 = vpop.f32.mrf.mxu0
    %v1685 = vadd.f32 0.0, %v1684
    %1686 = vmatmul.f32.gmra.mxu0 %v1624
    %v1687 = vpop.f32.mrf.mxu0
    %v1688 = vadd.f32 0.0, %v1687
    %1689 = vmatmul.f32.gmra.mxu0 %v1627
    %v1690 = vpop.f32.mrf.mxu0
    %v1691 = vadd.f32 0.0, %v1690
    %1692 = vmatmul.f32.gmra.mxu0 %v1630
    %v1693 = vpop.f32.mrf.mxu0
    %v1694 = vadd.f32 0.0, %v1693
    %1695 = vdwg.mxu0
    %1696 = vmatpush.msra.mxu0 0.0
    %1697 = vmatpush.msra.mxu0 0.0
    %1698 = vmatpush.msra.mxu0 0.0
    %1699 = vmatpush.msra.mxu0 0.0
    %1700 = vmatpush.msra.mxu0 0.0
    %1701 = vmatpush.msra.mxu0 0.0
    %1702 = vmatpush.msra.mxu0 0.0
    %1703 = vmatpush.msra.mxu0 0.0
    %1704 = vmatpush.msra.mxu0 0.0
    %1705 = vmatpush.msra.mxu0 0.0
    %1706 = vmatpush.msra.mxu0 0.0
    %1707 = vmatpush.msra.mxu0 0.0
    %1708 = vmatpush.msra.mxu0 %v903
    %1709 = vmatpush.msra.mxu0 %v900
    %1710 = vmatpush.msra.mxu0 %v897
    %1711 = vmatpush.msra.mxu0 %v894
    %1712 = vmatmul.f32.gmra.mxu0 %v1618
    %v1713 = vpop.f32.mrf.mxu0
    %v1714 = vadd.f32 0.0, %v1713
    %1715 = vmatmul.f32.gmra.mxu0 %v1621
    %v1716 = vpop.f32.mrf.mxu0
    %v1717 = vadd.f32 0.0, %v1716
    %1718 = vmatmul.f32.gmra.mxu0 %v1624
    %v1719 = vpop.f32.mrf.mxu0
    %v1720 = vadd.f32 0.0, %v1719
    %1721 = vmatmul.f32.gmra.mxu0 %v1627
    %v1722 = vpop.f32.mrf.mxu0
    %v1723 = vadd.f32 0.0, %v1722
    %1724 = vmatmul.f32.gmra.mxu0 %v1630
    %v1725 = vpop.f32.mrf.mxu0
    %v1726 = vadd.f32 0.0, %v1725
    %1727 = vdwg.mxu0
    %v1728 = vld [vmem:[#allocation2 + $0xf0] sm:$0xff]
    %v1729 = vld [vmem:[#allocation2 + $0x108] sm:$0xff]
    %v1730 = vld [vmem:[#allocation2 + $0x120] sm:$0xff]
    %v1731 = vld [vmem:[#allocation2 + $0x138] sm:$0xff]
    %v1732 = vld [vmem:[#allocation2 + $0x150] sm:$0xff]
    %v1733 = vadd.f32 %v1728, %v1650
    %v1734 = vadd.f32 %v1729, %v1653
    %v1735 = vadd.f32 %v1730, %v1656
    %v1736 = vadd.f32 %v1731, %v1659
    %v1737 = vadd.f32 %v1732, %v1662
    %v1738 = vxor.u32 %v1733, 2147483648
    %v1739 = vxor.u32 %v1734, 2147483648
    %v1740 = vxor.u32 %v1735, 2147483648
    %v1741 = vxor.u32 %v1736, 2147483648
    %v1742 = vxor.u32 %v1737, 2147483648
    %v1743 = vmul.f32 %v1738, 1.442695
    %v1744 = vpow.pop %v1743
    %v1745 = vmul.f32 %v1739, 1.442695
    %v1746 = vpow.pop %v1745
    %v1747 = vmul.f32 %v1740, 1.442695
    %v1748 = vpow.pop %v1747
    %v1749 = vmul.f32 %v1741, 1.442695
    %v1750 = vpow.pop %v1749
    %v1751 = vmul.f32 %v1742, 1.442695
    %v1752 = vpow.pop %v1751
    %v1753 = vadd.f32 %v1744, 1.0
    %v1754 = vadd.f32 %v1746, 1.0
    %v1755 = vadd.f32 %v1748, 1.0
    %v1756 = vadd.f32 %v1750, 1.0
    %v1757 = vadd.f32 %v1752, 1.0
    %v1758 = vrcp.pop %v1753
    %v1759 = vmul.f32 %v1753, %v1758
    %v1760 = vsub.f32 1.0, %v1759
    %v1761 = vmul.f32 %v1758, %v1760
    %v1762 = vadd.f32 %v1758, %v1761
    %vm1763 = vweird.f32 %v1753
    %vm1764 = vweird.f32 %v1758
    %vm1765 = vmor %vm1763, %vm1764
    %v1766 = vsel %vm1765, %v1758, %v1762
    %v1767 = vand.u32 2147483647, %v1753
    %vm1768 = vcmp.eq.f32.partialorder %v1767, 8.507059e+37
    %v1769 = vand.u32 %v1753, 2147483648
    %v1770 = vor.u32 1.1754944e-38, %v1769
    %v1771 = vsel %vm1768, %v1770, %v1766
    %v1772 = vmul.f32 1.0, %v1771
    %v1773 = vrcp.pop %v1754
    %v1774 = vmul.f32 %v1754, %v1773
    %v1775 = vsub.f32 1.0, %v1774
    %v1776 = vmul.f32 %v1773, %v1775
    %v1777 = vadd.f32 %v1773, %v1776
    %vm1778 = vweird.f32 %v1754
    %vm1779 = vweird.f32 %v1773
    %vm1780 = vmor %vm1778, %vm1779
    %v1781 = vsel %vm1780, %v1773, %v1777
    %v1782 = vand.u32 2147483647, %v1754
    %vm1783 = vcmp.eq.f32.partialorder %v1782, 8.507059e+37
    %v1784 = vand.u32 %v1754, 2147483648
    %v1785 = vor.u32 1.1754944e-38, %v1784
    %v1786 = vsel %vm1783, %v1785, %v1781
    %v1787 = vmul.f32 1.0, %v1786
    %v1788 = vrcp.pop %v1755
    %v1789 = vmul.f32 %v1755, %v1788
    %v1790 = vsub.f32 1.0, %v1789
    %v1791 = vmul.f32 %v1788, %v1790
    %v1792 = vadd.f32 %v1788, %v1791
    %vm1793 = vweird.f32 %v1755
    %vm1794 = vweird.f32 %v1788
    %vm1795 = vmor %vm1793, %vm1794
    %v1796 = vsel %vm1795, %v1788, %v1792
    %v1797 = vand.u32 2147483647, %v1755
    %vm1798 = vcmp.eq.f32.partialorder %v1797, 8.507059e+37
    %v1799 = vand.u32 %v1755, 2147483648
    %v1800 = vor.u32 1.1754944e-38, %v1799
    %v1801 = vsel %vm1798, %v1800, %v1796
    %v1802 = vmul.f32 1.0, %v1801
    %v1803 = vrcp.pop %v1756
    %v1804 = vmul.f32 %v1756, %v1803
    %v1805 = vsub.f32 1.0, %v1804
    %v1806 = vmul.f32 %v1803, %v1805
    %v1807 = vadd.f32 %v1803, %v1806
    %vm1808 = vweird.f32 %v1756
    %vm1809 = vweird.f32 %v1803
    %vm1810 = vmor %vm1808, %vm1809
    %v1811 = vsel %vm1810, %v1803, %v1807
    %v1812 = vand.u32 2147483647, %v1756
    %vm1813 = vcmp.eq.f32.partialorder %v1812, 8.507059e+37
    %v1814 = vand.u32 %v1756, 2147483648
    %v1815 = vor.u32 1.1754944e-38, %v1814
    %v1816 = vsel %vm1813, %v1815, %v1811
    %v1817 = vmul.f32 1.0, %v1816
    %v1818 = vrcp.pop %v1757
    %v1819 = vmul.f32 %v1757, %v1818
    %v1820 = vsub.f32 1.0, %v1819
    %v1821 = vmul.f32 %v1818, %v1820
    %v1822 = vadd.f32 %v1818, %v1821
    %vm1823 = vweird.f32 %v1757
    %vm1824 = vweird.f32 %v1818
    %vm1825 = vmor %vm1823, %vm1824
    %v1826 = vsel %vm1825, %v1818, %v1822
    %v1827 = vand.u32 2147483647, %v1757
    %vm1828 = vcmp.eq.f32.partialorder %v1827, 8.507059e+37
    %v1829 = vand.u32 %v1757, 2147483648
    %v1830 = vor.u32 1.1754944e-38, %v1829
    %v1831 = vsel %vm1828, %v1830, %v1826
    %v1832 = vmul.f32 1.0, %v1831
    %v1833 = vld [vmem:[#allocation2 + $0xf8] sm:$0xff]
    %v1834 = vld [vmem:[#allocation2 + $0x110] sm:$0xff]
    %v1835 = vld [vmem:[#allocation2 + $0x128] sm:$0xff]
    %v1836 = vld [vmem:[#allocation2 + $0x140] sm:$0xff]
    %v1837 = vld [vmem:[#allocation2 + $0x158] sm:$0xff]
    %v1838 = vadd.f32 %v1833, %v1682
    %v1839 = vadd.f32 %v1834, %v1685
    %v1840 = vadd.f32 %v1835, %v1688
    %v1841 = vadd.f32 %v1836, %v1691
    %v1842 = vadd.f32 %v1837, %v1694
    %v1843 = vxor.u32 %v1838, 2147483648
    %v1844 = vxor.u32 %v1839, 2147483648
    %v1845 = vxor.u32 %v1840, 2147483648
    %v1846 = vxor.u32 %v1841, 2147483648
    %v1847 = vxor.u32 %v1842, 2147483648
    %v1848 = vmul.f32 %v1843, 1.442695
    %v1849 = vpow.pop %v1848
    %v1850 = vmul.f32 %v1844, 1.442695
    %v1851 = vpow.pop %v1850
    %v1852 = vmul.f32 %v1845, 1.442695
    %v1853 = vpow.pop %v1852
    %v1854 = vmul.f32 %v1846, 1.442695
    %v1855 = vpow.pop %v1854
    %v1856 = vmul.f32 %v1847, 1.442695
    %v1857 = vpow.pop %v1856
    %v1858 = vadd.f32 %v1849, 1.0
    %v1859 = vadd.f32 %v1851, 1.0
    %v1860 = vadd.f32 %v1853, 1.0
    %v1861 = vadd.f32 %v1855, 1.0
    %v1862 = vadd.f32 %v1857, 1.0
    %v1863 = vrcp.pop %v1858
    %v1864 = vmul.f32 %v1858, %v1863
    %v1865 = vsub.f32 1.0, %v1864
    %v1866 = vmul.f32 %v1863, %v1865
    %v1867 = vadd.f32 %v1863, %v1866
    %vm1868 = vweird.f32 %v1858
    %vm1869 = vweird.f32 %v1863
    %vm1870 = vmor %vm1868, %vm1869
    %v1871 = vsel %vm1870, %v1863, %v1867
    %v1872 = vand.u32 2147483647, %v1858
    %vm1873 = vcmp.eq.f32.partialorder %v1872, 8.507059e+37
    %v1874 = vand.u32 %v1858, 2147483648
    %v1875 = vor.u32 1.1754944e-38, %v1874
    %v1876 = vsel %vm1873, %v1875, %v1871
    %v1877 = vmul.f32 1.0, %v1876
    %v1878 = vrcp.pop %v1859
    %v1879 = vmul.f32 %v1859, %v1878
    %v1880 = vsub.f32 1.0, %v1879
    %v1881 = vmul.f32 %v1878, %v1880
    %v1882 = vadd.f32 %v1878, %v1881
    %vm1883 = vweird.f32 %v1859
    %vm1884 = vweird.f32 %v1878
    %vm1885 = vmor %vm1883, %vm1884
    %v1886 = vsel %vm1885, %v1878, %v1882
    %v1887 = vand.u32 2147483647, %v1859
    %vm1888 = vcmp.eq.f32.partialorder %v1887, 8.507059e+37
    %v1889 = vand.u32 %v1859, 2147483648
    %v1890 = vor.u32 1.1754944e-38, %v1889
    %v1891 = vsel %vm1888, %v1890, %v1886
    %v1892 = vmul.f32 1.0, %v1891
    %v1893 = vrcp.pop %v1860
    %v1894 = vmul.f32 %v1860, %v1893
    %v1895 = vsub.f32 1.0, %v1894
    %v1896 = vmul.f32 %v1893, %v1895
    %v1897 = vadd.f32 %v1893, %v1896
    %vm1898 = vweird.f32 %v1860
    %vm1899 = vweird.f32 %v1893
    %vm1900 = vmor %vm1898, %vm1899
    %v1901 = vsel %vm1900, %v1893, %v1897
    %v1902 = vand.u32 2147483647, %v1860
    %vm1903 = vcmp.eq.f32.partialorder %v1902, 8.507059e+37
    %v1904 = vand.u32 %v1860, 2147483648
    %v1905 = vor.u32 1.1754944e-38, %v1904
    %v1906 = vsel %vm1903, %v1905, %v1901
    %v1907 = vmul.f32 1.0, %v1906
    %v1908 = vrcp.pop %v1861
    %v1909 = vmul.f32 %v1861, %v1908
    %v1910 = vsub.f32 1.0, %v1909
    %v1911 = vmul.f32 %v1908, %v1910
    %v1912 = vadd.f32 %v1908, %v1911
    %vm1913 = vweird.f32 %v1861
    %vm1914 = vweird.f32 %v1908
    %vm1915 = vmor %vm1913, %vm1914
    %v1916 = vsel %vm1915, %v1908, %v1912
    %v1917 = vand.u32 2147483647, %v1861
    %vm1918 = vcmp.eq.f32.partialorder %v1917, 8.507059e+37
    %v1919 = vand.u32 %v1861, 2147483648
    %v1920 = vor.u32 1.1754944e-38, %v1919
    %v1921 = vsel %vm1918, %v1920, %v1916
    %v1922 = vmul.f32 1.0, %v1921
    %v1923 = vrcp.pop %v1862
    %v1924 = vmul.f32 %v1862, %v1923
    %v1925 = vsub.f32 1.0, %v1924
    %v1926 = vmul.f32 %v1923, %v1925
    %v1927 = vadd.f32 %v1923, %v1926
    %vm1928 = vweird.f32 %v1862
    %vm1929 = vweird.f32 %v1923
    %vm1930 = vmor %vm1928, %vm1929
    %v1931 = vsel %vm1930, %v1923, %v1927
    %v1932 = vand.u32 2147483647, %v1862
    %vm1933 = vcmp.eq.f32.partialorder %v1932, 8.507059e+37
    %v1934 = vand.u32 %v1862, 2147483648
    %v1935 = vor.u32 1.1754944e-38, %v1934
    %v1936 = vsel %vm1933, %v1935, %v1931
    %v1937 = vmul.f32 1.0, %v1936
    %v1938 = vld [vmem:[#allocation2 + $0x100] sm:$0xff]
    %v1939 = vld [vmem:[#allocation2 + $0x118] sm:$0xff]
    %v1940 = vld [vmem:[#allocation2 + $0x130] sm:$0xff]
    %v1941 = vld [vmem:[#allocation2 + $0x148] sm:$0xff]
    %v1942 = vld [vmem:[#allocation2 + $0x160] sm:$0xff]
    %v1943 = vadd.f32 %v1714, %v1220
    %v1944 = vadd.f32 %v1717, %v1220
    %v1945 = vadd.f32 %v1720, %v1220
    %v1946 = vadd.f32 %v1723, %v1220
    %v1947 = vadd.f32 %v1726, %v1220
    %v1948 = vmul.f32 %v1772, %v1943
    %v1949 = vmul.f32 %v1787, %v1944
    %v1950 = vmul.f32 %v1802, %v1945
    %v1951 = vmul.f32 %v1817, %v1946
    %v1952 = vmul.f32 %v1832, %v1947
    %v1953 = vadd.f32 %v1938, %v1948
    %v1954 = vadd.f32 %v1939, %v1949
    %v1955 = vadd.f32 %v1940, %v1950
    %v1956 = vadd.f32 %v1941, %v1951
    %v1957 = vadd.f32 %v1942, %v1952
    %v1958 = vtanh.pop %v1953
    %v1959 = vtanh.pop %v1954
    %v1960 = vtanh.pop %v1955
    %v1961 = vtanh.pop %v1956
    %v1962 = vtanh.pop %v1957
    %v1963 = vsub.f32 %v1612, %v1958
    %v1964 = vsub.f32 %v1613, %v1959
    %v1965 = vsub.f32 %v1614, %v1960
    %v1966 = vsub.f32 %v1615, %v1961
    %v1967 = vsub.f32 %v1616, %v1962
    %v1968 = vmul.f32 %v1877, %v1963
    %v1969 = vmul.f32 %v1892, %v1964
    %v1970 = vmul.f32 %v1907, %v1965
    %v1971 = vmul.f32 %v1922, %v1966
    %v1972 = vmul.f32 %v1937, %v1967
    %v1973 = vadd.f32 %v1958, %v1968
    %v1974 = vadd.f32 %v1959, %v1969
    %v1975 = vadd.f32 %v1960, %v1970
    %v1976 = vadd.f32 %v1961, %v1971
    %v1977 = vadd.f32 %v1962, %v1972
    %v1979 = vsel %vm905, %v1973, 0
    %v1982 = vsel %vm905, %v1974, 0
    %v1985 = vsel %vm905, %v1975, 0
    %v1988 = vsel %vm905, %v1976, 0
    %v1991 = vsel %vm905, %v1977, 0
    %1993 = vmatpush.msra.mxu0 0.0
    %1994 = vmatpush.msra.mxu0 0.0
    %1995 = vmatpush.msra.mxu0 0.0
    %1996 = vmatpush.msra.mxu0 0.0
    %1997 = vmatpush.msra.mxu0 0.0
    %1998 = vmatpush.msra.mxu0 0.0
    %1999 = vmatpush.msra.mxu0 0.0
    %2000 = vmatpush.msra.mxu0 0.0
    %2001 = vmatpush.msra.mxu0 0.0
    %2002 = vmatpush.msra.mxu0 0.0
    %2003 = vmatpush.msra.mxu0 0.0
    %2004 = vmatpush.msra.mxu0 0.0
    %2005 = vmatpush.msra.mxu0 %v901
    %2006 = vmatpush.msra.mxu0 %v898
    %2007 = vmatpush.msra.mxu0 %v895
    %2008 = vmatpush.msra.mxu0 %v892
    %2009 = vmatmul.f32.gmra.mxu0 %v1979
    %v2010 = vpop.f32.mrf.mxu0
    %v2011 = vadd.f32 0.0, %v2010
    %2012 = vmatmul.f32.gmra.mxu0 %v1982
    %v2013 = vpop.f32.mrf.mxu0
    %v2014 = vadd.f32 0.0, %v2013
    %2015 = vmatmul.f32.gmra.mxu0 %v1985
    %v2016 = vpop.f32.mrf.mxu0
    %v2017 = vadd.f32 0.0, %v2016
    %2018 = vmatmul.f32.gmra.mxu0 %v1988
    %v2019 = vpop.f32.mrf.mxu0
    %v2020 = vadd.f32 0.0, %v2019
    %2021 = vmatmul.f32.gmra.mxu0 %v1991
    %v2022 = vpop.f32.mrf.mxu0
    %v2023 = vadd.f32 0.0, %v2022
    %2024 = vdwg.mxu0
    %2025 = vmatpush.msra.mxu0 0.0
    %2026 = vmatpush.msra.mxu0 0.0
    %2027 = vmatpush.msra.mxu0 0.0
    %2028 = vmatpush.msra.mxu0 0.0
    %2029 = vmatpush.msra.mxu0 0.0
    %2030 = vmatpush.msra.mxu0 0.0
    %2031 = vmatpush.msra.mxu0 0.0
    %2032 = vmatpush.msra.mxu0 0.0
    %2033 = vmatpush.msra.mxu0 0.0
    %2034 = vmatpush.msra.mxu0 0.0
    %2035 = vmatpush.msra.mxu0 0.0
    %2036 = vmatpush.msra.mxu0 0.0
    %2037 = vmatpush.msra.mxu0 %v902
    %2038 = vmatpush.msra.mxu0 %v899
    %2039 = vmatpush.msra.mxu0 %v896
    %2040 = vmatpush.msra.mxu0 %v893
    %2041 = vmatmul.f32.gmra.mxu0 %v1979
    %v2042 = vpop.f32.mrf.mxu0
    %v2043 = vadd.f32 0.0, %v2042
    %2044 = vmatmul.f32.gmra.mxu0 %v1982
    %v2045 = vpop.f32.mrf.mxu0
    %v2046 = vadd.f32 0.0, %v2045
    %2047 = vmatmul.f32.gmra.mxu0 %v1985
    %v2048 = vpop.f32.mrf.mxu0
    %v2049 = vadd.f32 0.0, %v2048
    %2050 = vmatmul.f32.gmra.mxu0 %v1988
    %v2051 = vpop.f32.mrf.mxu0
    %v2052 = vadd.f32 0.0, %v2051
    %2053 = vmatmul.f32.gmra.mxu0 %v1991
    %v2054 = vpop.f32.mrf.mxu0
    %v2055 = vadd.f32 0.0, %v2054
    %2056 = vdwg.mxu0
    %2057 = vmatpush.msra.mxu0 0.0
    %2058 = vmatpush.msra.mxu0 0.0
    %2059 = vmatpush.msra.mxu0 0.0
    %2060 = vmatpush.msra.mxu0 0.0
    %2061 = vmatpush.msra.mxu0 0.0
    %2062 = vmatpush.msra.mxu0 0.0
    %2063 = vmatpush.msra.mxu0 0.0
    %2064 = vmatpush.msra.mxu0 0.0
    %2065 = vmatpush.msra.mxu0 0.0
    %2066 = vmatpush.msra.mxu0 0.0
    %2067 = vmatpush.msra.mxu0 0.0
    %2068 = vmatpush.msra.mxu0 0.0
    %2069 = vmatpush.msra.mxu0 %v903
    %2070 = vmatpush.msra.mxu0 %v900
    %2071 = vmatpush.msra.mxu0 %v897
    %2072 = vmatpush.msra.mxu0 %v894
    %2073 = vmatmul.f32.gmra.mxu0 %v1979
    %v2074 = vpop.f32.mrf.mxu0
    %v2075 = vadd.f32 0.0, %v2074
    %2076 = vmatmul.f32.gmra.mxu0 %v1982
    %v2077 = vpop.f32.mrf.mxu0
    %v2078 = vadd.f32 0.0, %v2077
    %2079 = vmatmul.f32.gmra.mxu0 %v1985
    %v2080 = vpop.f32.mrf.mxu0
    %v2081 = vadd.f32 0.0, %v2080
    %2082 = vmatmul.f32.gmra.mxu0 %v1988
    %v2083 = vpop.f32.mrf.mxu0
    %v2084 = vadd.f32 0.0, %v2083
    %2085 = vmatmul.f32.gmra.mxu0 %v1991
    %v2086 = vpop.f32.mrf.mxu0
    %v2087 = vadd.f32 0.0, %v2086
    %2088 = vdwg.mxu0
    %v2089 = vld [vmem:[#allocation2 + $0x168] sm:$0xff]
    %v2090 = vld [vmem:[#allocation2 + $0x180] sm:$0xff]
    %v2091 = vld [vmem:[#allocation2 + $0x198] sm:$0xff]
    %v2092 = vld [vmem:[#allocation2 + $0x1b0] sm:$0xff]
    %v2093 = vld [vmem:[#allocation2 + $0x1c8] sm:$0xff]
    %v2094 = vadd.f32 %v2089, %v2011
    %v2095 = vadd.f32 %v2090, %v2014
    %v2096 = vadd.f32 %v2091, %v2017
    %v2097 = vadd.f32 %v2092, %v2020
    %v2098 = vadd.f32 %v2093, %v2023
    %v2099 = vxor.u32 %v2094, 2147483648
    %v2100 = vxor.u32 %v2095, 2147483648
    %v2101 = vxor.u32 %v2096, 2147483648
    %v2102 = vxor.u32 %v2097, 2147483648
    %v2103 = vxor.u32 %v2098, 2147483648
    %v2104 = vmul.f32 %v2099, 1.442695
    %v2105 = vpow.pop %v2104
    %v2106 = vmul.f32 %v2100, 1.442695
    %v2107 = vpow.pop %v2106
    %v2108 = vmul.f32 %v2101, 1.442695
    %v2109 = vpow.pop %v2108
    %v2110 = vmul.f32 %v2102, 1.442695
    %v2111 = vpow.pop %v2110
    %v2112 = vmul.f32 %v2103, 1.442695
    %v2113 = vpow.pop %v2112
    %v2114 = vadd.f32 %v2105, 1.0
    %v2115 = vadd.f32 %v2107, 1.0
    %v2116 = vadd.f32 %v2109, 1.0
    %v2117 = vadd.f32 %v2111, 1.0
    %v2118 = vadd.f32 %v2113, 1.0
    %v2119 = vrcp.pop %v2114
    %v2120 = vmul.f32 %v2114, %v2119
    %v2121 = vsub.f32 1.0, %v2120
    %v2122 = vmul.f32 %v2119, %v2121
    %v2123 = vadd.f32 %v2119, %v2122
    %vm2124 = vweird.f32 %v2114
    %vm2125 = vweird.f32 %v2119
    %vm2126 = vmor %vm2124, %vm2125
    %v2127 = vsel %vm2126, %v2119, %v2123
    %v2128 = vand.u32 2147483647, %v2114
    %vm2129 = vcmp.eq.f32.partialorder %v2128, 8.507059e+37
    %v2130 = vand.u32 %v2114, 2147483648
    %v2131 = vor.u32 1.1754944e-38, %v2130
    %v2132 = vsel %vm2129, %v2131, %v2127
    %v2133 = vmul.f32 1.0, %v2132
    %v2134 = vrcp.pop %v2115
    %v2135 = vmul.f32 %v2115, %v2134
    %v2136 = vsub.f32 1.0, %v2135
    %v2137 = vmul.f32 %v2134, %v2136
    %v2138 = vadd.f32 %v2134, %v2137
    %vm2139 = vweird.f32 %v2115
    %vm2140 = vweird.f32 %v2134
    %vm2141 = vmor %vm2139, %vm2140
    %v2142 = vsel %vm2141, %v2134, %v2138
    %v2143 = vand.u32 2147483647, %v2115
    %vm2144 = vcmp.eq.f32.partialorder %v2143, 8.507059e+37
    %v2145 = vand.u32 %v2115, 2147483648
    %v2146 = vor.u32 1.1754944e-38, %v2145
    %v2147 = vsel %vm2144, %v2146, %v2142
    %v2148 = vmul.f32 1.0, %v2147
    %v2149 = vrcp.pop %v2116
    %v2150 = vmul.f32 %v2116, %v2149
    %v2151 = vsub.f32 1.0, %v2150
    %v2152 = vmul.f32 %v2149, %v2151
    %v2153 = vadd.f32 %v2149, %v2152
    %vm2154 = vweird.f32 %v2116
    %vm2155 = vweird.f32 %v2149
    %vm2156 = vmor %vm2154, %vm2155
    %v2157 = vsel %vm2156, %v2149, %v2153
    %v2158 = vand.u32 2147483647, %v2116
    %vm2159 = vcmp.eq.f32.partialorder %v2158, 8.507059e+37
    %v2160 = vand.u32 %v2116, 2147483648
    %v2161 = vor.u32 1.1754944e-38, %v2160
    %v2162 = vsel %vm2159, %v2161, %v2157
    %v2163 = vmul.f32 1.0, %v2162
    %v2164 = vrcp.pop %v2117
    %v2165 = vmul.f32 %v2117, %v2164
    %v2166 = vsub.f32 1.0, %v2165
    %v2167 = vmul.f32 %v2164, %v2166
    %v2168 = vadd.f32 %v2164, %v2167
    %vm2169 = vweird.f32 %v2117
    %vm2170 = vweird.f32 %v2164
    %vm2171 = vmor %vm2169, %vm2170
    %v2172 = vsel %vm2171, %v2164, %v2168
    %v2173 = vand.u32 2147483647, %v2117
    %vm2174 = vcmp.eq.f32.partialorder %v2173, 8.507059e+37
    %v2175 = vand.u32 %v2117, 2147483648
    %v2176 = vor.u32 1.1754944e-38, %v2175
    %v2177 = vsel %vm2174, %v2176, %v2172
    %v2178 = vmul.f32 1.0, %v2177
    %v2179 = vrcp.pop %v2118
    %v2180 = vmul.f32 %v2118, %v2179
    %v2181 = vsub.f32 1.0, %v2180
    %v2182 = vmul.f32 %v2179, %v2181
    %v2183 = vadd.f32 %v2179, %v2182
    %vm2184 = vweird.f32 %v2118
    %vm2185 = vweird.f32 %v2179
    %vm2186 = vmor %vm2184, %vm2185
    %v2187 = vsel %vm2186, %v2179, %v2183
    %v2188 = vand.u32 2147483647, %v2118
    %vm2189 = vcmp.eq.f32.partialorder %v2188, 8.507059e+37
    %v2190 = vand.u32 %v2118, 2147483648
    %v2191 = vor.u32 1.1754944e-38, %v2190
    %v2192 = vsel %vm2189, %v2191, %v2187
    %v2193 = vmul.f32 1.0, %v2192
    %v2194 = vld [vmem:[#allocation2 + $0x170] sm:$0xff]
    %v2195 = vld [vmem:[#allocation2 + $0x188] sm:$0xff]
    %v2196 = vld [vmem:[#allocation2 + $0x1a0] sm:$0xff]
    %v2197 = vld [vmem:[#allocation2 + $0x1b8] sm:$0xff]
    %v2198 = vld [vmem:[#allocation2 + $0x1d0] sm:$0xff]
    %v2199 = vadd.f32 %v2194, %v2043
    %v2200 = vadd.f32 %v2195, %v2046
    %v2201 = vadd.f32 %v2196, %v2049
    %v2202 = vadd.f32 %v2197, %v2052
    %v2203 = vadd.f32 %v2198, %v2055
    %v2204 = vxor.u32 %v2199, 2147483648
    %v2205 = vxor.u32 %v2200, 2147483648
    %v2206 = vxor.u32 %v2201, 2147483648
    %v2207 = vxor.u32 %v2202, 2147483648
    %v2208 = vxor.u32 %v2203, 2147483648
    %v2209 = vmul.f32 %v2204, 1.442695
    %v2210 = vpow.pop %v2209
    %v2211 = vmul.f32 %v2205, 1.442695
    %v2212 = vpow.pop %v2211
    %v2213 = vmul.f32 %v2206, 1.442695
    %v2214 = vpow.pop %v2213
    %v2215 = vmul.f32 %v2207, 1.442695
    %v2216 = vpow.pop %v2215
    %v2217 = vmul.f32 %v2208, 1.442695
    %v2218 = vpow.pop %v2217
    %v2219 = vadd.f32 %v2210, 1.0
    %v2220 = vadd.f32 %v2212, 1.0
    %v2221 = vadd.f32 %v2214, 1.0
    %v2222 = vadd.f32 %v2216, 1.0
    %v2223 = vadd.f32 %v2218, 1.0
    %v2224 = vrcp.pop %v2219
    %v2225 = vmul.f32 %v2219, %v2224
    %v2226 = vsub.f32 1.0, %v2225
    %v2227 = vmul.f32 %v2224, %v2226
    %v2228 = vadd.f32 %v2224, %v2227
    %vm2229 = vweird.f32 %v2219
    %vm2230 = vweird.f32 %v2224
    %vm2231 = vmor %vm2229, %vm2230
    %v2232 = vsel %vm2231, %v2224, %v2228
    %v2233 = vand.u32 2147483647, %v2219
    %vm2234 = vcmp.eq.f32.partialorder %v2233, 8.507059e+37
    %v2235 = vand.u32 %v2219, 2147483648
    %v2236 = vor.u32 1.1754944e-38, %v2235
    %v2237 = vsel %vm2234, %v2236, %v2232
    %v2238 = vmul.f32 1.0, %v2237
    %v2239 = vrcp.pop %v2220
    %v2240 = vmul.f32 %v2220, %v2239
    %v2241 = vsub.f32 1.0, %v2240
    %v2242 = vmul.f32 %v2239, %v2241
    %v2243 = vadd.f32 %v2239, %v2242
    %vm2244 = vweird.f32 %v2220
    %vm2245 = vweird.f32 %v2239
    %vm2246 = vmor %vm2244, %vm2245
    %v2247 = vsel %vm2246, %v2239, %v2243
    %v2248 = vand.u32 2147483647, %v2220
    %vm2249 = vcmp.eq.f32.partialorder %v2248, 8.507059e+37
    %v2250 = vand.u32 %v2220, 2147483648
    %v2251 = vor.u32 1.1754944e-38, %v2250
    %v2252 = vsel %vm2249, %v2251, %v2247
    %v2253 = vmul.f32 1.0, %v2252
    %v2254 = vrcp.pop %v2221
    %v2255 = vmul.f32 %v2221, %v2254
    %v2256 = vsub.f32 1.0, %v2255
    %v2257 = vmul.f32 %v2254, %v2256
    %v2258 = vadd.f32 %v2254, %v2257
    %vm2259 = vweird.f32 %v2221
    %vm2260 = vweird.f32 %v2254
    %vm2261 = vmor %vm2259, %vm2260
    %v2262 = vsel %vm2261, %v2254, %v2258
    %v2263 = vand.u32 2147483647, %v2221
    %vm2264 = vcmp.eq.f32.partialorder %v2263, 8.507059e+37
    %v2265 = vand.u32 %v2221, 2147483648
    %v2266 = vor.u32 1.1754944e-38, %v2265
    %v2267 = vsel %vm2264, %v2266, %v2262
    %v2268 = vmul.f32 1.0, %v2267
    %v2269 = vrcp.pop %v2222
    %v2270 = vmul.f32 %v2222, %v2269
    %v2271 = vsub.f32 1.0, %v2270
    %v2272 = vmul.f32 %v2269, %v2271
    %v2273 = vadd.f32 %v2269, %v2272
    %vm2274 = vweird.f32 %v2222
    %vm2275 = vweird.f32 %v2269
    %vm2276 = vmor %vm2274, %vm2275
    %v2277 = vsel %vm2276, %v2269, %v2273
    %v2278 = vand.u32 2147483647, %v2222
    %vm2279 = vcmp.eq.f32.partialorder %v2278, 8.507059e+37
    %v2280 = vand.u32 %v2222, 2147483648
    %v2281 = vor.u32 1.1754944e-38, %v2280
    %v2282 = vsel %vm2279, %v2281, %v2277
    %v2283 = vmul.f32 1.0, %v2282
    %v2284 = vrcp.pop %v2223
    %v2285 = vmul.f32 %v2223, %v2284
    %v2286 = vsub.f32 1.0, %v2285
    %v2287 = vmul.f32 %v2284, %v2286
    %v2288 = vadd.f32 %v2284, %v2287
    %vm2289 = vweird.f32 %v2223
    %vm2290 = vweird.f32 %v2284
    %vm2291 = vmor %vm2289, %vm2290
    %v2292 = vsel %vm2291, %v2284, %v2288
    %v2293 = vand.u32 2147483647, %v2223
    %vm2294 = vcmp.eq.f32.partialorder %v2293, 8.507059e+37
    %v2295 = vand.u32 %v2223, 2147483648
    %v2296 = vor.u32 1.1754944e-38, %v2295
    %v2297 = vsel %vm2294, %v2296, %v2292
    %v2298 = vmul.f32 1.0, %v2297
    %v2299 = vld [vmem:[#allocation2 + $0x178] sm:$0xff]
    %v2300 = vld [vmem:[#allocation2 + $0x190] sm:$0xff]
    %v2301 = vld [vmem:[#allocation2 + $0x1a8] sm:$0xff]
    %v2302 = vld [vmem:[#allocation2 + $0x1c0] sm:$0xff]
    %v2303 = vld [vmem:[#allocation2 + $0x1d8] sm:$0xff]
    %v2304 = vadd.f32 %v2075, %v1220
    %v2305 = vadd.f32 %v2078, %v1220
    %v2306 = vadd.f32 %v2081, %v1220
    %v2307 = vadd.f32 %v2084, %v1220
    %v2308 = vadd.f32 %v2087, %v1220
    %v2309 = vmul.f32 %v2133, %v2304
    %v2310 = vmul.f32 %v2148, %v2305
    %v2311 = vmul.f32 %v2163, %v2306
    %v2312 = vmul.f32 %v2178, %v2307
    %v2313 = vmul.f32 %v2193, %v2308
    %v2314 = vadd.f32 %v2299, %v2309
    %v2315 = vadd.f32 %v2300, %v2310
    %v2316 = vadd.f32 %v2301, %v2311
    %v2317 = vadd.f32 %v2302, %v2312
    %v2318 = vadd.f32 %v2303, %v2313
    %v2319 = vtanh.pop %v2314
    %v2320 = vtanh.pop %v2315
    %v2321 = vtanh.pop %v2316
    %v2322 = vtanh.pop %v2317
    %v2323 = vtanh.pop %v2318
    %v2324 = vsub.f32 %v1973, %v2319
    %v2325 = vsub.f32 %v1974, %v2320
    %v2326 = vsub.f32 %v1975, %v2321
    %v2327 = vsub.f32 %v1976, %v2322
    %v2328 = vsub.f32 %v1977, %v2323
    %v2329 = vmul.f32 %v2238, %v2324
    %v2330 = vmul.f32 %v2253, %v2325
    %v2331 = vmul.f32 %v2268, %v2326
    %v2332 = vmul.f32 %v2283, %v2327
    %v2333 = vmul.f32 %v2298, %v2328
    %v2334 = vadd.f32 %v2319, %v2329
    %v2335 = vadd.f32 %v2320, %v2330
    %v2336 = vadd.f32 %v2321, %v2331
    %v2337 = vadd.f32 %v2322, %v2332
    %v2338 = vadd.f32 %v2323, %v2333
    %v2340 = vsel %vm905, %v2334, 0
    %v2343 = vsel %vm905, %v2335, 0
    %v2346 = vsel %vm905, %v2336, 0
    %v2349 = vsel %vm905, %v2337, 0
    %v2352 = vsel %vm905, %v2338, 0
    %2354 = vmatpush.msra.mxu0 0.0
    %2355 = vmatpush.msra.mxu0 0.0
    %2356 = vmatpush.msra.mxu0 0.0
    %2357 = vmatpush.msra.mxu0 0.0
    %2358 = vmatpush.msra.mxu0 0.0
    %2359 = vmatpush.msra.mxu0 0.0
    %2360 = vmatpush.msra.mxu0 0.0
    %2361 = vmatpush.msra.mxu0 0.0
    %2362 = vmatpush.msra.mxu0 0.0
    %2363 = vmatpush.msra.mxu0 0.0
    %2364 = vmatpush.msra.mxu0 0.0
    %2365 = vmatpush.msra.mxu0 0.0
    %2366 = vmatpush.msra.mxu0 %v901
    %2367 = vmatpush.msra.mxu0 %v898
    %2368 = vmatpush.msra.mxu0 %v895
    %2369 = vmatpush.msra.mxu0 %v892
    %2370 = vmatmul.f32.gmra.mxu0 %v2340
    %v2371 = vpop.f32.mrf.mxu0
    %v2372 = vadd.f32 0.0, %v2371
    %2373 = vmatmul.f32.gmra.mxu0 %v2343
    %v2374 = vpop.f32.mrf.mxu0
    %v2375 = vadd.f32 0.0, %v2374
    %2376 = vmatmul.f32.gmra.mxu0 %v2346
    %v2377 = vpop.f32.mrf.mxu0
    %v2378 = vadd.f32 0.0, %v2377
    %2379 = vmatmul.f32.gmra.mxu0 %v2349
    %v2380 = vpop.f32.mrf.mxu0
    %v2381 = vadd.f32 0.0, %v2380
    %2382 = vmatmul.f32.gmra.mxu0 %v2352
    %v2383 = vpop.f32.mrf.mxu0
    %v2384 = vadd.f32 0.0, %v2383
    %2385 = vdwg.mxu0
    %2386 = vmatpush.msra.mxu0 0.0
    %2387 = vmatpush.msra.mxu0 0.0
    %2388 = vmatpush.msra.mxu0 0.0
    %2389 = vmatpush.msra.mxu0 0.0
    %2390 = vmatpush.msra.mxu0 0.0
    %2391 = vmatpush.msra.mxu0 0.0
    %2392 = vmatpush.msra.mxu0 0.0
    %2393 = vmatpush.msra.mxu0 0.0
    %2394 = vmatpush.msra.mxu0 0.0
    %2395 = vmatpush.msra.mxu0 0.0
    %2396 = vmatpush.msra.mxu0 0.0
    %2397 = vmatpush.msra.mxu0 0.0
    %2398 = vmatpush.msra.mxu0 %v902
    %2399 = vmatpush.msra.mxu0 %v899
    %2400 = vmatpush.msra.mxu0 %v896
    %2401 = vmatpush.msra.mxu0 %v893
    %2402 = vmatmul.f32.gmra.mxu0 %v2340
    %v2403 = vpop.f32.mrf.mxu0
    %v2404 = vadd.f32 0.0, %v2403
    %2405 = vmatmul.f32.gmra.mxu0 %v2343
    %v2406 = vpop.f32.mrf.mxu0
    %v2407 = vadd.f32 0.0, %v2406
    %2408 = vmatmul.f32.gmra.mxu0 %v2346
    %v2409 = vpop.f32.mrf.mxu0
    %v2410 = vadd.f32 0.0, %v2409
    %2411 = vmatmul.f32.gmra.mxu0 %v2349
    %v2412 = vpop.f32.mrf.mxu0
    %v2413 = vadd.f32 0.0, %v2412
    %2414 = vmatmul.f32.gmra.mxu0 %v2352
    %v2415 = vpop.f32.mrf.mxu0
    %v2416 = vadd.f32 0.0, %v2415
    %2417 = vdwg.mxu0
    %2418 = vmatpush.msra.mxu0 0.0
    %2419 = vmatpush.msra.mxu0 0.0
    %2420 = vmatpush.msra.mxu0 0.0
    %2421 = vmatpush.msra.mxu0 0.0
    %2422 = vmatpush.msra.mxu0 0.0
    %2423 = vmatpush.msra.mxu0 0.0
    %2424 = vmatpush.msra.mxu0 0.0
    %2425 = vmatpush.msra.mxu0 0.0
    %2426 = vmatpush.msra.mxu0 0.0
    %2427 = vmatpush.msra.mxu0 0.0
    %2428 = vmatpush.msra.mxu0 0.0
    %2429 = vmatpush.msra.mxu0 0.0
    %2430 = vmatpush.msra.mxu0 %v903
    %2431 = vmatpush.msra.mxu0 %v900
    %2432 = vmatpush.msra.mxu0 %v897
    %2433 = vmatpush.msra.mxu0 %v894
    %2434 = vmatmul.f32.gmra.mxu0 %v2340
    %v2435 = vpop.f32.mrf.mxu0
    %v2436 = vadd.f32 0.0, %v2435
    %2437 = vmatmul.f32.gmra.mxu0 %v2343
    %v2438 = vpop.f32.mrf.mxu0
    %v2439 = vadd.f32 0.0, %v2438
    %2440 = vmatmul.f32.gmra.mxu0 %v2346
    %v2441 = vpop.f32.mrf.mxu0
    %v2442 = vadd.f32 0.0, %v2441
    %2443 = vmatmul.f32.gmra.mxu0 %v2349
    %v2444 = vpop.f32.mrf.mxu0
    %v2445 = vadd.f32 0.0, %v2444
    %2446 = vmatmul.f32.gmra.mxu0 %v2352
    %v2447 = vpop.f32.mrf.mxu0
    %v2448 = vadd.f32 0.0, %v2447
    %2449 = vdwg.mxu0
    %v2450 = vld [vmem:[#allocation2 + $0x1e0] sm:$0xff]
    %v2451 = vld [vmem:[#allocation2 + $0x1f8] sm:$0xff]
    %v2452 = vld [vmem:[#allocation2 + $0x210] sm:$0xff]
    %v2453 = vld [vmem:[#allocation2 + $0x228] sm:$0xff]
    %v2454 = vld [vmem:[#allocation2 + $0x240] sm:$0xff]
    %v2455 = vadd.f32 %v2450, %v2372
    %v2456 = vadd.f32 %v2451, %v2375
    %v2457 = vadd.f32 %v2452, %v2378
    %v2458 = vadd.f32 %v2453, %v2381
    %v2459 = vadd.f32 %v2454, %v2384
    %v2460 = vxor.u32 %v2455, 2147483648
    %v2461 = vxor.u32 %v2456, 2147483648
    %v2462 = vxor.u32 %v2457, 2147483648
    %v2463 = vxor.u32 %v2458, 2147483648
    %v2464 = vxor.u32 %v2459, 2147483648
    %v2465 = vmul.f32 %v2460, 1.442695
    %v2466 = vpow.pop %v2465
    %v2467 = vmul.f32 %v2461, 1.442695
    %v2468 = vpow.pop %v2467
    %v2469 = vmul.f32 %v2462, 1.442695
    %v2470 = vpow.pop %v2469
    %v2471 = vmul.f32 %v2463, 1.442695
    %v2472 = vpow.pop %v2471
    %v2473 = vmul.f32 %v2464, 1.442695
    %v2474 = vpow.pop %v2473
    %v2475 = vadd.f32 %v2466, 1.0
    %v2476 = vadd.f32 %v2468, 1.0
    %v2477 = vadd.f32 %v2470, 1.0
    %v2478 = vadd.f32 %v2472, 1.0
    %v2479 = vadd.f32 %v2474, 1.0
    %v2480 = vrcp.pop %v2475
    %v2481 = vmul.f32 %v2475, %v2480
    %v2482 = vsub.f32 1.0, %v2481
    %v2483 = vmul.f32 %v2480, %v2482
    %v2484 = vadd.f32 %v2480, %v2483
    %vm2485 = vweird.f32 %v2475
    %vm2486 = vweird.f32 %v2480
    %vm2487 = vmor %vm2485, %vm2486
    %v2488 = vsel %vm2487, %v2480, %v2484
    %v2489 = vand.u32 2147483647, %v2475
    %vm2490 = vcmp.eq.f32.partialorder %v2489, 8.507059e+37
    %v2491 = vand.u32 %v2475, 2147483648
    %v2492 = vor.u32 1.1754944e-38, %v2491
    %v2493 = vsel %vm2490, %v2492, %v2488
    %v2494 = vmul.f32 1.0, %v2493
    %v2495 = vrcp.pop %v2476
    %v2496 = vmul.f32 %v2476, %v2495
    %v2497 = vsub.f32 1.0, %v2496
    %v2498 = vmul.f32 %v2495, %v2497
    %v2499 = vadd.f32 %v2495, %v2498
    %vm2500 = vweird.f32 %v2476
    %vm2501 = vweird.f32 %v2495
    %vm2502 = vmor %vm2500, %vm2501
    %v2503 = vsel %vm2502, %v2495, %v2499
    %v2504 = vand.u32 2147483647, %v2476
    %vm2505 = vcmp.eq.f32.partialorder %v2504, 8.507059e+37
    %v2506 = vand.u32 %v2476, 2147483648
    %v2507 = vor.u32 1.1754944e-38, %v2506
    %v2508 = vsel %vm2505, %v2507, %v2503
    %v2509 = vmul.f32 1.0, %v2508
    %v2510 = vrcp.pop %v2477
    %v2511 = vmul.f32 %v2477, %v2510
    %v2512 = vsub.f32 1.0, %v2511
    %v2513 = vmul.f32 %v2510, %v2512
    %v2514 = vadd.f32 %v2510, %v2513
    %vm2515 = vweird.f32 %v2477
    %vm2516 = vweird.f32 %v2510
    %vm2517 = vmor %vm2515, %vm2516
    %v2518 = vsel %vm2517, %v2510, %v2514
    %v2519 = vand.u32 2147483647, %v2477
    %vm2520 = vcmp.eq.f32.partialorder %v2519, 8.507059e+37
    %v2521 = vand.u32 %v2477, 2147483648
    %v2522 = vor.u32 1.1754944e-38, %v2521
    %v2523 = vsel %vm2520, %v2522, %v2518
    %v2524 = vmul.f32 1.0, %v2523
    %v2525 = vrcp.pop %v2478
    %v2526 = vmul.f32 %v2478, %v2525
    %v2527 = vsub.f32 1.0, %v2526
    %v2528 = vmul.f32 %v2525, %v2527
    %v2529 = vadd.f32 %v2525, %v2528
    %vm2530 = vweird.f32 %v2478
    %vm2531 = vweird.f32 %v2525
    %vm2532 = vmor %vm2530, %vm2531
    %v2533 = vsel %vm2532, %v2525, %v2529
    %v2534 = vand.u32 2147483647, %v2478
    %vm2535 = vcmp.eq.f32.partialorder %v2534, 8.507059e+37
    %v2536 = vand.u32 %v2478, 2147483648
    %v2537 = vor.u32 1.1754944e-38, %v2536
    %v2538 = vsel %vm2535, %v2537, %v2533
    %v2539 = vmul.f32 1.0, %v2538
    %v2540 = vrcp.pop %v2479
    %v2541 = vmul.f32 %v2479, %v2540
    %v2542 = vsub.f32 1.0, %v2541
    %v2543 = vmul.f32 %v2540, %v2542
    %v2544 = vadd.f32 %v2540, %v2543
    %vm2545 = vweird.f32 %v2479
    %vm2546 = vweird.f32 %v2540
    %vm2547 = vmor %vm2545, %vm2546
    %v2548 = vsel %vm2547, %v2540, %v2544
    %v2549 = vand.u32 2147483647, %v2479
    %vm2550 = vcmp.eq.f32.partialorder %v2549, 8.507059e+37
    %v2551 = vand.u32 %v2479, 2147483648
    %v2552 = vor.u32 1.1754944e-38, %v2551
    %v2553 = vsel %vm2550, %v2552, %v2548
    %v2554 = vmul.f32 1.0, %v2553
    %v2555 = vld [vmem:[#allocation2 + $0x1e8] sm:$0xff]
    %v2556 = vld [vmem:[#allocation2 + $0x200] sm:$0xff]
    %v2557 = vld [vmem:[#allocation2 + $0x218] sm:$0xff]
    %v2558 = vld [vmem:[#allocation2 + $0x230] sm:$0xff]
    %v2559 = vld [vmem:[#allocation2 + $0x248] sm:$0xff]
    %v2560 = vadd.f32 %v2555, %v2404
    %v2561 = vadd.f32 %v2556, %v2407
    %v2562 = vadd.f32 %v2557, %v2410
    %v2563 = vadd.f32 %v2558, %v2413
    %v2564 = vadd.f32 %v2559, %v2416
    %v2565 = vxor.u32 %v2560, 2147483648
    %v2566 = vxor.u32 %v2561, 2147483648
    %v2567 = vxor.u32 %v2562, 2147483648
    %v2568 = vxor.u32 %v2563, 2147483648
    %v2569 = vxor.u32 %v2564, 2147483648
    %v2570 = vmul.f32 %v2565, 1.442695
    %v2571 = vpow.pop %v2570
    %v2572 = vmul.f32 %v2566, 1.442695
    %v2573 = vpow.pop %v2572
    %v2574 = vmul.f32 %v2567, 1.442695
    %v2575 = vpow.pop %v2574
    %v2576 = vmul.f32 %v2568, 1.442695
    %v2577 = vpow.pop %v2576
    %v2578 = vmul.f32 %v2569, 1.442695
    %v2579 = vpow.pop %v2578
    %v2580 = vadd.f32 %v2571, 1.0
    %v2581 = vadd.f32 %v2573, 1.0
    %v2582 = vadd.f32 %v2575, 1.0
    %v2583 = vadd.f32 %v2577, 1.0
    %v2584 = vadd.f32 %v2579, 1.0
    %v2585 = vrcp.pop %v2580
    %v2586 = vmul.f32 %v2580, %v2585
    %v2587 = vsub.f32 1.0, %v2586
    %v2588 = vmul.f32 %v2585, %v2587
    %v2589 = vadd.f32 %v2585, %v2588
    %vm2590 = vweird.f32 %v2580
    %vm2591 = vweird.f32 %v2585
    %vm2592 = vmor %vm2590, %vm2591
    %v2593 = vsel %vm2592, %v2585, %v2589
    %v2594 = vand.u32 2147483647, %v2580
    %vm2595 = vcmp.eq.f32.partialorder %v2594, 8.507059e+37
    %v2596 = vand.u32 %v2580, 2147483648
    %v2597 = vor.u32 1.1754944e-38, %v2596
    %v2598 = vsel %vm2595, %v2597, %v2593
    %v2599 = vmul.f32 1.0, %v2598
    %v2600 = vrcp.pop %v2581
    %v2601 = vmul.f32 %v2581, %v2600
    %v2602 = vsub.f32 1.0, %v2601
    %v2603 = vmul.f32 %v2600, %v2602
    %v2604 = vadd.f32 %v2600, %v2603
    %vm2605 = vweird.f32 %v2581
    %vm2606 = vweird.f32 %v2600
    %vm2607 = vmor %vm2605, %vm2606
    %v2608 = vsel %vm2607, %v2600, %v2604
    %v2609 = vand.u32 2147483647, %v2581
    %vm2610 = vcmp.eq.f32.partialorder %v2609, 8.507059e+37
    %v2611 = vand.u32 %v2581, 2147483648
    %v2612 = vor.u32 1.1754944e-38, %v2611
    %v2613 = vsel %vm2610, %v2612, %v2608
    %v2614 = vmul.f32 1.0, %v2613
    %v2615 = vrcp.pop %v2582
    %v2616 = vmul.f32 %v2582, %v2615
    %v2617 = vsub.f32 1.0, %v2616
    %v2618 = vmul.f32 %v2615, %v2617
    %v2619 = vadd.f32 %v2615, %v2618
    %vm2620 = vweird.f32 %v2582
    %vm2621 = vweird.f32 %v2615
    %vm2622 = vmor %vm2620, %vm2621
    %v2623 = vsel %vm2622, %v2615, %v2619
    %v2624 = vand.u32 2147483647, %v2582
    %vm2625 = vcmp.eq.f32.partialorder %v2624, 8.507059e+37
    %v2626 = vand.u32 %v2582, 2147483648
    %v2627 = vor.u32 1.1754944e-38, %v2626
    %v2628 = vsel %vm2625, %v2627, %v2623
    %v2629 = vmul.f32 1.0, %v2628
    %v2630 = vrcp.pop %v2583
    %v2631 = vmul.f32 %v2583, %v2630
    %v2632 = vsub.f32 1.0, %v2631
    %v2633 = vmul.f32 %v2630, %v2632
    %v2634 = vadd.f32 %v2630, %v2633
    %vm2635 = vweird.f32 %v2583
    %vm2636 = vweird.f32 %v2630
    %vm2637 = vmor %vm2635, %vm2636
    %v2638 = vsel %vm2637, %v2630, %v2634
    %v2639 = vand.u32 2147483647, %v2583
    %vm2640 = vcmp.eq.f32.partialorder %v2639, 8.507059e+37
    %v2641 = vand.u32 %v2583, 2147483648
    %v2642 = vor.u32 1.1754944e-38, %v2641
    %v2643 = vsel %vm2640, %v2642, %v2638
    %v2644 = vmul.f32 1.0, %v2643
    %v2645 = vrcp.pop %v2584
    %v2646 = vmul.f32 %v2584, %v2645
    %v2647 = vsub.f32 1.0, %v2646
    %v2648 = vmul.f32 %v2645, %v2647
    %v2649 = vadd.f32 %v2645, %v2648
    %vm2650 = vweird.f32 %v2584
    %vm2651 = vweird.f32 %v2645
    %vm2652 = vmor %vm2650, %vm2651
    %v2653 = vsel %vm2652, %v2645, %v2649
    %v2654 = vand.u32 2147483647, %v2584
    %vm2655 = vcmp.eq.f32.partialorder %v2654, 8.507059e+37
    %v2656 = vand.u32 %v2584, 2147483648
    %v2657 = vor.u32 1.1754944e-38, %v2656
    %v2658 = vsel %vm2655, %v2657, %v2653
    %v2659 = vmul.f32 1.0, %v2658
    %v2660 = vld [vmem:[#allocation2 + $0x1f0] sm:$0xff]
    %v2661 = vld [vmem:[#allocation2 + $0x208] sm:$0xff]
    %v2662 = vld [vmem:[#allocation2 + $0x220] sm:$0xff]
    %v2663 = vld [vmem:[#allocation2 + $0x238] sm:$0xff]
    %v2664 = vld [vmem:[#allocation2 + $0x250] sm:$0xff]
    %v2665 = vadd.f32 %v2436, %v1220
    %v2666 = vadd.f32 %v2439, %v1220
    %v2667 = vadd.f32 %v2442, %v1220
    %v2668 = vadd.f32 %v2445, %v1220
    %v2669 = vadd.f32 %v2448, %v1220
    %v2670 = vmul.f32 %v2494, %v2665
    %v2671 = vmul.f32 %v2509, %v2666
    %v2672 = vmul.f32 %v2524, %v2667
    %v2673 = vmul.f32 %v2539, %v2668
    %v2674 = vmul.f32 %v2554, %v2669
    %v2675 = vadd.f32 %v2660, %v2670
    %v2676 = vadd.f32 %v2661, %v2671
    %v2677 = vadd.f32 %v2662, %v2672
    %v2678 = vadd.f32 %v2663, %v2673
    %v2679 = vadd.f32 %v2664, %v2674
    %v2680 = vtanh.pop %v2675
    %v2681 = vtanh.pop %v2676
    %v2682 = vtanh.pop %v2677
    %v2683 = vtanh.pop %v2678
    %v2684 = vtanh.pop %v2679
    %v2685 = vsub.f32 %v2334, %v2680
    %v2686 = vsub.f32 %v2335, %v2681
    %v2687 = vsub.f32 %v2336, %v2682
    %v2688 = vsub.f32 %v2337, %v2683
    %v2689 = vsub.f32 %v2338, %v2684
    %v2690 = vmul.f32 %v2599, %v2685
    %v2691 = vmul.f32 %v2614, %v2686
    %v2692 = vmul.f32 %v2629, %v2687
    %v2693 = vmul.f32 %v2644, %v2688
    %v2694 = vmul.f32 %v2659, %v2689
    %v2695 = vadd.f32 %v2680, %v2690
    %v2696 = vadd.f32 %v2681, %v2691
    %v2697 = vadd.f32 %v2682, %v2692
    %v2698 = vadd.f32 %v2683, %v2693
    %v2699 = vadd.f32 %v2684, %v2694
    %v2701 = vsel %vm905, %v2695, 0
    %v2704 = vsel %vm905, %v2696, 0
    %v2707 = vsel %vm905, %v2697, 0
    %v2710 = vsel %vm905, %v2698, 0
    %v2713 = vsel %vm905, %v2699, 0
    %2715 = vmatpush.msra.mxu0 0.0
    %2716 = vmatpush.msra.mxu0 0.0
    %2717 = vmatpush.msra.mxu0 0.0
    %2718 = vmatpush.msra.mxu0 0.0
    %2719 = vmatpush.msra.mxu0 0.0
    %2720 = vmatpush.msra.mxu0 0.0
    %2721 = vmatpush.msra.mxu0 0.0
    %2722 = vmatpush.msra.mxu0 0.0
    %2723 = vmatpush.msra.mxu0 0.0
    %2724 = vmatpush.msra.mxu0 0.0
    %2725 = vmatpush.msra.mxu0 0.0
    %2726 = vmatpush.msra.mxu0 0.0
    %2727 = vmatpush.msra.mxu0 %v901
    %2728 = vmatpush.msra.mxu0 %v898
    %2729 = vmatpush.msra.mxu0 %v895
    %2730 = vmatpush.msra.mxu0 %v892
    %2731 = vmatmul.f32.gmra.mxu0 %v2701
    %v2732 = vpop.f32.mrf.mxu0
    %v2733 = vadd.f32 0.0, %v2732
    %2734 = vmatmul.f32.gmra.mxu0 %v2704
    %v2735 = vpop.f32.mrf.mxu0
    %v2736 = vadd.f32 0.0, %v2735
    %2737 = vmatmul.f32.gmra.mxu0 %v2707
    %v2738 = vpop.f32.mrf.mxu0
    %v2739 = vadd.f32 0.0, %v2738
    %2740 = vmatmul.f32.gmra.mxu0 %v2710
    %v2741 = vpop.f32.mrf.mxu0
    %v2742 = vadd.f32 0.0, %v2741
    %2743 = vmatmul.f32.gmra.mxu0 %v2713
    %v2744 = vpop.f32.mrf.mxu0
    %v2745 = vadd.f32 0.0, %v2744
    %2746 = vdwg.mxu0
    %2747 = vmatpush.msra.mxu0 0.0
    %2748 = vmatpush.msra.mxu0 0.0
    %2749 = vmatpush.msra.mxu0 0.0
    %2750 = vmatpush.msra.mxu0 0.0
    %2751 = vmatpush.msra.mxu0 0.0
    %2752 = vmatpush.msra.mxu0 0.0
    %2753 = vmatpush.msra.mxu0 0.0
    %2754 = vmatpush.msra.mxu0 0.0
    %2755 = vmatpush.msra.mxu0 0.0
    %2756 = vmatpush.msra.mxu0 0.0
    %2757 = vmatpush.msra.mxu0 0.0
    %2758 = vmatpush.msra.mxu0 0.0
    %2759 = vmatpush.msra.mxu0 %v902
    %2760 = vmatpush.msra.mxu0 %v899
    %2761 = vmatpush.msra.mxu0 %v896
    %2762 = vmatpush.msra.mxu0 %v893
    %2763 = vmatmul.f32.gmra.mxu0 %v2701
    %v2764 = vpop.f32.mrf.mxu0
    %v2765 = vadd.f32 0.0, %v2764
    %2766 = vmatmul.f32.gmra.mxu0 %v2704
    %v2767 = vpop.f32.mrf.mxu0
    %v2768 = vadd.f32 0.0, %v2767
    %2769 = vmatmul.f32.gmra.mxu0 %v2707
    %v2770 = vpop.f32.mrf.mxu0
    %v2771 = vadd.f32 0.0, %v2770
    %2772 = vmatmul.f32.gmra.mxu0 %v2710
    %v2773 = vpop.f32.mrf.mxu0
    %v2774 = vadd.f32 0.0, %v2773
    %2775 = vmatmul.f32.gmra.mxu0 %v2713
    %v2776 = vpop.f32.mrf.mxu0
    %v2777 = vadd.f32 0.0, %v2776
    %2778 = vdwg.mxu0
    %2779 = vmatpush.msra.mxu0 0.0
    %2780 = vmatpush.msra.mxu0 0.0
    %2781 = vmatpush.msra.mxu0 0.0
    %2782 = vmatpush.msra.mxu0 0.0
    %2783 = vmatpush.msra.mxu0 0.0
    %2784 = vmatpush.msra.mxu0 0.0
    %2785 = vmatpush.msra.mxu0 0.0
    %2786 = vmatpush.msra.mxu0 0.0
    %2787 = vmatpush.msra.mxu0 0.0
    %2788 = vmatpush.msra.mxu0 0.0
    %2789 = vmatpush.msra.mxu0 0.0
    %2790 = vmatpush.msra.mxu0 0.0
    %2791 = vmatpush.msra.mxu0 %v903
    %2792 = vmatpush.msra.mxu0 %v900
    %2793 = vmatpush.msra.mxu0 %v897
    %2794 = vmatpush.msra.mxu0 %v894
    %2795 = vmatmul.f32.gmra.mxu0 %v2701
    %v2796 = vpop.f32.mrf.mxu0
    %v2797 = vadd.f32 0.0, %v2796
    %2798 = vmatmul.f32.gmra.mxu0 %v2704
    %v2799 = vpop.f32.mrf.mxu0
    %v2800 = vadd.f32 0.0, %v2799
    %2801 = vmatmul.f32.gmra.mxu0 %v2707
    %v2802 = vpop.f32.mrf.mxu0
    %v2803 = vadd.f32 0.0, %v2802
    %2804 = vmatmul.f32.gmra.mxu0 %v2710
    %v2805 = vpop.f32.mrf.mxu0
    %v2806 = vadd.f32 0.0, %v2805
    %2807 = vmatmul.f32.gmra.mxu0 %v2713
    %v2808 = vpop.f32.mrf.mxu0
    %v2809 = vadd.f32 0.0, %v2808
    %2810 = vdwg.mxu0
    %v2811 = vld [vmem:[#allocation2 + $0x258] sm:$0xff]
    %v2812 = vld [vmem:[#allocation2 + $0x270] sm:$0xff]
    %v2813 = vld [vmem:[#allocation2 + $0x288] sm:$0xff]
    %v2814 = vld [vmem:[#allocation2 + $0x2a0] sm:$0xff]
    %v2815 = vld [vmem:[#allocation2 + $0x2b8] sm:$0xff]
    %v2816 = vadd.f32 %v2811, %v2733
    %v2817 = vadd.f32 %v2812, %v2736
    %v2818 = vadd.f32 %v2813, %v2739
    %v2819 = vadd.f32 %v2814, %v2742
    %v2820 = vadd.f32 %v2815, %v2745
    %v2821 = vxor.u32 %v2816, 2147483648
    %v2822 = vxor.u32 %v2817, 2147483648
    %v2823 = vxor.u32 %v2818, 2147483648
    %v2824 = vxor.u32 %v2819, 2147483648
    %v2825 = vxor.u32 %v2820, 2147483648
    %v2826 = vmul.f32 %v2821, 1.442695
    %v2827 = vpow.pop %v2826
    %v2828 = vmul.f32 %v2822, 1.442695
    %v2829 = vpow.pop %v2828
    %v2830 = vmul.f32 %v2823, 1.442695
    %v2831 = vpow.pop %v2830
    %v2832 = vmul.f32 %v2824, 1.442695
    %v2833 = vpow.pop %v2832
    %v2834 = vmul.f32 %v2825, 1.442695
    %v2835 = vpow.pop %v2834
    %v2836 = vadd.f32 %v2827, 1.0
    %v2837 = vadd.f32 %v2829, 1.0
    %v2838 = vadd.f32 %v2831, 1.0
    %v2839 = vadd.f32 %v2833, 1.0
    %v2840 = vadd.f32 %v2835, 1.0
    %v2841 = vrcp.pop %v2836
    %v2842 = vmul.f32 %v2836, %v2841
    %v2843 = vsub.f32 1.0, %v2842
    %v2844 = vmul.f32 %v2841, %v2843
    %v2845 = vadd.f32 %v2841, %v2844
    %vm2846 = vweird.f32 %v2836
    %vm2847 = vweird.f32 %v2841
    %vm2848 = vmor %vm2846, %vm2847
    %v2849 = vsel %vm2848, %v2841, %v2845
    %v2850 = vand.u32 2147483647, %v2836
    %vm2851 = vcmp.eq.f32.partialorder %v2850, 8.507059e+37
    %v2852 = vand.u32 %v2836, 2147483648
    %v2853 = vor.u32 1.1754944e-38, %v2852
    %v2854 = vsel %vm2851, %v2853, %v2849
    %v2855 = vmul.f32 1.0, %v2854
    %v2856 = vrcp.pop %v2837
    %v2857 = vmul.f32 %v2837, %v2856
    %v2858 = vsub.f32 1.0, %v2857
    %v2859 = vmul.f32 %v2856, %v2858
    %v2860 = vadd.f32 %v2856, %v2859
    %vm2861 = vweird.f32 %v2837
    %vm2862 = vweird.f32 %v2856
    %vm2863 = vmor %vm2861, %vm2862
    %v2864 = vsel %vm2863, %v2856, %v2860
    %v2865 = vand.u32 2147483647, %v2837
    %vm2866 = vcmp.eq.f32.partialorder %v2865, 8.507059e+37
    %v2867 = vand.u32 %v2837, 2147483648
    %v2868 = vor.u32 1.1754944e-38, %v2867
    %v2869 = vsel %vm2866, %v2868, %v2864
    %v2870 = vmul.f32 1.0, %v2869
    %v2871 = vrcp.pop %v2838
    %v2872 = vmul.f32 %v2838, %v2871
    %v2873 = vsub.f32 1.0, %v2872
    %v2874 = vmul.f32 %v2871, %v2873
    %v2875 = vadd.f32 %v2871, %v2874
    %vm2876 = vweird.f32 %v2838
    %vm2877 = vweird.f32 %v2871
    %vm2878 = vmor %vm2876, %vm2877
    %v2879 = vsel %vm2878, %v2871, %v2875
    %v2880 = vand.u32 2147483647, %v2838
    %vm2881 = vcmp.eq.f32.partialorder %v2880, 8.507059e+37
    %v2882 = vand.u32 %v2838, 2147483648
    %v2883 = vor.u32 1.1754944e-38, %v2882
    %v2884 = vsel %vm2881, %v2883, %v2879
    %v2885 = vmul.f32 1.0, %v2884
    %v2886 = vrcp.pop %v2839
    %v2887 = vmul.f32 %v2839, %v2886
    %v2888 = vsub.f32 1.0, %v2887
    %v2889 = vmul.f32 %v2886, %v2888
    %v2890 = vadd.f32 %v2886, %v2889
    %vm2891 = vweird.f32 %v2839
    %vm2892 = vweird.f32 %v2886
    %vm2893 = vmor %vm2891, %vm2892
    %v2894 = vsel %vm2893, %v2886, %v2890
    %v2895 = vand.u32 2147483647, %v2839
    %vm2896 = vcmp.eq.f32.partialorder %v2895, 8.507059e+37
    %v2897 = vand.u32 %v2839, 2147483648
    %v2898 = vor.u32 1.1754944e-38, %v2897
    %v2899 = vsel %vm2896, %v2898, %v2894
    %v2900 = vmul.f32 1.0, %v2899
    %v2901 = vrcp.pop %v2840
    %v2902 = vmul.f32 %v2840, %v2901
    %v2903 = vsub.f32 1.0, %v2902
    %v2904 = vmul.f32 %v2901, %v2903
    %v2905 = vadd.f32 %v2901, %v2904
    %vm2906 = vweird.f32 %v2840
    %vm2907 = vweird.f32 %v2901
    %vm2908 = vmor %vm2906, %vm2907
    %v2909 = vsel %vm2908, %v2901, %v2905
    %v2910 = vand.u32 2147483647, %v2840
    %vm2911 = vcmp.eq.f32.partialorder %v2910, 8.507059e+37
    %v2912 = vand.u32 %v2840, 2147483648
    %v2913 = vor.u32 1.1754944e-38, %v2912
    %v2914 = vsel %vm2911, %v2913, %v2909
    %v2915 = vmul.f32 1.0, %v2914
    %v2916 = vld [vmem:[#allocation2 + $0x260] sm:$0xff]
    %v2917 = vld [vmem:[#allocation2 + $0x278] sm:$0xff]
    %v2918 = vld [vmem:[#allocation2 + $0x290] sm:$0xff]
    %v2919 = vld [vmem:[#allocation2 + $0x2a8] sm:$0xff]
    %v2920 = vld [vmem:[#allocation2 + $0x2c0] sm:$0xff]
    %v2921 = vadd.f32 %v2916, %v2765
    %v2922 = vadd.f32 %v2917, %v2768
    %v2923 = vadd.f32 %v2918, %v2771
    %v2924 = vadd.f32 %v2919, %v2774
    %v2925 = vadd.f32 %v2920, %v2777
    %v2926 = vxor.u32 %v2921, 2147483648
    %v2927 = vxor.u32 %v2922, 2147483648
    %v2928 = vxor.u32 %v2923, 2147483648
    %v2929 = vxor.u32 %v2924, 2147483648
    %v2930 = vxor.u32 %v2925, 2147483648
    %v2931 = vmul.f32 %v2926, 1.442695
    %v2932 = vpow.pop %v2931
    %v2933 = vmul.f32 %v2927, 1.442695
    %v2934 = vpow.pop %v2933
    %v2935 = vmul.f32 %v2928, 1.442695
    %v2936 = vpow.pop %v2935
    %v2937 = vmul.f32 %v2929, 1.442695
    %v2938 = vpow.pop %v2937
    %v2939 = vmul.f32 %v2930, 1.442695
    %v2940 = vpow.pop %v2939
    %v2941 = vadd.f32 %v2932, 1.0
    %v2942 = vadd.f32 %v2934, 1.0
    %v2943 = vadd.f32 %v2936, 1.0
    %v2944 = vadd.f32 %v2938, 1.0
    %v2945 = vadd.f32 %v2940, 1.0
    %v2946 = vrcp.pop %v2941
    %v2947 = vmul.f32 %v2941, %v2946
    %v2948 = vsub.f32 1.0, %v2947
    %v2949 = vmul.f32 %v2946, %v2948
    %v2950 = vadd.f32 %v2946, %v2949
    %vm2951 = vweird.f32 %v2941
    %vm2952 = vweird.f32 %v2946
    %vm2953 = vmor %vm2951, %vm2952
    %v2954 = vsel %vm2953, %v2946, %v2950
    %v2955 = vand.u32 2147483647, %v2941
    %vm2956 = vcmp.eq.f32.partialorder %v2955, 8.507059e+37
    %v2957 = vand.u32 %v2941, 2147483648
    %v2958 = vor.u32 1.1754944e-38, %v2957
    %v2959 = vsel %vm2956, %v2958, %v2954
    %v2960 = vmul.f32 1.0, %v2959
    %v2961 = vrcp.pop %v2942
    %v2962 = vmul.f32 %v2942, %v2961
    %v2963 = vsub.f32 1.0, %v2962
    %v2964 = vmul.f32 %v2961, %v2963
    %v2965 = vadd.f32 %v2961, %v2964
    %vm2966 = vweird.f32 %v2942
    %vm2967 = vweird.f32 %v2961
    %vm2968 = vmor %vm2966, %vm2967
    %v2969 = vsel %vm2968, %v2961, %v2965
    %v2970 = vand.u32 2147483647, %v2942
    %vm2971 = vcmp.eq.f32.partialorder %v2970, 8.507059e+37
    %v2972 = vand.u32 %v2942, 2147483648
    %v2973 = vor.u32 1.1754944e-38, %v2972
    %v2974 = vsel %vm2971, %v2973, %v2969
    %v2975 = vmul.f32 1.0, %v2974
    %v2976 = vrcp.pop %v2943
    %v2977 = vmul.f32 %v2943, %v2976
    %v2978 = vsub.f32 1.0, %v2977
    %v2979 = vmul.f32 %v2976, %v2978
    %v2980 = vadd.f32 %v2976, %v2979
    %vm2981 = vweird.f32 %v2943
    %vm2982 = vweird.f32 %v2976
    %vm2983 = vmor %vm2981, %vm2982
    %v2984 = vsel %vm2983, %v2976, %v2980
    %v2985 = vand.u32 2147483647, %v2943
    %vm2986 = vcmp.eq.f32.partialorder %v2985, 8.507059e+37
    %v2987 = vand.u32 %v2943, 2147483648
    %v2988 = vor.u32 1.1754944e-38, %v2987
    %v2989 = vsel %vm2986, %v2988, %v2984
    %v2990 = vmul.f32 1.0, %v2989
    %v2991 = vrcp.pop %v2944
    %v2992 = vmul.f32 %v2944, %v2991
    %v2993 = vsub.f32 1.0, %v2992
    %v2994 = vmul.f32 %v2991, %v2993
    %v2995 = vadd.f32 %v2991, %v2994
    %vm2996 = vweird.f32 %v2944
    %vm2997 = vweird.f32 %v2991
    %vm2998 = vmor %vm2996, %vm2997
    %v2999 = vsel %vm2998, %v2991, %v2995
    %v3000 = vand.u32 2147483647, %v2944
    %vm3001 = vcmp.eq.f32.partialorder %v3000, 8.507059e+37
    %v3002 = vand.u32 %v2944, 2147483648
    %v3003 = vor.u32 1.1754944e-38, %v3002
    %v3004 = vsel %vm3001, %v3003, %v2999
    %v3005 = vmul.f32 1.0, %v3004
    %v3006 = vrcp.pop %v2945
    %v3007 = vmul.f32 %v2945, %v3006
    %v3008 = vsub.f32 1.0, %v3007
    %v3009 = vmul.f32 %v3006, %v3008
    %v3010 = vadd.f32 %v3006, %v3009
    %vm3011 = vweird.f32 %v2945
    %vm3012 = vweird.f32 %v3006
    %vm3013 = vmor %vm3011, %vm3012
    %v3014 = vsel %vm3013, %v3006, %v3010
    %v3015 = vand.u32 2147483647, %v2945
    %vm3016 = vcmp.eq.f32.partialorder %v3015, 8.507059e+37
    %v3017 = vand.u32 %v2945, 2147483648
    %v3018 = vor.u32 1.1754944e-38, %v3017
    %v3019 = vsel %vm3016, %v3018, %v3014
    %v3020 = vmul.f32 1.0, %v3019
    %v3021 = vld [vmem:[#allocation2 + $0x268] sm:$0xff]
    %v3022 = vld [vmem:[#allocation2 + $0x280] sm:$0xff]
    %v3023 = vld [vmem:[#allocation2 + $0x298] sm:$0xff]
    %v3024 = vld [vmem:[#allocation2 + $0x2b0] sm:$0xff]
    %v3025 = vld [vmem:[#allocation2 + $0x2c8] sm:$0xff]
    %v3026 = vadd.f32 %v2797, %v1220
    %v3027 = vadd.f32 %v2800, %v1220
    %v3028 = vadd.f32 %v2803, %v1220
    %v3029 = vadd.f32 %v2806, %v1220
    %v3030 = vadd.f32 %v2809, %v1220
    %v3031 = vmul.f32 %v2855, %v3026
    %v3032 = vmul.f32 %v2870, %v3027
    %v3033 = vmul.f32 %v2885, %v3028
    %v3034 = vmul.f32 %v2900, %v3029
    %v3035 = vmul.f32 %v2915, %v3030
    %v3036 = vadd.f32 %v3021, %v3031
    %v3037 = vadd.f32 %v3022, %v3032
    %v3038 = vadd.f32 %v3023, %v3033
    %v3039 = vadd.f32 %v3024, %v3034
    %v3040 = vadd.f32 %v3025, %v3035
    %v3041 = vtanh.pop %v3036
    %v3042 = vtanh.pop %v3037
    %v3043 = vtanh.pop %v3038
    %v3044 = vtanh.pop %v3039
    %v3045 = vtanh.pop %v3040
    %v3046 = vsub.f32 %v2695, %v3041
    %v3047 = vsub.f32 %v2696, %v3042
    %v3048 = vsub.f32 %v2697, %v3043
    %v3049 = vsub.f32 %v2698, %v3044
    %v3050 = vsub.f32 %v2699, %v3045
    %v3051 = vmul.f32 %v2960, %v3046
    %v3052 = vmul.f32 %v2975, %v3047
    %v3053 = vmul.f32 %v2990, %v3048
    %v3054 = vmul.f32 %v3005, %v3049
    %v3055 = vmul.f32 %v3020, %v3050
    %v3056 = vadd.f32 %v3041, %v3051
    %v3057 = vadd.f32 %v3042, %v3052
    %v3058 = vadd.f32 %v3043, %v3053
    %v3059 = vadd.f32 %v3044, %v3054
    %v3060 = vadd.f32 %v3045, %v3055
    %v3062 = vsel %vm905, %v3056, 0
    %v3065 = vsel %vm905, %v3057, 0
    %v3068 = vsel %vm905, %v3058, 0
    %v3071 = vsel %vm905, %v3059, 0
    %v3074 = vsel %vm905, %v3060, 0
    %3076 = vmatpush.msra.mxu0 0.0
    %3077 = vmatpush.msra.mxu0 0.0
    %3078 = vmatpush.msra.mxu0 0.0
    %3079 = vmatpush.msra.mxu0 0.0
    %3080 = vmatpush.msra.mxu0 0.0
    %3081 = vmatpush.msra.mxu0 0.0
    %3082 = vmatpush.msra.mxu0 0.0
    %3083 = vmatpush.msra.mxu0 0.0
    %3084 = vmatpush.msra.mxu0 0.0
    %3085 = vmatpush.msra.mxu0 0.0
    %3086 = vmatpush.msra.mxu0 0.0
    %3087 = vmatpush.msra.mxu0 0.0
    %3088 = vmatpush.msra.mxu0 %v901
    %3089 = vmatpush.msra.mxu0 %v898
    %3090 = vmatpush.msra.mxu0 %v895
    %3091 = vmatpush.msra.mxu0 %v892
    %3092 = vmatmul.f32.gmra.mxu0 %v3062
    %v3093 = vpop.f32.mrf.mxu0
    %v3094 = vadd.f32 0.0, %v3093
    %3095 = vmatmul.f32.gmra.mxu0 %v3065
    %v3096 = vpop.f32.mrf.mxu0
    %v3097 = vadd.f32 0.0, %v3096
    %3098 = vmatmul.f32.gmra.mxu0 %v3068
    %v3099 = vpop.f32.mrf.mxu0
    %v3100 = vadd.f32 0.0, %v3099
    %3101 = vmatmul.f32.gmra.mxu0 %v3071
    %v3102 = vpop.f32.mrf.mxu0
    %v3103 = vadd.f32 0.0, %v3102
    %3104 = vmatmul.f32.gmra.mxu0 %v3074
    %v3105 = vpop.f32.mrf.mxu0
    %v3106 = vadd.f32 0.0, %v3105
    %3107 = vdwg.mxu0
    %3108 = vmatpush.msra.mxu0 0.0
    %3109 = vmatpush.msra.mxu0 0.0
    %3110 = vmatpush.msra.mxu0 0.0
    %3111 = vmatpush.msra.mxu0 0.0
    %3112 = vmatpush.msra.mxu0 0.0
    %3113 = vmatpush.msra.mxu0 0.0
    %3114 = vmatpush.msra.mxu0 0.0
    %3115 = vmatpush.msra.mxu0 0.0
    %3116 = vmatpush.msra.mxu0 0.0
    %3117 = vmatpush.msra.mxu0 0.0
    %3118 = vmatpush.msra.mxu0 0.0
    %3119 = vmatpush.msra.mxu0 0.0
    %3120 = vmatpush.msra.mxu0 %v902
    %3121 = vmatpush.msra.mxu0 %v899
    %3122 = vmatpush.msra.mxu0 %v896
    %3123 = vmatpush.msra.mxu0 %v893
    %3124 = vmatmul.f32.gmra.mxu0 %v3062
    %v3125 = vpop.f32.mrf.mxu0
    %v3126 = vadd.f32 0.0, %v3125
    %3127 = vmatmul.f32.gmra.mxu0 %v3065
    %v3128 = vpop.f32.mrf.mxu0
    %v3129 = vadd.f32 0.0, %v3128
    %3130 = vmatmul.f32.gmra.mxu0 %v3068
    %v3131 = vpop.f32.mrf.mxu0
    %v3132 = vadd.f32 0.0, %v3131
    %3133 = vmatmul.f32.gmra.mxu0 %v3071
    %v3134 = vpop.f32.mrf.mxu0
    %v3135 = vadd.f32 0.0, %v3134
    %3136 = vmatmul.f32.gmra.mxu0 %v3074
    %v3137 = vpop.f32.mrf.mxu0
    %v3138 = vadd.f32 0.0, %v3137
    %3139 = vdwg.mxu0
    %3140 = vmatpush.msra.mxu0 0.0
    %3141 = vmatpush.msra.mxu0 0.0
    %3142 = vmatpush.msra.mxu0 0.0
    %3143 = vmatpush.msra.mxu0 0.0
    %3144 = vmatpush.msra.mxu0 0.0
    %3145 = vmatpush.msra.mxu0 0.0
    %3146 = vmatpush.msra.mxu0 0.0
    %3147 = vmatpush.msra.mxu0 0.0
    %3148 = vmatpush.msra.mxu0 0.0
    %3149 = vmatpush.msra.mxu0 0.0
    %3150 = vmatpush.msra.mxu0 0.0
    %3151 = vmatpush.msra.mxu0 0.0
    %3152 = vmatpush.msra.mxu0 %v903
    %3153 = vmatpush.msra.mxu0 %v900
    %3154 = vmatpush.msra.mxu0 %v897
    %3155 = vmatpush.msra.mxu0 %v894
    %3156 = vmatmul.f32.gmra.mxu0 %v3062
    %v3157 = vpop.f32.mrf.mxu0
    %v3158 = vadd.f32 0.0, %v3157
    %3159 = vmatmul.f32.gmra.mxu0 %v3065
    %v3160 = vpop.f32.mrf.mxu0
    %v3161 = vadd.f32 0.0, %v3160
    %3162 = vmatmul.f32.gmra.mxu0 %v3068
    %v3163 = vpop.f32.mrf.mxu0
    %v3164 = vadd.f32 0.0, %v3163
    %3165 = vmatmul.f32.gmra.mxu0 %v3071
    %v3166 = vpop.f32.mrf.mxu0
    %v3167 = vadd.f32 0.0, %v3166
    %3168 = vmatmul.f32.gmra.mxu0 %v3074
    %v3169 = vpop.f32.mrf.mxu0
    %v3170 = vadd.f32 0.0, %v3169
    %3171 = vdwg.mxu0
    %v3172 = vld [vmem:[#allocation2 + $0x2d0] sm:$0xff]
    %v3173 = vld [vmem:[#allocation2 + $0x2e8] sm:$0xff]
    %v3174 = vld [vmem:[#allocation2 + $0x300] sm:$0xff]
    %v3175 = vld [vmem:[#allocation2 + $0x318] sm:$0xff]
    %v3176 = vld [vmem:[#allocation2 + $0x330] sm:$0xff]
    %v3177 = vadd.f32 %v3172, %v3094
    %v3178 = vadd.f32 %v3173, %v3097
    %v3179 = vadd.f32 %v3174, %v3100
    %v3180 = vadd.f32 %v3175, %v3103
    %v3181 = vadd.f32 %v3176, %v3106
    %v3182 = vxor.u32 %v3177, 2147483648
    %v3183 = vxor.u32 %v3178, 2147483648
    %v3184 = vxor.u32 %v3179, 2147483648
    %v3185 = vxor.u32 %v3180, 2147483648
    %v3186 = vxor.u32 %v3181, 2147483648
    %v3187 = vmul.f32 %v3182, 1.442695
    %v3188 = vpow.pop %v3187
    %v3189 = vmul.f32 %v3183, 1.442695
    %v3190 = vpow.pop %v3189
    %v3191 = vmul.f32 %v3184, 1.442695
    %v3192 = vpow.pop %v3191
    %v3193 = vmul.f32 %v3185, 1.442695
    %v3194 = vpow.pop %v3193
    %v3195 = vmul.f32 %v3186, 1.442695
    %v3196 = vpow.pop %v3195
    %v3197 = vadd.f32 %v3188, 1.0
    %v3198 = vadd.f32 %v3190, 1.0
    %v3199 = vadd.f32 %v3192, 1.0
    %v3200 = vadd.f32 %v3194, 1.0
    %v3201 = vadd.f32 %v3196, 1.0
    %v3202 = vrcp.pop %v3197
    %v3203 = vmul.f32 %v3197, %v3202
    %v3204 = vsub.f32 1.0, %v3203
    %v3205 = vmul.f32 %v3202, %v3204
    %v3206 = vadd.f32 %v3202, %v3205
    %vm3207 = vweird.f32 %v3197
    %vm3208 = vweird.f32 %v3202
    %vm3209 = vmor %vm3207, %vm3208
    %v3210 = vsel %vm3209, %v3202, %v3206
    %v3211 = vand.u32 2147483647, %v3197
    %vm3212 = vcmp.eq.f32.partialorder %v3211, 8.507059e+37
    %v3213 = vand.u32 %v3197, 2147483648
    %v3214 = vor.u32 1.1754944e-38, %v3213
    %v3215 = vsel %vm3212, %v3214, %v3210
    %v3216 = vmul.f32 1.0, %v3215
    %v3217 = vrcp.pop %v3198
    %v3218 = vmul.f32 %v3198, %v3217
    %v3219 = vsub.f32 1.0, %v3218
    %v3220 = vmul.f32 %v3217, %v3219
    %v3221 = vadd.f32 %v3217, %v3220
    %vm3222 = vweird.f32 %v3198
    %vm3223 = vweird.f32 %v3217
    %vm3224 = vmor %vm3222, %vm3223
    %v3225 = vsel %vm3224, %v3217, %v3221
    %v3226 = vand.u32 2147483647, %v3198
    %vm3227 = vcmp.eq.f32.partialorder %v3226, 8.507059e+37
    %v3228 = vand.u32 %v3198, 2147483648
    %v3229 = vor.u32 1.1754944e-38, %v3228
    %v3230 = vsel %vm3227, %v3229, %v3225
    %v3231 = vmul.f32 1.0, %v3230
    %v3232 = vrcp.pop %v3199
    %v3233 = vmul.f32 %v3199, %v3232
    %v3234 = vsub.f32 1.0, %v3233
    %v3235 = vmul.f32 %v3232, %v3234
    %v3236 = vadd.f32 %v3232, %v3235
    %vm3237 = vweird.f32 %v3199
    %vm3238 = vweird.f32 %v3232
    %vm3239 = vmor %vm3237, %vm3238
    %v3240 = vsel %vm3239, %v3232, %v3236
    %v3241 = vand.u32 2147483647, %v3199
    %vm3242 = vcmp.eq.f32.partialorder %v3241, 8.507059e+37
    %v3243 = vand.u32 %v3199, 2147483648
    %v3244 = vor.u32 1.1754944e-38, %v3243
    %v3245 = vsel %vm3242, %v3244, %v3240
    %v3246 = vmul.f32 1.0, %v3245
    %v3247 = vrcp.pop %v3200
    %v3248 = vmul.f32 %v3200, %v3247
    %v3249 = vsub.f32 1.0, %v3248
    %v3250 = vmul.f32 %v3247, %v3249
    %v3251 = vadd.f32 %v3247, %v3250
    %vm3252 = vweird.f32 %v3200
    %vm3253 = vweird.f32 %v3247
    %vm3254 = vmor %vm3252, %vm3253
    %v3255 = vsel %vm3254, %v3247, %v3251
    %v3256 = vand.u32 2147483647, %v3200
    %vm3257 = vcmp.eq.f32.partialorder %v3256, 8.507059e+37
    %v3258 = vand.u32 %v3200, 2147483648
    %v3259 = vor.u32 1.1754944e-38, %v3258
    %v3260 = vsel %vm3257, %v3259, %v3255
    %v3261 = vmul.f32 1.0, %v3260
    %v3262 = vrcp.pop %v3201
    %v3263 = vmul.f32 %v3201, %v3262
    %v3264 = vsub.f32 1.0, %v3263
    %v3265 = vmul.f32 %v3262, %v3264
    %v3266 = vadd.f32 %v3262, %v3265
    %vm3267 = vweird.f32 %v3201
    %vm3268 = vweird.f32 %v3262
    %vm3269 = vmor %vm3267, %vm3268
    %v3270 = vsel %vm3269, %v3262, %v3266
    %v3271 = vand.u32 2147483647, %v3201
    %vm3272 = vcmp.eq.f32.partialorder %v3271, 8.507059e+37
    %v3273 = vand.u32 %v3201, 2147483648
    %v3274 = vor.u32 1.1754944e-38, %v3273
    %v3275 = vsel %vm3272, %v3274, %v3270
    %v3276 = vmul.f32 1.0, %v3275
    %v3277 = vld [vmem:[#allocation2 + $0x2d8] sm:$0xff]
    %v3278 = vld [vmem:[#allocation2 + $0x2f0] sm:$0xff]
    %v3279 = vld [vmem:[#allocation2 + $0x308] sm:$0xff]
    %v3280 = vld [vmem:[#allocation2 + $0x320] sm:$0xff]
    %v3281 = vld [vmem:[#allocation2 + $0x338] sm:$0xff]
    %v3282 = vadd.f32 %v3277, %v3126
    %v3283 = vadd.f32 %v3278, %v3129
    %v3284 = vadd.f32 %v3279, %v3132
    %v3285 = vadd.f32 %v3280, %v3135
    %v3286 = vadd.f32 %v3281, %v3138
    %v3287 = vxor.u32 %v3282, 2147483648
    %v3288 = vxor.u32 %v3283, 2147483648
    %v3289 = vxor.u32 %v3284, 2147483648
    %v3290 = vxor.u32 %v3285, 2147483648
    %v3291 = vxor.u32 %v3286, 2147483648
    %v3292 = vmul.f32 %v3287, 1.442695
    %v3293 = vpow.pop %v3292
    %v3294 = vmul.f32 %v3288, 1.442695
    %v3295 = vpow.pop %v3294
    %v3296 = vmul.f32 %v3289, 1.442695
    %v3297 = vpow.pop %v3296
    %v3298 = vmul.f32 %v3290, 1.442695
    %v3299 = vpow.pop %v3298
    %v3300 = vmul.f32 %v3291, 1.442695
    %v3301 = vpow.pop %v3300
    %v3302 = vadd.f32 %v3293, 1.0
    %v3303 = vadd.f32 %v3295, 1.0
    %v3304 = vadd.f32 %v3297, 1.0
    %v3305 = vadd.f32 %v3299, 1.0
    %v3306 = vadd.f32 %v3301, 1.0
    %v3307 = vrcp.pop %v3302
    %v3308 = vmul.f32 %v3302, %v3307
    %v3309 = vsub.f32 1.0, %v3308
    %v3310 = vmul.f32 %v3307, %v3309
    %v3311 = vadd.f32 %v3307, %v3310
    %vm3312 = vweird.f32 %v3302
    %vm3313 = vweird.f32 %v3307
    %vm3314 = vmor %vm3312, %vm3313
    %v3315 = vsel %vm3314, %v3307, %v3311
    %v3316 = vand.u32 2147483647, %v3302
    %vm3317 = vcmp.eq.f32.partialorder %v3316, 8.507059e+37
    %v3318 = vand.u32 %v3302, 2147483648
    %v3319 = vor.u32 1.1754944e-38, %v3318
    %v3320 = vsel %vm3317, %v3319, %v3315
    %v3321 = vmul.f32 1.0, %v3320
    %v3322 = vrcp.pop %v3303
    %v3323 = vmul.f32 %v3303, %v3322
    %v3324 = vsub.f32 1.0, %v3323
    %v3325 = vmul.f32 %v3322, %v3324
    %v3326 = vadd.f32 %v3322, %v3325
    %vm3327 = vweird.f32 %v3303
    %vm3328 = vweird.f32 %v3322
    %vm3329 = vmor %vm3327, %vm3328
    %v3330 = vsel %vm3329, %v3322, %v3326
    %v3331 = vand.u32 2147483647, %v3303
    %vm3332 = vcmp.eq.f32.partialorder %v3331, 8.507059e+37
    %v3333 = vand.u32 %v3303, 2147483648
    %v3334 = vor.u32 1.1754944e-38, %v3333
    %v3335 = vsel %vm3332, %v3334, %v3330
    %v3336 = vmul.f32 1.0, %v3335
    %v3337 = vrcp.pop %v3304
    %v3338 = vmul.f32 %v3304, %v3337
    %v3339 = vsub.f32 1.0, %v3338
    %v3340 = vmul.f32 %v3337, %v3339
    %v3341 = vadd.f32 %v3337, %v3340
    %vm3342 = vweird.f32 %v3304
    %vm3343 = vweird.f32 %v3337
    %vm3344 = vmor %vm3342, %vm3343
    %v3345 = vsel %vm3344, %v3337, %v3341
    %v3346 = vand.u32 2147483647, %v3304
    %vm3347 = vcmp.eq.f32.partialorder %v3346, 8.507059e+37
    %v3348 = vand.u32 %v3304, 2147483648
    %v3349 = vor.u32 1.1754944e-38, %v3348
    %v3350 = vsel %vm3347, %v3349, %v3345
    %v3351 = vmul.f32 1.0, %v3350
    %v3352 = vrcp.pop %v3305
    %v3353 = vmul.f32 %v3305, %v3352
    %v3354 = vsub.f32 1.0, %v3353
    %v3355 = vmul.f32 %v3352, %v3354
    %v3356 = vadd.f32 %v3352, %v3355
    %vm3357 = vweird.f32 %v3305
    %vm3358 = vweird.f32 %v3352
    %vm3359 = vmor %vm3357, %vm3358
    %v3360 = vsel %vm3359, %v3352, %v3356
    %v3361 = vand.u32 2147483647, %v3305
    %vm3362 = vcmp.eq.f32.partialorder %v3361, 8.507059e+37
    %v3363 = vand.u32 %v3305, 2147483648
    %v3364 = vor.u32 1.1754944e-38, %v3363
    %v3365 = vsel %vm3362, %v3364, %v3360
    %v3366 = vmul.f32 1.0, %v3365
    %v3367 = vrcp.pop %v3306
    %v3368 = vmul.f32 %v3306, %v3367
    %v3369 = vsub.f32 1.0, %v3368
    %v3370 = vmul.f32 %v3367, %v3369
    %v3371 = vadd.f32 %v3367, %v3370
    %vm3372 = vweird.f32 %v3306
    %vm3373 = vweird.f32 %v3367
    %vm3374 = vmor %vm3372, %vm3373
    %v3375 = vsel %vm3374, %v3367, %v3371
    %v3376 = vand.u32 2147483647, %v3306
    %vm3377 = vcmp.eq.f32.partialorder %v3376, 8.507059e+37
    %v3378 = vand.u32 %v3306, 2147483648
    %v3379 = vor.u32 1.1754944e-38, %v3378
    %v3380 = vsel %vm3377, %v3379, %v3375
    %v3381 = vmul.f32 1.0, %v3380
    %v3382 = vld [vmem:[#allocation2 + $0x2e0] sm:$0xff]
    %v3383 = vld [vmem:[#allocation2 + $0x2f8] sm:$0xff]
    %v3384 = vld [vmem:[#allocation2 + $0x310] sm:$0xff]
    %v3385 = vld [vmem:[#allocation2 + $0x328] sm:$0xff]
    %v3386 = vld [vmem:[#allocation2 + $0x340] sm:$0xff]
    %v3387 = vadd.f32 %v3158, %v1220
    %v3388 = vadd.f32 %v3161, %v1220
    %v3389 = vadd.f32 %v3164, %v1220
    %v3390 = vadd.f32 %v3167, %v1220
    %v3391 = vadd.f32 %v3170, %v1220
    %v3392 = vmul.f32 %v3216, %v3387
    %v3393 = vmul.f32 %v3231, %v3388
    %v3394 = vmul.f32 %v3246, %v3389
    %v3395 = vmul.f32 %v3261, %v3390
    %v3396 = vmul.f32 %v3276, %v3391
    %v3397 = vadd.f32 %v3382, %v3392
    %v3398 = vadd.f32 %v3383, %v3393
    %v3399 = vadd.f32 %v3384, %v3394
    %v3400 = vadd.f32 %v3385, %v3395
    %v3401 = vadd.f32 %v3386, %v3396
    %v3402 = vtanh.pop %v3397
    %v3403 = vtanh.pop %v3398
    %v3404 = vtanh.pop %v3399
    %v3405 = vtanh.pop %v3400
    %v3406 = vtanh.pop %v3401
    %v3407 = vsub.f32 %v3056, %v3402
    %v3408 = vsub.f32 %v3057, %v3403
    %v3409 = vsub.f32 %v3058, %v3404
    %v3410 = vsub.f32 %v3059, %v3405
    %v3411 = vsub.f32 %v3060, %v3406
    %v3412 = vmul.f32 %v3321, %v3407
    %v3413 = vmul.f32 %v3336, %v3408
    %v3414 = vmul.f32 %v3351, %v3409
    %v3415 = vmul.f32 %v3366, %v3410
    %v3416 = vmul.f32 %v3381, %v3411
    %v3417 = vadd.f32 %v3402, %v3412
    %v3418 = vadd.f32 %v3403, %v3413
    %v3419 = vadd.f32 %v3404, %v3414
    %v3420 = vadd.f32 %v3405, %v3415
    %v3421 = vadd.f32 %v3406, %v3416
    %v3423 = vsel %vm905, %v3417, 0
    %v3426 = vsel %vm905, %v3418, 0
    %v3429 = vsel %vm905, %v3419, 0
    %v3432 = vsel %vm905, %v3420, 0
    %v3435 = vsel %vm905, %v3421, 0
    %3437 = vmatpush.msra.mxu0 0.0
    %3438 = vmatpush.msra.mxu0 0.0
    %3439 = vmatpush.msra.mxu0 0.0
    %3440 = vmatpush.msra.mxu0 0.0
    %3441 = vmatpush.msra.mxu0 0.0
    %3442 = vmatpush.msra.mxu0 0.0
    %3443 = vmatpush.msra.mxu0 0.0
    %3444 = vmatpush.msra.mxu0 0.0
    %3445 = vmatpush.msra.mxu0 0.0
    %3446 = vmatpush.msra.mxu0 0.0
    %3447 = vmatpush.msra.mxu0 0.0
    %3448 = vmatpush.msra.mxu0 0.0
    %3449 = vmatpush.msra.mxu0 %v901
    %3450 = vmatpush.msra.mxu0 %v898
    %3451 = vmatpush.msra.mxu0 %v895
    %3452 = vmatpush.msra.mxu0 %v892
    %3453 = vmatmul.f32.gmra.mxu0 %v3423
    %v3454 = vpop.f32.mrf.mxu0
    %v3455 = vadd.f32 0.0, %v3454
    %3456 = vmatmul.f32.gmra.mxu0 %v3426
    %v3457 = vpop.f32.mrf.mxu0
    %v3458 = vadd.f32 0.0, %v3457
    %3459 = vmatmul.f32.gmra.mxu0 %v3429
    %v3460 = vpop.f32.mrf.mxu0
    %v3461 = vadd.f32 0.0, %v3460
    %3462 = vmatmul.f32.gmra.mxu0 %v3432
    %v3463 = vpop.f32.mrf.mxu0
    %v3464 = vadd.f32 0.0, %v3463
    %3465 = vmatmul.f32.gmra.mxu0 %v3435
    %v3466 = vpop.f32.mrf.mxu0
    %v3467 = vadd.f32 0.0, %v3466
    %3468 = vdwg.mxu0
    %3469 = vmatpush.msra.mxu0 0.0
    %3470 = vmatpush.msra.mxu0 0.0
    %3471 = vmatpush.msra.mxu0 0.0
    %3472 = vmatpush.msra.mxu0 0.0
    %3473 = vmatpush.msra.mxu0 0.0
    %3474 = vmatpush.msra.mxu0 0.0
    %3475 = vmatpush.msra.mxu0 0.0
    %3476 = vmatpush.msra.mxu0 0.0
    %3477 = vmatpush.msra.mxu0 0.0
    %3478 = vmatpush.msra.mxu0 0.0
    %3479 = vmatpush.msra.mxu0 0.0
    %3480 = vmatpush.msra.mxu0 0.0
    %3481 = vmatpush.msra.mxu0 %v902
    %3482 = vmatpush.msra.mxu0 %v899
    %3483 = vmatpush.msra.mxu0 %v896
    %3484 = vmatpush.msra.mxu0 %v893
    %3485 = vmatmul.f32.gmra.mxu0 %v3423
    %v3486 = vpop.f32.mrf.mxu0
    %v3487 = vadd.f32 0.0, %v3486
    %3488 = vmatmul.f32.gmra.mxu0 %v3426
    %v3489 = vpop.f32.mrf.mxu0
    %v3490 = vadd.f32 0.0, %v3489
    %3491 = vmatmul.f32.gmra.mxu0 %v3429
    %v3492 = vpop.f32.mrf.mxu0
    %v3493 = vadd.f32 0.0, %v3492
    %3494 = vmatmul.f32.gmra.mxu0 %v3432
    %v3495 = vpop.f32.mrf.mxu0
    %v3496 = vadd.f32 0.0, %v3495
    %3497 = vmatmul.f32.gmra.mxu0 %v3435
    %v3498 = vpop.f32.mrf.mxu0
    %v3499 = vadd.f32 0.0, %v3498
    %3500 = vdwg.mxu0
    %3501 = vmatpush.msra.mxu0 0.0
    %3502 = vmatpush.msra.mxu0 0.0
    %3503 = vmatpush.msra.mxu0 0.0
    %3504 = vmatpush.msra.mxu0 0.0
    %3505 = vmatpush.msra.mxu0 0.0
    %3506 = vmatpush.msra.mxu0 0.0
    %3507 = vmatpush.msra.mxu0 0.0
    %3508 = vmatpush.msra.mxu0 0.0
    %3509 = vmatpush.msra.mxu0 0.0
    %3510 = vmatpush.msra.mxu0 0.0
    %3511 = vmatpush.msra.mxu0 0.0
    %3512 = vmatpush.msra.mxu0 0.0
    %3513 = vmatpush.msra.mxu0 %v903
    %3514 = vmatpush.msra.mxu0 %v900
    %3515 = vmatpush.msra.mxu0 %v897
    %3516 = vmatpush.msra.mxu0 %v894
    %3517 = vmatmul.f32.gmra.mxu0 %v3423
    %v3518 = vpop.f32.mrf.mxu0
    %v3519 = vadd.f32 0.0, %v3518
    %3520 = vmatmul.f32.gmra.mxu0 %v3426
    %v3521 = vpop.f32.mrf.mxu0
    %v3522 = vadd.f32 0.0, %v3521
    %3523 = vmatmul.f32.gmra.mxu0 %v3429
    %v3524 = vpop.f32.mrf.mxu0
    %v3525 = vadd.f32 0.0, %v3524
    %3526 = vmatmul.f32.gmra.mxu0 %v3432
    %v3527 = vpop.f32.mrf.mxu0
    %v3528 = vadd.f32 0.0, %v3527
    %3529 = vmatmul.f32.gmra.mxu0 %v3435
    %v3530 = vpop.f32.mrf.mxu0
    %v3531 = vadd.f32 0.0, %v3530
    %3532 = vdwg.mxu0
    %v3533 = vld [vmem:[#allocation2 + $0x348] sm:$0xff]
    %v3534 = vld [vmem:[#allocation2 + $0x360] sm:$0xff]
    %v3535 = vld [vmem:[#allocation2 + $0x378] sm:$0xff]
    %v3536 = vld [vmem:[#allocation2 + $0x390] sm:$0xff]
    %v3537 = vld [vmem:[#allocation2 + $0x3a8] sm:$0xff]
    %v3538 = vadd.f32 %v3533, %v3455
    %v3539 = vadd.f32 %v3534, %v3458
    %v3540 = vadd.f32 %v3535, %v3461
    %v3541 = vadd.f32 %v3536, %v3464
    %v3542 = vadd.f32 %v3537, %v3467
    %v3543 = vxor.u32 %v3538, 2147483648
    %v3544 = vxor.u32 %v3539, 2147483648
    %v3545 = vxor.u32 %v3540, 2147483648
    %v3546 = vxor.u32 %v3541, 2147483648
    %v3547 = vxor.u32 %v3542, 2147483648
    %v3548 = vmul.f32 %v3543, 1.442695
    %v3549 = vpow.pop %v3548
    %v3550 = vmul.f32 %v3544, 1.442695
    %v3551 = vpow.pop %v3550
    %v3552 = vmul.f32 %v3545, 1.442695
    %v3553 = vpow.pop %v3552
    %v3554 = vmul.f32 %v3546, 1.442695
    %v3555 = vpow.pop %v3554
    %v3556 = vmul.f32 %v3547, 1.442695
    %v3557 = vpow.pop %v3556
    %v3558 = vadd.f32 %v3549, 1.0
    %v3559 = vadd.f32 %v3551, 1.0
    %v3560 = vadd.f32 %v3553, 1.0
    %v3561 = vadd.f32 %v3555, 1.0
    %v3562 = vadd.f32 %v3557, 1.0
    %v3563 = vrcp.pop %v3558
    %v3564 = vmul.f32 %v3558, %v3563
    %v3565 = vsub.f32 1.0, %v3564
    %v3566 = vmul.f32 %v3563, %v3565
    %v3567 = vadd.f32 %v3563, %v3566
    %vm3568 = vweird.f32 %v3558
    %vm3569 = vweird.f32 %v3563
    %vm3570 = vmor %vm3568, %vm3569
    %v3571 = vsel %vm3570, %v3563, %v3567
    %v3572 = vand.u32 2147483647, %v3558
    %vm3573 = vcmp.eq.f32.partialorder %v3572, 8.507059e+37
    %v3574 = vand.u32 %v3558, 2147483648
    %v3575 = vor.u32 1.1754944e-38, %v3574
    %v3576 = vsel %vm3573, %v3575, %v3571
    %v3577 = vmul.f32 1.0, %v3576
    %v3578 = vrcp.pop %v3559
    %v3579 = vmul.f32 %v3559, %v3578
    %v3580 = vsub.f32 1.0, %v3579
    %v3581 = vmul.f32 %v3578, %v3580
    %v3582 = vadd.f32 %v3578, %v3581
    %vm3583 = vweird.f32 %v3559
    %vm3584 = vweird.f32 %v3578
    %vm3585 = vmor %vm3583, %vm3584
    %v3586 = vsel %vm3585, %v3578, %v3582
    %v3587 = vand.u32 2147483647, %v3559
    %vm3588 = vcmp.eq.f32.partialorder %v3587, 8.507059e+37
    %v3589 = vand.u32 %v3559, 2147483648
    %v3590 = vor.u32 1.1754944e-38, %v3589
    %v3591 = vsel %vm3588, %v3590, %v3586
    %v3592 = vmul.f32 1.0, %v3591
    %v3593 = vrcp.pop %v3560
    %v3594 = vmul.f32 %v3560, %v3593
    %v3595 = vsub.f32 1.0, %v3594
    %v3596 = vmul.f32 %v3593, %v3595
    %v3597 = vadd.f32 %v3593, %v3596
    %vm3598 = vweird.f32 %v3560
    %vm3599 = vweird.f32 %v3593
    %vm3600 = vmor %vm3598, %vm3599
    %v3601 = vsel %vm3600, %v3593, %v3597
    %v3602 = vand.u32 2147483647, %v3560
    %vm3603 = vcmp.eq.f32.partialorder %v3602, 8.507059e+37
    %v3604 = vand.u32 %v3560, 2147483648
    %v3605 = vor.u32 1.1754944e-38, %v3604
    %v3606 = vsel %vm3603, %v3605, %v3601
    %v3607 = vmul.f32 1.0, %v3606
    %v3608 = vrcp.pop %v3561
    %v3609 = vmul.f32 %v3561, %v3608
    %v3610 = vsub.f32 1.0, %v3609
    %v3611 = vmul.f32 %v3608, %v3610
    %v3612 = vadd.f32 %v3608, %v3611
    %vm3613 = vweird.f32 %v3561
    %vm3614 = vweird.f32 %v3608
    %vm3615 = vmor %vm3613, %vm3614
    %v3616 = vsel %vm3615, %v3608, %v3612
    %v3617 = vand.u32 2147483647, %v3561
    %vm3618 = vcmp.eq.f32.partialorder %v3617, 8.507059e+37
    %v3619 = vand.u32 %v3561, 2147483648
    %v3620 = vor.u32 1.1754944e-38, %v3619
    %v3621 = vsel %vm3618, %v3620, %v3616
    %v3622 = vmul.f32 1.0, %v3621
    %v3623 = vrcp.pop %v3562
    %v3624 = vmul.f32 %v3562, %v3623
    %v3625 = vsub.f32 1.0, %v3624
    %v3626 = vmul.f32 %v3623, %v3625
    %v3627 = vadd.f32 %v3623, %v3626
    %vm3628 = vweird.f32 %v3562
    %vm3629 = vweird.f32 %v3623
    %vm3630 = vmor %vm3628, %vm3629
    %v3631 = vsel %vm3630, %v3623, %v3627
    %v3632 = vand.u32 2147483647, %v3562
    %vm3633 = vcmp.eq.f32.partialorder %v3632, 8.507059e+37
    %v3634 = vand.u32 %v3562, 2147483648
    %v3635 = vor.u32 1.1754944e-38, %v3634
    %v3636 = vsel %vm3633, %v3635, %v3631
    %v3637 = vmul.f32 1.0, %v3636
    %v3638 = vld [vmem:[#allocation2 + $0x350] sm:$0xff]
    %v3639 = vld [vmem:[#allocation2 + $0x368] sm:$0xff]
    %v3640 = vld [vmem:[#allocation2 + $0x380] sm:$0xff]
    %v3641 = vld [vmem:[#allocation2 + $0x398] sm:$0xff]
    %v3642 = vld [vmem:[#allocation2 + $0x3b0] sm:$0xff]
    %v3643 = vadd.f32 %v3638, %v3487
    %v3644 = vadd.f32 %v3639, %v3490
    %v3645 = vadd.f32 %v3640, %v3493
    %v3646 = vadd.f32 %v3641, %v3496
    %v3647 = vadd.f32 %v3642, %v3499
    %v3648 = vxor.u32 %v3643, 2147483648
    %v3649 = vxor.u32 %v3644, 2147483648
    %v3650 = vxor.u32 %v3645, 2147483648
    %v3651 = vxor.u32 %v3646, 2147483648
    %v3652 = vxor.u32 %v3647, 2147483648
    %v3653 = vmul.f32 %v3648, 1.442695
    %v3654 = vpow.pop %v3653
    %v3655 = vmul.f32 %v3649, 1.442695
    %v3656 = vpow.pop %v3655
    %v3657 = vmul.f32 %v3650, 1.442695
    %v3658 = vpow.pop %v3657
    %v3659 = vmul.f32 %v3651, 1.442695
    %v3660 = vpow.pop %v3659
    %v3661 = vmul.f32 %v3652, 1.442695
    %v3662 = vpow.pop %v3661
    %v3663 = vadd.f32 %v3654, 1.0
    %v3664 = vadd.f32 %v3656, 1.0
    %v3665 = vadd.f32 %v3658, 1.0
    %v3666 = vadd.f32 %v3660, 1.0
    %v3667 = vadd.f32 %v3662, 1.0
    %v3668 = vrcp.pop %v3663
    %v3669 = vmul.f32 %v3663, %v3668
    %v3670 = vsub.f32 1.0, %v3669
    %v3671 = vmul.f32 %v3668, %v3670
    %v3672 = vadd.f32 %v3668, %v3671
    %vm3673 = vweird.f32 %v3663
    %vm3674 = vweird.f32 %v3668
    %vm3675 = vmor %vm3673, %vm3674
    %v3676 = vsel %vm3675, %v3668, %v3672
    %v3677 = vand.u32 2147483647, %v3663
    %vm3678 = vcmp.eq.f32.partialorder %v3677, 8.507059e+37
    %v3679 = vand.u32 %v3663, 2147483648
    %v3680 = vor.u32 1.1754944e-38, %v3679
    %v3681 = vsel %vm3678, %v3680, %v3676
    %v3682 = vmul.f32 1.0, %v3681
    %v3683 = vrcp.pop %v3664
    %v3684 = vmul.f32 %v3664, %v3683
    %v3685 = vsub.f32 1.0, %v3684
    %v3686 = vmul.f32 %v3683, %v3685
    %v3687 = vadd.f32 %v3683, %v3686
    %vm3688 = vweird.f32 %v3664
    %vm3689 = vweird.f32 %v3683
    %vm3690 = vmor %vm3688, %vm3689
    %v3691 = vsel %vm3690, %v3683, %v3687
    %v3692 = vand.u32 2147483647, %v3664
    %vm3693 = vcmp.eq.f32.partialorder %v3692, 8.507059e+37
    %v3694 = vand.u32 %v3664, 2147483648
    %v3695 = vor.u32 1.1754944e-38, %v3694
    %v3696 = vsel %vm3693, %v3695, %v3691
    %v3697 = vmul.f32 1.0, %v3696
    %v3698 = vrcp.pop %v3665
    %v3699 = vmul.f32 %v3665, %v3698
    %v3700 = vsub.f32 1.0, %v3699
    %v3701 = vmul.f32 %v3698, %v3700
    %v3702 = vadd.f32 %v3698, %v3701
    %vm3703 = vweird.f32 %v3665
    %vm3704 = vweird.f32 %v3698
    %vm3705 = vmor %vm3703, %vm3704
    %v3706 = vsel %vm3705, %v3698, %v3702
    %v3707 = vand.u32 2147483647, %v3665
    %vm3708 = vcmp.eq.f32.partialorder %v3707, 8.507059e+37
    %v3709 = vand.u32 %v3665, 2147483648
    %v3710 = vor.u32 1.1754944e-38, %v3709
    %v3711 = vsel %vm3708, %v3710, %v3706
    %v3712 = vmul.f32 1.0, %v3711
    %v3713 = vrcp.pop %v3666
    %v3714 = vmul.f32 %v3666, %v3713
    %v3715 = vsub.f32 1.0, %v3714
    %v3716 = vmul.f32 %v3713, %v3715
    %v3717 = vadd.f32 %v3713, %v3716
    %vm3718 = vweird.f32 %v3666
    %vm3719 = vweird.f32 %v3713
    %vm3720 = vmor %vm3718, %vm3719
    %v3721 = vsel %vm3720, %v3713, %v3717
    %v3722 = vand.u32 2147483647, %v3666
    %vm3723 = vcmp.eq.f32.partialorder %v3722, 8.507059e+37
    %v3724 = vand.u32 %v3666, 2147483648
    %v3725 = vor.u32 1.1754944e-38, %v3724
    %v3726 = vsel %vm3723, %v3725, %v3721
    %v3727 = vmul.f32 1.0, %v3726
    %v3728 = vrcp.pop %v3667
    %v3729 = vmul.f32 %v3667, %v3728
    %v3730 = vsub.f32 1.0, %v3729
    %v3731 = vmul.f32 %v3728, %v3730
    %v3732 = vadd.f32 %v3728, %v3731
    %vm3733 = vweird.f32 %v3667
    %vm3734 = vweird.f32 %v3728
    %vm3735 = vmor %vm3733, %vm3734
    %v3736 = vsel %vm3735, %v3728, %v3732
    %v3737 = vand.u32 2147483647, %v3667
    %vm3738 = vcmp.eq.f32.partialorder %v3737, 8.507059e+37
    %v3739 = vand.u32 %v3667, 2147483648
    %v3740 = vor.u32 1.1754944e-38, %v3739
    %v3741 = vsel %vm3738, %v3740, %v3736
    %v3742 = vmul.f32 1.0, %v3741
    %v3743 = vld [vmem:[#allocation2 + $0x358] sm:$0xff]
    %v3744 = vld [vmem:[#allocation2 + $0x370] sm:$0xff]
    %v3745 = vld [vmem:[#allocation2 + $0x388] sm:$0xff]
    %v3746 = vld [vmem:[#allocation2 + $0x3a0] sm:$0xff]
    %v3747 = vld [vmem:[#allocation2 + $0x3b8] sm:$0xff]
    %v3748 = vadd.f32 %v3519, %v1220
    %v3749 = vadd.f32 %v3522, %v1220
    %v3750 = vadd.f32 %v3525, %v1220
    %v3751 = vadd.f32 %v3528, %v1220
    %v3752 = vadd.f32 %v3531, %v1220
    %v3753 = vmul.f32 %v3577, %v3748
    %v3754 = vmul.f32 %v3592, %v3749
    %v3755 = vmul.f32 %v3607, %v3750
    %v3756 = vmul.f32 %v3622, %v3751
    %v3757 = vmul.f32 %v3637, %v3752
    %v3758 = vadd.f32 %v3743, %v3753
    %v3759 = vadd.f32 %v3744, %v3754
    %v3760 = vadd.f32 %v3745, %v3755
    %v3761 = vadd.f32 %v3746, %v3756
    %v3762 = vadd.f32 %v3747, %v3757
    %v3763 = vtanh.pop %v3758
    %v3764 = vtanh.pop %v3759
    %v3765 = vtanh.pop %v3760
    %v3766 = vtanh.pop %v3761
    %v3767 = vtanh.pop %v3762
    %v3768 = vsub.f32 %v3417, %v3763
    %v3769 = vsub.f32 %v3418, %v3764
    %v3770 = vsub.f32 %v3419, %v3765
    %v3771 = vsub.f32 %v3420, %v3766
    %v3772 = vsub.f32 %v3421, %v3767
    %v3773 = vmul.f32 %v3682, %v3768
    %v3774 = vmul.f32 %v3697, %v3769
    %v3775 = vmul.f32 %v3712, %v3770
    %v3776 = vmul.f32 %v3727, %v3771
    %v3777 = vmul.f32 %v3742, %v3772
    %v3778 = vadd.f32 %v3763, %v3773
    %v3779 = vadd.f32 %v3764, %v3774
    %v3780 = vadd.f32 %v3765, %v3775
    %v3781 = vadd.f32 %v3766, %v3776
    %v3782 = vadd.f32 %v3767, %v3777
    %v3783 = vld [vmem:[%s2 + $0x8] sm:$0xff]
    %v3784 = vld [vmem:[%s2 + $0x10] sm:$0x3]
    %v3785 = vld [vmem:[%s2 + $0x18] sm:$0x1]
    %3787 = vset.pattern.permute.xlu0 40
    %3788 = vperm.xlu0 %3787, %v3783
    %v3789 = vpop.permute.xlu0 %3788
    %3792 = vset.pattern.permute.xlu0 40
    %3793 = vperm.xlu0 %3792, %v3784
    %v3794 = vpop.permute.xlu0 %3793
    %vm3796 = vcmask 326656
    %v3797 = vsel %vm3796, %v3783, 0
    %v3799 = vsel %vm3796, %v3784, 0
    %3801 = vmatpush.msra.mxu0 0.0
    %3802 = vmatpush.msra.mxu0 0.0
    %3803 = vmatpush.msra.mxu0 0.0
    %3804 = vmatpush.msra.mxu0 0.0
    %3805 = vmatpush.msra.mxu0 0.0
    %3806 = vmatpush.msra.mxu0 0.0
    %3807 = vmatpush.msra.mxu0 0.0
    %3808 = vmatpush.msra.mxu0 0.0
    %3809 = vmatpush.msra.mxu0 0.0
    %3810 = vmatpush.msra.mxu0 0.0
    %3811 = vmatpush.msra.mxu0 0.0
    %3812 = vmatpush.msra.mxu0 %v3782
    %3813 = vmatpush.msra.mxu0 %v3781
    %3814 = vmatpush.msra.mxu0 %v3780
    %3815 = vmatpush.msra.mxu0 %v3779
    %3816 = vmatpush.msra.mxu0 %v3778
    %3817 = vmatmul.f32.gmra.mxu0 %v3797
    %v3818 = vpop.f32.mrf.mxu0
    %v3819 = vadd.f32 %v3789, %v3818
    %3820 = vmatmul.f32.gmra.mxu0 %v3799
    %v3821 = vpop.f32.mrf.mxu0
    %v3822 = vadd.f32 %v3794, %v3821
    %3823 = vdwg.mxu0
    %v3824 = vmax.f32 %v3819, 0.0
    %v3825 = vmax.f32 %v3822, 0.0
    %3827 = vset.pattern.permute.xlu0 10
    %3828 = vperm.xlu0 %3827, %v3785
    %v3829 = vpop.permute.xlu0 %3828
    %vm3831 = vcmask 80896
    %v3832 = vsel %vm3831, %v3785, 0
    %vm3834 = vcmask 1041408
    %v3836 = vsel %vm3834, %v3825, 0
    %3838 = vmatpush.msra.mxu0 0.0
    %3839 = vmatpush.msra.mxu0 0.0
    %3840 = vmatpush.msra.mxu0 0.0
    %3841 = vmatpush.msra.mxu0 0.0
    %3842 = vmatpush.msra.mxu0 0.0
    %3843 = vmatpush.msra.mxu0 0.0
    %3844 = vmatpush.msra.mxu0 0.0
    %3845 = vmatpush.msra.mxu0 0.0
    %3846 = vmatpush.msra.mxu0 0.0
    %3847 = vmatpush.msra.mxu0 0.0
    %3848 = vmatpush.msra.mxu0 0.0
    %3849 = vmatpush.msra.mxu0 0.0
    %3850 = vmatpush.msra.mxu0 0.0
    %3851 = vmatpush.msra.mxu0 0.0
    %3852 = vmatpush.msra.mxu0 %v3836
    %3853 = vmatpush.msra.mxu0 %v3824
    %3854 = vmatmul.f32.gmra.mxu0 %v3832
    %v3855 = vpop.f32.mrf.mxu0
    %v3856 = vadd.f32 %v3829, %v3855
    %3857 = vdwg.mxu0
    %v3858 = vxor.u32 %v3856, 2147483648
    %v3859 = vmul.f32 %v3858, 1.442695
    %v3860 = vpow.pop %v3859
    %v3861 = vadd.f32 %v3860, 1.0
    %v3862 = vrcp.pop %v3861
    %v3863 = vmul.f32 %v3861, %v3862
    %v3864 = vsub.f32 1.0, %v3863
    %v3865 = vmul.f32 %v3862, %v3864
    %v3866 = vadd.f32 %v3862, %v3865
    %vm3867 = vweird.f32 %v3861
    %vm3868 = vweird.f32 %v3862
    %vm3869 = vmor %vm3867, %vm3868
    %v3870 = vsel %vm3869, %v3862, %v3866
    %v3871 = vand.u32 2147483647, %v3861
    %vm3872 = vcmp.eq.f32.partialorder %v3871, 8.507059e+37
    %v3873 = vand.u32 %v3861, 2147483648
    %v3874 = vor.u32 1.1754944e-38, %v3873
    %v3875 = vsel %vm3872, %v3874, %v3870
    %v3876 = vmul.f32 1.0, %v3875
    %v3877 = vperm.slane %v3876, 0
    %3878 = vst [vmem:[#allocation6] sm:$0xff] %v3877
    // Predicated region
    $region18: #{tpu_custom_call.1} parent=1 // pred_check
      _
    $region19: #{tpu_custom_call.1} parent=1 // pred_check_branch
      %3880 = sbr.rel (0) target = $region21
    $region20: #{tpu_custom_call.1} parent=1 // pred_region
      %3882 = vsyncadd [#allocation5], 0
      %s3884 = sshll.u32 [#allocation6], 4
      %s3885 = int_to_ptr.vmem [resolvable:$true] %s3884
      %s3886 = sshll.u32 %s3, 4
      %s3887 = int_to_ptr.hbm [resolvable:$true] %s3886
      %3889 = dma.vmem_to_hbm [thread:$0]  %s3885, 128, %s3887, [#allocation5]
    $region21: #{tpu_custom_call.1} parent=1 // pred_fallthru
      _
    // Predicated region
    $region22: #{tpu_custom_call.1} parent=1 // pred_check
      _
    $region23: #{tpu_custom_call.1} parent=1 // pred_check_branch
      %3891 = sbr.rel (0) target = $region25
    $region24: #{tpu_custom_call.1} parent=1 // pred_region
      %3893 = dma.done [#allocation5], 128
    $region25: #{tpu_custom_call.1} parent=1 // pred_fallthru
      _
    %3894 = vsyncpa [#allocation4], 1
    %3895 = vsyncpa [#allocation5], 1

</llo_original>
